<compile_context>
chip_gen: v7x
topology: tpu7x:2x2x1
jax: 0.10.0
libtpu: 0.0.40
codegen_flags: <defaults>
</compile_context>

<pallas_src>
import jax
import jax.numpy as jnp
from jax import lax
from jax.experimental import pallas as pl
from jax.experimental.pallas import tpu as pltpu


def lstm_recurrence_kernel(xp_ref, whh_ref, h0_ref, c0_ref, len_ref,
                           y_ref, hN_ref, h_scr, c_scr):
    """One grid step = one (batch-block, time-block) tile of the recurrence."""
    t_blk = pl.program_id(1)                  # time-block index ("arbitrary" axis)
    n_t = pl.num_programs(1)
    Tc = y_ref.shape[0]
    Bc, H = h_scr.shape

    # New batch block starts at t_blk == 0: load the learned h0/c0 (HRNN.init_h).
    @pl.when(t_blk == 0)
    def _init():
        h_scr[...] = jnp.broadcast_to(h0_ref[...], (Bc, H))
        c_scr[...] = jnp.broadcast_to(c0_ref[...], (Bc, H))

    lens = len_ref[...]                       # (Bc, 1) int32, VMEM-resident
    whh = whh_ref[...]                        # (H, 4H), hoisted out of the loop
    t0 = t_blk * Tc

    def step(i, carry):
        h_prev, c_prev = carry
        # gates = precomputed x-projection (+bias) + recurrent projection.
        gates = xp_ref[i] + jnp.dot(h_prev.astype(whh.dtype), whh,
                                    preferred_element_type=jnp.float32)
        # PyTorch LSTM gate order i | f | g | o.
        i_g = jax.nn.sigmoid(gates[:, 0 * H:1 * H])
        f_g = jax.nn.sigmoid(gates[:, 1 * H:2 * H])
        g_g = jnp.tanh(gates[:, 2 * H:3 * H])
        o_g = jax.nn.sigmoid(gates[:, 3 * H:4 * H])

        c_new = f_g * c_prev + i_g * g_g
        h_new = o_g * jnp.tanh(c_new)

        # Packed-sequence semantics: freeze state past each sequence's length,
        # zero-pad the output there.
        valid = lens > (t0 + i)               # (Bc, 1)
        h_keep = jnp.where(valid, h_new, h_prev)
        c_keep = jnp.where(valid, c_new, c_prev)
        y_ref[i] = jnp.where(valid, h_new, 0.0).astype(y_ref.dtype)
        return h_keep, c_keep

    h_last, c_last = lax.fori_loop(0, Tc, step, (h_scr[...], c_scr[...]),
                                   unroll=True)
    h_scr[...] = h_last
    c_scr[...] = c_last

    # Final hidden state (returned by HRNN.forward alongside y).
    @pl.when(t_blk == n_t - 1)
    def _finalize():
        hN_ref[...] = h_last.astype(hN_ref.dtype)


def hrnn_forward(x, lengths, params, *, time_block=None, batch_blocks=1,
                 matmul_dtype=jnp.float32):
    """x: [T, B, E] padded time-major embeddings; lengths: [B] int32.

    Returns (y [T, B, H] padded LSTM outputs, h_final [B, H]).

    batch_blocks=2 splits the (independent) batch rows across the two v7x
    TensorCores via a leading "parallel" grid axis; leave at 1 on v5e/v6e.
    matmul_dtype=jnp.bfloat16 uses bf16 operands for the recurrent dot on
    v6e/v7x (validate drift over long sequences before enabling)."""
    T, B, E = x.shape
    H = params["weight_hh"].shape[1]          # torch weight_hh_l0: (4H, H)
    G = 4 * H

    nb = int(batch_blocks)
    if nb < 1 or B % nb != 0 or (nb > 1 and (B // nb) % 8 != 0):
        nb = 1
    Bc = B // nb

    # ---- Hoisted input projection: one big matmul over all T timesteps.
    # HIGHEST precision keeps the one-shot prologue numerically faithful to the
    # f32 torch GEMM; relax / bf16 it for production if profiling demands.
    wih_t = params["weight_ih"].T                               # (E, 4H)
    bias = (params["bias_ih"] + params["bias_hh"]).reshape(1, 1, G)
    xproj = jnp.einsum("tbe,eg->tbg", x, wih_t,
                       precision=lax.Precision.HIGHEST) + bias  # (T, B, 4H) f32
    xproj = xproj.astype(jnp.float32)

    # ---- Time blocking: Tc timesteps per grid step, sized to a VMEM budget.
    if time_block is None:
        budget = 8 << 20                                        # streamed-tile budget
        per_step = 2 * (Bc * G + Bc * H) * 4                    # 2x-buffered xproj + y
        time_block = max(1, min(16, T, budget // per_step))
    Tc = int(time_block)
    nt = pl.cdiv(T, Tc)
    T_pad = nt * Tc
    if T_pad != T:
        xproj = jnp.pad(xproj, ((0, T_pad - T), (0, 0), (0, 0)))

    whh_t = params["weight_hh"].T.astype(matmul_dtype)          # (H, 4H)
    h0 = params["h0"].reshape(1, H).astype(jnp.float32)
    c0 = params["c0"].reshape(1, H).astype(jnp.float32)
    lens = lengths.astype(jnp.int32).reshape(B, 1)

    # ---- VMEM budget (capped well below v7x's 64 MiB physical per-TC VMEM).
    db = 4
    resident = (H * G * jnp.dtype(matmul_dtype).itemsize        # W_hh^T
                + 2 * H * db + B * 4 + B * H * db)              # h0/c0, lens, hN
    streamed = 2 * Tc * Bc * (G + H) * db                       # xproj + y, 2x-buffered
    scratch = 2 * Bc * H * db
    vmem_limit = int(min(48 << 20, max(4 << 20, 2 * (resident + streamed + scratch))))

    cost = pl.CostEstimate(
        flops=int(T_pad * 2 * B * H * G),                       # recurrent dot only
        transcendentals=int(T_pad * 5 * B * H),
        bytes_accessed=int((T_pad * B * (G + H) + H * G + 2 * H + B * H) * db + B * 4),
    )

    out_shape = (jax.ShapeDtypeStruct((T_pad, B, H), jnp.float32),
                 jax.ShapeDtypeStruct((B, H), jnp.float32))

    def run(single_buffer_resident):
        if single_buffer_resident:
            # Constant-index operands never change block index: one buffer is enough.
            def res(shape, imap):
                return pl.BlockSpec(shape, imap, pipeline_mode=pl.Buffered(1))
        else:
            def res(shape, imap):
                return pl.BlockSpec(shape, imap)

        grid_spec = pltpu.PrefetchScalarGridSpec(
            num_scalar_prefetch=0,
            grid=(nb, nt),                                      # (batch blocks, time blocks)
            in_specs=[
                pl.BlockSpec((Tc, Bc, G), lambda b, t: (t, b, 0)),   # X_proj tile (pipelined)
                res((H, G), lambda b, t: (0, 0)),                    # W_hh^T (VMEM-resident)
                res((1, H), lambda b, t: (0, 0)),                    # h0
                res((1, H), lambda b, t: (0, 0)),                    # c0
                pl.BlockSpec((Bc, 1), lambda b, t: (b, 0)),          # sequence lengths
            ],
            out_specs=[
                pl.BlockSpec((Tc, Bc, H), lambda b, t: (t, b, 0)),   # y tile
                pl.BlockSpec((Bc, H), lambda b, t: (b, 0)),          # final hidden
            ],
            scratch_shapes=[
                pltpu.VMEM((Bc, H), jnp.float32),                    # h carry
                pltpu.VMEM((Bc, H), jnp.float32),                    # c carry
            ],
        )
        return pl.pallas_call(
            lstm_recurrence_kernel,
            out_shape=out_shape,
            grid_spec=grid_spec,
            compiler_params=pltpu.CompilerParams(
                dimension_semantics=("parallel", "arbitrary"),  # batch ||, time sequential
                vmem_limit_bytes=vmem_limit,
            ),
            cost_estimate=cost,
        )(xproj, whh_t, h0, c0, lens)

    try:
        y_pad, h_final = run(True)
    except Exception:
        # This Pallas build rejected pipeline_mode=pl.Buffered(1); fall back to
        # default (double-buffered) specs — correctness is unaffected.
        y_pad, h_final = run(False)

    return y_pad[:T], h_final


def reference_jax(x, lengths, params):
    """Pure-JAX reference mirroring torch.nn.LSTM over a padded packed batch."""
    T, B, E = x.shape
    H = params["weight_hh"].shape[1]
    wih, whh = params["weight_ih"], params["weight_hh"]
    b = params["bias_ih"] + params["bias_hh"]
    h = jnp.broadcast_to(params["h0"].reshape(1, H), (B, H))
    c = jnp.broadcast_to(params["c0"].reshape(1, H), (B, H))
    hp = lax.Precision.HIGHEST
    ys = []
    for t in range(T):
        gates = (jnp.dot(x[t], wih.T, precision=hp)
                 + jnp.dot(h, whh.T, precision=hp) + b)
        i = jax.nn.sigmoid(gates[:, 0 * H:1 * H])
        f = jax.nn.sigmoid(gates[:, 1 * H:2 * H])
        g = jnp.tanh(gates[:, 2 * H:3 * H])
        o = jax.nn.sigmoid(gates[:, 3 * H:4 * H])
        c_new = f * c + i * g
        h_new = o * jnp.tanh(c_new)
        valid = (lengths > t)[:, None]
        h = jnp.where(valid, h_new, h)
        c = jnp.where(valid, c_new, c)
        ys.append(jnp.where(valid, h_new, 0.0))
    return jnp.stack(ys, axis=0), h


if __name__ == "__main__":
    # Small shapes consistent with the module: seq=8, batch=8, emb_size=32,
    # feat_size (rnn hidden) = 32, layers = 1.
    T, B, E, H = 8, 8, 32, 32

    key = jax.random.PRNGKey(0)
    k_x, k_wih, k_whh, k_bi, k_bh, k_h0, k_c0 = jax.random.split(key, 7)

    x = jax.random.normal(k_x, (T, B, E), dtype=jnp.float32)
    lengths = jnp.array([8, 6, 8, 3, 1, 8, 5, 7], dtype=jnp.int32)

    scale = 1.0 / float(jnp.sqrt(jnp.float32(H)))
    params = {
        # torch.nn.LSTM parameter layout: weight_ih_l0 (4H,E), weight_hh_l0 (4H,H)
        "weight_ih": jax.random.uniform(k_wih, (4 * H, E), jnp.float32, -scale, scale),
        "weight_hh": jax.random.uniform(k_whh, (4 * H, H), jnp.float32, -scale, scale),
        "bias_ih": jax.random.uniform(k_bi, (4 * H,), jnp.float32, -scale, scale),
        "bias_hh": jax.random.uniform(k_bh, (4 * H,), jnp.float32, -scale, scale),
        # HRNN learned initial states: nn.Parameter(torch.rand(layers, 1, feat_size))
        "h0": jax.random.uniform(k_h0, (1, 1, H), dtype=jnp.float32),
        "c0": jax.random.uniform(k_c0, (1, 1, H), dtype=jnp.float32),
    }

    y, h_final = hrnn_forward(x, lengths, params)
    y = jax.block_until_ready(y)
    h_final = jax.block_until_ready(h_final)

    y_ref, h_ref = reference_jax(x, lengths, params)
    assert y.shape == (T, B, H) and h_final.shape == (B, H)
    assert jnp.allclose(y, y_ref, atol=1e-2, rtol=1e-2), "y mismatch vs reference"
    assert jnp.allclose(h_final, h_ref, atol=1e-2, rtol=1e-2), "h mismatch vs reference"

    print("KERNEL_OK")
</pallas_src>

<mosaic_0001>
module attributes {stable_mosaic.version = 11 : i64} {
  func.func @lstm_recurrence_kernel(%arg0: i32, %arg1: i32, %arg2: memref<8x8x128xf32, #tpu.memory_space<vmem>>, %arg3: memref<32x128xf32, #tpu.memory_space<vmem>>, %arg4: memref<1x32xf32, #tpu.memory_space<vmem>>, %arg5: memref<1x32xf32, #tpu.memory_space<vmem>>, %arg6: memref<8x1xi32, #tpu.memory_space<vmem>>, %arg7: memref<8x8x32xf32, #tpu.memory_space<vmem>>, %arg8: memref<8x32xf32, #tpu.memory_space<vmem>>, %arg9: memref<8x32xf32, #tpu.memory_space<vmem>>, %arg10: memref<8x32xf32, #tpu.memory_space<vmem>>) attributes {dimension_semantics = [#tpu.dimension_semantics<parallel>, #tpu.dimension_semantics<arbitrary>], iteration_bounds = array<i64: 1, 1>, scalar_prefetch = 0 : i64, scratch_operands = 2 : i64, tpu.core_type = #tpu.core_type<tc>, window_params = [{transform_indices = @transform_0, window_bounds = array<i64: 8, 8, 128>}, {pipeline_mode = #tpu.pipeline_mode<synchronous>, transform_indices = @transform_1, window_bounds = array<i64: 32, 128>}, {pipeline_mode = #tpu.pipeline_mode<synchronous>, transform_indices = @transform_2, window_bounds = array<i64: 1, 32>}, {pipeline_mode = #tpu.pipeline_mode<synchronous>, transform_indices = @transform_3, window_bounds = array<i64: 1, 32>}, {transform_indices = @transform_4, window_bounds = array<i64: 8, 1>}, {transform_indices = @transform_5, window_bounds = array<i64: 8, 8, 32>}, {transform_indices = @transform_6, window_bounds = array<i64: 8, 32>}]} {
    %c0_i32 = arith.constant 0 : i32
    %0 = arith.cmpi eq, %arg1, %c0_i32 : i32
    %1 = arith.extui %0 : i1 to i32
    %c0_i32_0 = arith.constant 0 : i32
    %2 = arith.cmpi ne, %1, %c0_i32_0 : i32
    scf.if %2 {
      %c0_87 = arith.constant 0 : index
      %c0_88 = arith.constant 0 : index
      %389 = vector.load %arg4[%c0_87, %c0_88] : memref<1x32xf32, #tpu.memory_space<vmem>>, vector<1x32xf32>
      %390 = vector.shape_cast %389 : vector<1x32xf32> to vector<1x32xf32>
      %391 = vector.broadcast %390 : vector<1x32xf32> to vector<8x32xf32>
      %c0_89 = arith.constant 0 : index
      %c0_90 = arith.constant 0 : index
      %392 = vector.load %arg9[%c0_89, %c0_90] : memref<8x32xf32, #tpu.memory_space<vmem>>, vector<8x32xf32>
      tpu.vector_store %arg9[%c0_89, %c0_90], %391 {strides = array<i32>} : memref<8x32xf32, #tpu.memory_space<vmem>>, vector<8x32xf32>,
      %c0_91 = arith.constant 0 : index
      %c0_92 = arith.constant 0 : index
      %393 = vector.load %arg5[%c0_91, %c0_92] : memref<1x32xf32, #tpu.memory_space<vmem>>, vector<1x32xf32>
      %394 = vector.shape_cast %393 : vector<1x32xf32> to vector<1x32xf32>
      %395 = vector.broadcast %394 : vector<1x32xf32> to vector<8x32xf32>
      %c0_93 = arith.constant 0 : index
      %c0_94 = arith.constant 0 : index
      %396 = vector.load %arg10[%c0_93, %c0_94] : memref<8x32xf32, #tpu.memory_space<vmem>>, vector<8x32xf32>
      tpu.vector_store %arg10[%c0_93, %c0_94], %395 {strides = array<i32>} : memref<8x32xf32, #tpu.memory_space<vmem>>, vector<8x32xf32>,
    } else {
    }
    %c0 = arith.constant 0 : index
    %c0_1 = arith.constant 0 : index
    %3 = vector.load %arg6[%c0, %c0_1] : memref<8x1xi32, #tpu.memory_space<vmem>>, vector<8x1xi32>
    %c0_2 = arith.constant 0 : index
    %c0_3 = arith.constant 0 : index
    %4 = vector.load %arg3[%c0_2, %c0_3] : memref<32x128xf32, #tpu.memory_space<vmem>>, vector<32x128xf32>
    %c8_i32 = arith.constant 8 : i32
    %5 = arith.muli %arg1, %c8_i32 : i32
    %c0_4 = arith.constant 0 : index
    %c0_5 = arith.constant 0 : index
    %6 = vector.load %arg9[%c0_4, %c0_5] : memref<8x32xf32, #tpu.memory_space<vmem>>, vector<8x32xf32>
    %c0_6 = arith.constant 0 : index
    %c0_7 = arith.constant 0 : index
    %7 = vector.load %arg10[%c0_6, %c0_7] : memref<8x32xf32, #tpu.memory_space<vmem>>, vector<8x32xf32>
    %c0_i32_8 = arith.constant 0 : i32
    %8 = arith.index_cast %c0_i32_8 : i32 to index
    %c0_9 = arith.constant 0 : index
    %c0_10 = arith.constant 0 : index
    %9 = vector.load %arg2[%8, %c0_9, %c0_10] : memref<8x8x128xf32, #tpu.memory_space<vmem>>, vector<1x8x128xf32>
    %10 = vector.shape_cast %9 : vector<1x8x128xf32> to vector<8x128xf32>
    %cst = arith.constant dense<0.000000e+00> : vector<8x128xf32>
    %11 = tpu.matmul %6, %4, %cst {dimension_numbers = #tpu.dot_dimension_numbers<[1], [0], [0], [1], [0, 0, 1, 1], [], []>} : vector<8x32xf32>, vector<32x128xf32>, vector<8x128xf32> -> vector<8x128xf32>
    %12 = arith.addf %10, %11 : vector<8x128xf32>
    %13 = vector.extract_strided_slice %12 {offsets = [0, 0], sizes = [8, 32], strides = [1, 1]} : vector<8x128xf32> to vector<8x32xf32>
    %14 = arith.negf %13 : vector<8x32xf32>
    %15 = math.exp %14 : vector<8x32xf32>
    %cst_11 = arith.constant 1.000000e+00 : f32
    %16 = vector.broadcast %cst_11 : f32 to vector<8x32xf32>
    %17 = arith.addf %16, %15 : vector<8x32xf32>
    %18 = arith.divf %16, %17 : vector<8x32xf32>
    %19 = vector.extract_strided_slice %12 {offsets = [0, 32], sizes = [8, 32], strides = [1, 1]} : vector<8x128xf32> to vector<8x32xf32>
    %20 = arith.negf %19 : vector<8x32xf32>
    %21 = math.exp %20 : vector<8x32xf32>
    %cst_12 = arith.constant 1.000000e+00 : f32
    %22 = vector.broadcast %cst_12 : f32 to vector<8x32xf32>
    %23 = arith.addf %22, %21 : vector<8x32xf32>
    %24 = arith.divf %22, %23 : vector<8x32xf32>
    %25 = vector.extract_strided_slice %12 {offsets = [0, 64], sizes = [8, 32], strides = [1, 1]} : vector<8x128xf32> to vector<8x32xf32>
    %26 = math.tanh %25 : vector<8x32xf32>
    %27 = vector.extract_strided_slice %12 {offsets = [0, 96], sizes = [8, 32], strides = [1, 1]} : vector<8x128xf32> to vector<8x32xf32>
    %28 = arith.negf %27 : vector<8x32xf32>
    %29 = math.exp %28 : vector<8x32xf32>
    %cst_13 = arith.constant 1.000000e+00 : f32
    %30 = vector.broadcast %cst_13 : f32 to vector<8x32xf32>
    %31 = arith.addf %30, %29 : vector<8x32xf32>
    %32 = arith.divf %30, %31 : vector<8x32xf32>
    %33 = arith.mulf %24, %7 : vector<8x32xf32>
    %34 = arith.mulf %18, %26 : vector<8x32xf32>
    %35 = arith.addf %33, %34 : vector<8x32xf32>
    %36 = math.tanh %35 : vector<8x32xf32>
    %37 = arith.mulf %32, %36 : vector<8x32xf32>
    %38 = arith.addi %5, %c0_i32_8 : i32
    %39 = vector.broadcast %38 : i32 to vector<8x1xi32>
    %40 = arith.cmpi sgt, %3, %39 : vector<8x1xi32>
    %41 = vector.shape_cast %40 : vector<8x1xi1> to vector<8x1xi1>
    %42 = vector.broadcast %41 : vector<8x1xi1> to vector<8x32xi1>
    %43 = arith.select %42, %37, %6 : vector<8x32xi1>, vector<8x32xf32>
    %44 = vector.shape_cast %40 : vector<8x1xi1> to vector<8x1xi1>
    %45 = vector.broadcast %44 : vector<8x1xi1> to vector<8x32xi1>
    %46 = arith.select %45, %35, %7 : vector<8x32xi1>, vector<8x32xf32>
    %cst_14 = arith.constant 0.000000e+00 : f32
    %47 = vector.shape_cast %40 : vector<8x1xi1> to vector<8x1xi1>
    %48 = vector.broadcast %47 : vector<8x1xi1> to vector<8x32xi1>
    %49 = vector.broadcast %cst_14 : f32 to vector<8x32xf32>
    %50 = arith.select %48, %37, %49 : vector<8x32xi1>, vector<8x32xf32>
    %51 = arith.index_cast %c0_i32_8 : i32 to index
    %c0_15 = arith.constant 0 : index
    %c0_16 = arith.constant 0 : index
    %52 = vector.load %arg7[%51, %c0_15, %c0_16] : memref<8x8x32xf32, #tpu.memory_space<vmem>>, vector<1x8x32xf32>
    %53 = vector.shape_cast %52 : vector<1x8x32xf32> to vector<8x32xf32>
    %54 = vector.shape_cast %50 : vector<8x32xf32> to vector<1x8x32xf32>
    tpu.vector_store %arg7[%51, %c0_15, %c0_16], %54 {strides = array<i32>} : memref<8x8x32xf32, #tpu.memory_space<vmem>>, vector<1x8x32xf32>,
    %c1_i32 = arith.constant 1 : i32
    %55 = arith.index_cast %c1_i32 : i32 to index
    %c0_17 = arith.constant 0 : index
    %c0_18 = arith.constant 0 : index
    %56 = vector.load %arg2[%55, %c0_17, %c0_18] : memref<8x8x128xf32, #tpu.memory_space<vmem>>, vector<1x8x128xf32>
    %57 = vector.shape_cast %56 : vector<1x8x128xf32> to vector<8x128xf32>
    %cst_19 = arith.constant dense<0.000000e+00> : vector<8x128xf32>
    %58 = tpu.matmul %43, %4, %cst_19 {dimension_numbers = #tpu.dot_dimension_numbers<[1], [0], [0], [1], [0, 0, 1, 1], [], []>} : vector<8x32xf32>, vector<32x128xf32>, vector<8x128xf32> -> vector<8x128xf32>
    %59 = arith.addf %57, %58 : vector<8x128xf32>
    %60 = vector.extract_strided_slice %59 {offsets = [0, 0], sizes = [8, 32], strides = [1, 1]} : vector<8x128xf32> to vector<8x32xf32>
    %61 = arith.negf %60 : vector<8x32xf32>
    %62 = math.exp %61 : vector<8x32xf32>
    %cst_20 = arith.constant 1.000000e+00 : f32
    %63 = vector.broadcast %cst_20 : f32 to vector<8x32xf32>
    %64 = arith.addf %63, %62 : vector<8x32xf32>
    %65 = arith.divf %63, %64 : vector<8x32xf32>
    %66 = vector.extract_strided_slice %59 {offsets = [0, 32], sizes = [8, 32], strides = [1, 1]} : vector<8x128xf32> to vector<8x32xf32>
    %67 = arith.negf %66 : vector<8x32xf32>
    %68 = math.exp %67 : vector<8x32xf32>
    %cst_21 = arith.constant 1.000000e+00 : f32
    %69 = vector.broadcast %cst_21 : f32 to vector<8x32xf32>
    %70 = arith.addf %69, %68 : vector<8x32xf32>
    %71 = arith.divf %69, %70 : vector<8x32xf32>
    %72 = vector.extract_strided_slice %59 {offsets = [0, 64], sizes = [8, 32], strides = [1, 1]} : vector<8x128xf32> to vector<8x32xf32>
    %73 = math.tanh %72 : vector<8x32xf32>
    %74 = vector.extract_strided_slice %59 {offsets = [0, 96], sizes = [8, 32], strides = [1, 1]} : vector<8x128xf32> to vector<8x32xf32>
    %75 = arith.negf %74 : vector<8x32xf32>
    %76 = math.exp %75 : vector<8x32xf32>
    %cst_22 = arith.constant 1.000000e+00 : f32
    %77 = vector.broadcast %cst_22 : f32 to vector<8x32xf32>
    %78 = arith.addf %77, %76 : vector<8x32xf32>
    %79 = arith.divf %77, %78 : vector<8x32xf32>
    %80 = arith.mulf %71, %46 : vector<8x32xf32>
    %81 = arith.mulf %65, %73 : vector<8x32xf32>
    %82 = arith.addf %80, %81 : vector<8x32xf32>
    %83 = math.tanh %82 : vector<8x32xf32>
    %84 = arith.mulf %79, %83 : vector<8x32xf32>
    %85 = arith.addi %5, %c1_i32 : i32
    %86 = vector.broadcast %85 : i32 to vector<8x1xi32>
    %87 = arith.cmpi sgt, %3, %86 : vector<8x1xi32>
    %88 = vector.shape_cast %87 : vector<8x1xi1> to vector<8x1xi1>
    %89 = vector.broadcast %88 : vector<8x1xi1> to vector<8x32xi1>
    %90 = arith.select %89, %84, %43 : vector<8x32xi1>, vector<8x32xf32>
    %91 = vector.shape_cast %87 : vector<8x1xi1> to vector<8x1xi1>
    %92 = vector.broadcast %91 : vector<8x1xi1> to vector<8x32xi1>
    %93 = arith.select %92, %82, %46 : vector<8x32xi1>, vector<8x32xf32>
    %cst_23 = arith.constant 0.000000e+00 : f32
    %94 = vector.shape_cast %87 : vector<8x1xi1> to vector<8x1xi1>
    %95 = vector.broadcast %94 : vector<8x1xi1> to vector<8x32xi1>
    %96 = vector.broadcast %cst_23 : f32 to vector<8x32xf32>
    %97 = arith.select %95, %84, %96 : vector<8x32xi1>, vector<8x32xf32>
    %98 = arith.index_cast %c1_i32 : i32 to index
    %c0_24 = arith.constant 0 : index
    %c0_25 = arith.constant 0 : index
    %99 = vector.load %arg7[%98, %c0_24, %c0_25] : memref<8x8x32xf32, #tpu.memory_space<vmem>>, vector<1x8x32xf32>
    %100 = vector.shape_cast %99 : vector<1x8x32xf32> to vector<8x32xf32>
    %101 = vector.shape_cast %97 : vector<8x32xf32> to vector<1x8x32xf32>
    tpu.vector_store %arg7[%98, %c0_24, %c0_25], %101 {strides = array<i32>} : memref<8x8x32xf32, #tpu.memory_space<vmem>>, vector<1x8x32xf32>,
    %c2_i32 = arith.constant 2 : i32
    %102 = arith.index_cast %c2_i32 : i32 to index
    %c0_26 = arith.constant 0 : index
    %c0_27 = arith.constant 0 : index
    %103 = vector.load %arg2[%102, %c0_26, %c0_27] : memref<8x8x128xf32, #tpu.memory_space<vmem>>, vector<1x8x128xf32>
    %104 = vector.shape_cast %103 : vector<1x8x128xf32> to vector<8x128xf32>
    %cst_28 = arith.constant dense<0.000000e+00> : vector<8x128xf32>
    %105 = tpu.matmul %90, %4, %cst_28 {dimension_numbers = #tpu.dot_dimension_numbers<[1], [0], [0], [1], [0, 0, 1, 1], [], []>} : vector<8x32xf32>, vector<32x128xf32>, vector<8x128xf32> -> vector<8x128xf32>
    %106 = arith.addf %104, %105 : vector<8x128xf32>
    %107 = vector.extract_strided_slice %106 {offsets = [0, 0], sizes = [8, 32], strides = [1, 1]} : vector<8x128xf32> to vector<8x32xf32>
    %108 = arith.negf %107 : vector<8x32xf32>
    %109 = math.exp %108 : vector<8x32xf32>
    %cst_29 = arith.constant 1.000000e+00 : f32
    %110 = vector.broadcast %cst_29 : f32 to vector<8x32xf32>
    %111 = arith.addf %110, %109 : vector<8x32xf32>
    %112 = arith.divf %110, %111 : vector<8x32xf32>
    %113 = vector.extract_strided_slice %106 {offsets = [0, 32], sizes = [8, 32], strides = [1, 1]} : vector<8x128xf32> to vector<8x32xf32>
    %114 = arith.negf %113 : vector<8x32xf32>
    %115 = math.exp %114 : vector<8x32xf32>
    %cst_30 = arith.constant 1.000000e+00 : f32
    %116 = vector.broadcast %cst_30 : f32 to vector<8x32xf32>
    %117 = arith.addf %116, %115 : vector<8x32xf32>
    %118 = arith.divf %116, %117 : vector<8x32xf32>
    %119 = vector.extract_strided_slice %106 {offsets = [0, 64], sizes = [8, 32], strides = [1, 1]} : vector<8x128xf32> to vector<8x32xf32>
    %120 = math.tanh %119 : vector<8x32xf32>
    %121 = vector.extract_strided_slice %106 {offsets = [0, 96], sizes = [8, 32], strides = [1, 1]} : vector<8x128xf32> to vector<8x32xf32>
    %122 = arith.negf %121 : vector<8x32xf32>
    %123 = math.exp %122 : vector<8x32xf32>
    %cst_31 = arith.constant 1.000000e+00 : f32
    %124 = vector.broadcast %cst_31 : f32 to vector<8x32xf32>
    %125 = arith.addf %124, %123 : vector<8x32xf32>
    %126 = arith.divf %124, %125 : vector<8x32xf32>
    %127 = arith.mulf %118, %93 : vector<8x32xf32>
    %128 = arith.mulf %112, %120 : vector<8x32xf32>
    %129 = arith.addf %127, %128 : vector<8x32xf32>
    %130 = math.tanh %129 : vector<8x32xf32>
    %131 = arith.mulf %126, %130 : vector<8x32xf32>
    %132 = arith.addi %5, %c2_i32 : i32
    %133 = vector.broadcast %132 : i32 to vector<8x1xi32>
    %134 = arith.cmpi sgt, %3, %133 : vector<8x1xi32>
    %135 = vector.shape_cast %134 : vector<8x1xi1> to vector<8x1xi1>
    %136 = vector.broadcast %135 : vector<8x1xi1> to vector<8x32xi1>
    %137 = arith.select %136, %131, %90 : vector<8x32xi1>, vector<8x32xf32>
    %138 = vector.shape_cast %134 : vector<8x1xi1> to vector<8x1xi1>
    %139 = vector.broadcast %138 : vector<8x1xi1> to vector<8x32xi1>
    %140 = arith.select %139, %129, %93 : vector<8x32xi1>, vector<8x32xf32>
    %cst_32 = arith.constant 0.000000e+00 : f32
    %141 = vector.shape_cast %134 : vector<8x1xi1> to vector<8x1xi1>
    %142 = vector.broadcast %141 : vector<8x1xi1> to vector<8x32xi1>
    %143 = vector.broadcast %cst_32 : f32 to vector<8x32xf32>
    %144 = arith.select %142, %131, %143 : vector<8x32xi1>, vector<8x32xf32>
    %145 = arith.index_cast %c2_i32 : i32 to index
    %c0_33 = arith.constant 0 : index
    %c0_34 = arith.constant 0 : index
    %146 = vector.load %arg7[%145, %c0_33, %c0_34] : memref<8x8x32xf32, #tpu.memory_space<vmem>>, vector<1x8x32xf32>
    %147 = vector.shape_cast %146 : vector<1x8x32xf32> to vector<8x32xf32>
    %148 = vector.shape_cast %144 : vector<8x32xf32> to vector<1x8x32xf32>
    tpu.vector_store %arg7[%145, %c0_33, %c0_34], %148 {strides = array<i32>} : memref<8x8x32xf32, #tpu.memory_space<vmem>>, vector<1x8x32xf32>,
    %c3_i32 = arith.constant 3 : i32
    %149 = arith.index_cast %c3_i32 : i32 to index
    %c0_35 = arith.constant 0 : index
    %c0_36 = arith.constant 0 : index
    %150 = vector.load %arg2[%149, %c0_35, %c0_36] : memref<8x8x128xf32, #tpu.memory_space<vmem>>, vector<1x8x128xf32>
    %151 = vector.shape_cast %150 : vector<1x8x128xf32> to vector<8x128xf32>
    %cst_37 = arith.constant dense<0.000000e+00> : vector<8x128xf32>
    %152 = tpu.matmul %137, %4, %cst_37 {dimension_numbers = #tpu.dot_dimension_numbers<[1], [0], [0], [1], [0, 0, 1, 1], [], []>} : vector<8x32xf32>, vector<32x128xf32>, vector<8x128xf32> -> vector<8x128xf32>
    %153 = arith.addf %151, %152 : vector<8x128xf32>
    %154 = vector.extract_strided_slice %153 {offsets = [0, 0], sizes = [8, 32], strides = [1, 1]} : vector<8x128xf32> to vector<8x32xf32>
    %155 = arith.negf %154 : vector<8x32xf32>
    %156 = math.exp %155 : vector<8x32xf32>
    %cst_38 = arith.constant 1.000000e+00 : f32
    %157 = vector.broadcast %cst_38 : f32 to vector<8x32xf32>
    %158 = arith.addf %157, %156 : vector<8x32xf32>
    %159 = arith.divf %157, %158 : vector<8x32xf32>
    %160 = vector.extract_strided_slice %153 {offsets = [0, 32], sizes = [8, 32], strides = [1, 1]} : vector<8x128xf32> to vector<8x32xf32>
    %161 = arith.negf %160 : vector<8x32xf32>
    %162 = math.exp %161 : vector<8x32xf32>
    %cst_39 = arith.constant 1.000000e+00 : f32
    %163 = vector.broadcast %cst_39 : f32 to vector<8x32xf32>
    %164 = arith.addf %163, %162 : vector<8x32xf32>
    %165 = arith.divf %163, %164 : vector<8x32xf32>
    %166 = vector.extract_strided_slice %153 {offsets = [0, 64], sizes = [8, 32], strides = [1, 1]} : vector<8x128xf32> to vector<8x32xf32>
    %167 = math.tanh %166 : vector<8x32xf32>
    %168 = vector.extract_strided_slice %153 {offsets = [0, 96], sizes = [8, 32], strides = [1, 1]} : vector<8x128xf32> to vector<8x32xf32>
    %169 = arith.negf %168 : vector<8x32xf32>
    %170 = math.exp %169 : vector<8x32xf32>
    %cst_40 = arith.constant 1.000000e+00 : f32
    %171 = vector.broadcast %cst_40 : f32 to vector<8x32xf32>
    %172 = arith.addf %171, %170 : vector<8x32xf32>
    %173 = arith.divf %171, %172 : vector<8x32xf32>
    %174 = arith.mulf %165, %140 : vector<8x32xf32>
    %175 = arith.mulf %159, %167 : vector<8x32xf32>
    %176 = arith.addf %174, %175 : vector<8x32xf32>
    %177 = math.tanh %176 : vector<8x32xf32>
    %178 = arith.mulf %173, %177 : vector<8x32xf32>
    %179 = arith.addi %5, %c3_i32 : i32
    %180 = vector.broadcast %179 : i32 to vector<8x1xi32>
    %181 = arith.cmpi sgt, %3, %180 : vector<8x1xi32>
    %182 = vector.shape_cast %181 : vector<8x1xi1> to vector<8x1xi1>
    %183 = vector.broadcast %182 : vector<8x1xi1> to vector<8x32xi1>
    %184 = arith.select %183, %178, %137 : vector<8x32xi1>, vector<8x32xf32>
    %185 = vector.shape_cast %181 : vector<8x1xi1> to vector<8x1xi1>
    %186 = vector.broadcast %185 : vector<8x1xi1> to vector<8x32xi1>
    %187 = arith.select %186, %176, %140 : vector<8x32xi1>, vector<8x32xf32>
    %cst_41 = arith.constant 0.000000e+00 : f32
    %188 = vector.shape_cast %181 : vector<8x1xi1> to vector<8x1xi1>
    %189 = vector.broadcast %188 : vector<8x1xi1> to vector<8x32xi1>
    %190 = vector.broadcast %cst_41 : f32 to vector<8x32xf32>
    %191 = arith.select %189, %178, %190 : vector<8x32xi1>, vector<8x32xf32>
    %192 = arith.index_cast %c3_i32 : i32 to index
    %c0_42 = arith.constant 0 : index
    %c0_43 = arith.constant 0 : index
    %193 = vector.load %arg7[%192, %c0_42, %c0_43] : memref<8x8x32xf32, #tpu.memory_space<vmem>>, vector<1x8x32xf32>
    %194 = vector.shape_cast %193 : vector<1x8x32xf32> to vector<8x32xf32>
    %195 = vector.shape_cast %191 : vector<8x32xf32> to vector<1x8x32xf32>
    tpu.vector_store %arg7[%192, %c0_42, %c0_43], %195 {strides = array<i32>} : memref<8x8x32xf32, #tpu.memory_space<vmem>>, vector<1x8x32xf32>,
    %c4_i32 = arith.constant 4 : i32
    %196 = arith.index_cast %c4_i32 : i32 to index
    %c0_44 = arith.constant 0 : index
    %c0_45 = arith.constant 0 : index
    %197 = vector.load %arg2[%196, %c0_44, %c0_45] : memref<8x8x128xf32, #tpu.memory_space<vmem>>, vector<1x8x128xf32>
    %198 = vector.shape_cast %197 : vector<1x8x128xf32> to vector<8x128xf32>
    %cst_46 = arith.constant dense<0.000000e+00> : vector<8x128xf32>
    %199 = tpu.matmul %184, %4, %cst_46 {dimension_numbers = #tpu.dot_dimension_numbers<[1], [0], [0], [1], [0, 0, 1, 1], [], []>} : vector<8x32xf32>, vector<32x128xf32>, vector<8x128xf32> -> vector<8x128xf32>
    %200 = arith.addf %198, %199 : vector<8x128xf32>
    %201 = vector.extract_strided_slice %200 {offsets = [0, 0], sizes = [8, 32], strides = [1, 1]} : vector<8x128xf32> to vector<8x32xf32>
    %202 = arith.negf %201 : vector<8x32xf32>
    %203 = math.exp %202 : vector<8x32xf32>
    %cst_47 = arith.constant 1.000000e+00 : f32
    %204 = vector.broadcast %cst_47 : f32 to vector<8x32xf32>
    %205 = arith.addf %204, %203 : vector<8x32xf32>
    %206 = arith.divf %204, %205 : vector<8x32xf32>
    %207 = vector.extract_strided_slice %200 {offsets = [0, 32], sizes = [8, 32], strides = [1, 1]} : vector<8x128xf32> to vector<8x32xf32>
    %208 = arith.negf %207 : vector<8x32xf32>
    %209 = math.exp %208 : vector<8x32xf32>
    %cst_48 = arith.constant 1.000000e+00 : f32
    %210 = vector.broadcast %cst_48 : f32 to vector<8x32xf32>
    %211 = arith.addf %210, %209 : vector<8x32xf32>
    %212 = arith.divf %210, %211 : vector<8x32xf32>
    %213 = vector.extract_strided_slice %200 {offsets = [0, 64], sizes = [8, 32], strides = [1, 1]} : vector<8x128xf32> to vector<8x32xf32>
    %214 = math.tanh %213 : vector<8x32xf32>
    %215 = vector.extract_strided_slice %200 {offsets = [0, 96], sizes = [8, 32], strides = [1, 1]} : vector<8x128xf32> to vector<8x32xf32>
    %216 = arith.negf %215 : vector<8x32xf32>
    %217 = math.exp %216 : vector<8x32xf32>
    %cst_49 = arith.constant 1.000000e+00 : f32
    %218 = vector.broadcast %cst_49 : f32 to vector<8x32xf32>
    %219 = arith.addf %218, %217 : vector<8x32xf32>
    %220 = arith.divf %218, %219 : vector<8x32xf32>
    %221 = arith.mulf %212, %187 : vector<8x32xf32>
    %222 = arith.mulf %206, %214 : vector<8x32xf32>
    %223 = arith.addf %221, %222 : vector<8x32xf32>
    %224 = math.tanh %223 : vector<8x32xf32>
    %225 = arith.mulf %220, %224 : vector<8x32xf32>
    %226 = arith.addi %5, %c4_i32 : i32
    %227 = vector.broadcast %226 : i32 to vector<8x1xi32>
    %228 = arith.cmpi sgt, %3, %227 : vector<8x1xi32>
    %229 = vector.shape_cast %228 : vector<8x1xi1> to vector<8x1xi1>
    %230 = vector.broadcast %229 : vector<8x1xi1> to vector<8x32xi1>
    %231 = arith.select %230, %225, %184 : vector<8x32xi1>, vector<8x32xf32>
    %232 = vector.shape_cast %228 : vector<8x1xi1> to vector<8x1xi1>
    %233 = vector.broadcast %232 : vector<8x1xi1> to vector<8x32xi1>
    %234 = arith.select %233, %223, %187 : vector<8x32xi1>, vector<8x32xf32>
    %cst_50 = arith.constant 0.000000e+00 : f32
    %235 = vector.shape_cast %228 : vector<8x1xi1> to vector<8x1xi1>
    %236 = vector.broadcast %235 : vector<8x1xi1> to vector<8x32xi1>
    %237 = vector.broadcast %cst_50 : f32 to vector<8x32xf32>
    %238 = arith.select %236, %225, %237 : vector<8x32xi1>, vector<8x32xf32>
    %239 = arith.index_cast %c4_i32 : i32 to index
    %c0_51 = arith.constant 0 : index
    %c0_52 = arith.constant 0 : index
    %240 = vector.load %arg7[%239, %c0_51, %c0_52] : memref<8x8x32xf32, #tpu.memory_space<vmem>>, vector<1x8x32xf32>
    %241 = vector.shape_cast %240 : vector<1x8x32xf32> to vector<8x32xf32>
    %242 = vector.shape_cast %238 : vector<8x32xf32> to vector<1x8x32xf32>
    tpu.vector_store %arg7[%239, %c0_51, %c0_52], %242 {strides = array<i32>} : memref<8x8x32xf32, #tpu.memory_space<vmem>>, vector<1x8x32xf32>,
    %c5_i32 = arith.constant 5 : i32
    %243 = arith.index_cast %c5_i32 : i32 to index
    %c0_53 = arith.constant 0 : index
    %c0_54 = arith.constant 0 : index
    %244 = vector.load %arg2[%243, %c0_53, %c0_54] : memref<8x8x128xf32, #tpu.memory_space<vmem>>, vector<1x8x128xf32>
    %245 = vector.shape_cast %244 : vector<1x8x128xf32> to vector<8x128xf32>
    %cst_55 = arith.constant dense<0.000000e+00> : vector<8x128xf32>
    %246 = tpu.matmul %231, %4, %cst_55 {dimension_numbers = #tpu.dot_dimension_numbers<[1], [0], [0], [1], [0, 0, 1, 1], [], []>} : vector<8x32xf32>, vector<32x128xf32>, vector<8x128xf32> -> vector<8x128xf32>
    %247 = arith.addf %245, %246 : vector<8x128xf32>
    %248 = vector.extract_strided_slice %247 {offsets = [0, 0], sizes = [8, 32], strides = [1, 1]} : vector<8x128xf32> to vector<8x32xf32>
    %249 = arith.negf %248 : vector<8x32xf32>
    %250 = math.exp %249 : vector<8x32xf32>
    %cst_56 = arith.constant 1.000000e+00 : f32
    %251 = vector.broadcast %cst_56 : f32 to vector<8x32xf32>
    %252 = arith.addf %251, %250 : vector<8x32xf32>
    %253 = arith.divf %251, %252 : vector<8x32xf32>
    %254 = vector.extract_strided_slice %247 {offsets = [0, 32], sizes = [8, 32], strides = [1, 1]} : vector<8x128xf32> to vector<8x32xf32>
    %255 = arith.negf %254 : vector<8x32xf32>
    %256 = math.exp %255 : vector<8x32xf32>
    %cst_57 = arith.constant 1.000000e+00 : f32
    %257 = vector.broadcast %cst_57 : f32 to vector<8x32xf32>
    %258 = arith.addf %257, %256 : vector<8x32xf32>
    %259 = arith.divf %257, %258 : vector<8x32xf32>
    %260 = vector.extract_strided_slice %247 {offsets = [0, 64], sizes = [8, 32], strides = [1, 1]} : vector<8x128xf32> to vector<8x32xf32>
    %261 = math.tanh %260 : vector<8x32xf32>
    %262 = vector.extract_strided_slice %247 {offsets = [0, 96], sizes = [8, 32], strides = [1, 1]} : vector<8x128xf32> to vector<8x32xf32>
    %263 = arith.negf %262 : vector<8x32xf32>
    %264 = math.exp %263 : vector<8x32xf32>
    %cst_58 = arith.constant 1.000000e+00 : f32
    %265 = vector.broadcast %cst_58 : f32 to vector<8x32xf32>
    %266 = arith.addf %265, %264 : vector<8x32xf32>
    %267 = arith.divf %265, %266 : vector<8x32xf32>
    %268 = arith.mulf %259, %234 : vector<8x32xf32>
    %269 = arith.mulf %253, %261 : vector<8x32xf32>
    %270 = arith.addf %268, %269 : vector<8x32xf32>
    %271 = math.tanh %270 : vector<8x32xf32>
    %272 = arith.mulf %267, %271 : vector<8x32xf32>
    %273 = arith.addi %5, %c5_i32 : i32
    %274 = vector.broadcast %273 : i32 to vector<8x1xi32>
    %275 = arith.cmpi sgt, %3, %274 : vector<8x1xi32>
    %276 = vector.shape_cast %275 : vector<8x1xi1> to vector<8x1xi1>
    %277 = vector.broadcast %276 : vector<8x1xi1> to vector<8x32xi1>
    %278 = arith.select %277, %272, %231 : vector<8x32xi1>, vector<8x32xf32>
    %279 = vector.shape_cast %275 : vector<8x1xi1> to vector<8x1xi1>
    %280 = vector.broadcast %279 : vector<8x1xi1> to vector<8x32xi1>
    %281 = arith.select %280, %270, %234 : vector<8x32xi1>, vector<8x32xf32>
    %cst_59 = arith.constant 0.000000e+00 : f32
    %282 = vector.shape_cast %275 : vector<8x1xi1> to vector<8x1xi1>
    %283 = vector.broadcast %282 : vector<8x1xi1> to vector<8x32xi1>
    %284 = vector.broadcast %cst_59 : f32 to vector<8x32xf32>
    %285 = arith.select %283, %272, %284 : vector<8x32xi1>, vector<8x32xf32>
    %286 = arith.index_cast %c5_i32 : i32 to index
    %c0_60 = arith.constant 0 : index
    %c0_61 = arith.constant 0 : index
    %287 = vector.load %arg7[%286, %c0_60, %c0_61] : memref<8x8x32xf32, #tpu.memory_space<vmem>>, vector<1x8x32xf32>
    %288 = vector.shape_cast %287 : vector<1x8x32xf32> to vector<8x32xf32>
    %289 = vector.shape_cast %285 : vector<8x32xf32> to vector<1x8x32xf32>
    tpu.vector_store %arg7[%286, %c0_60, %c0_61], %289 {strides = array<i32>} : memref<8x8x32xf32, #tpu.memory_space<vmem>>, vector<1x8x32xf32>,
    %c6_i32 = arith.constant 6 : i32
    %290 = arith.index_cast %c6_i32 : i32 to index
    %c0_62 = arith.constant 0 : index
    %c0_63 = arith.constant 0 : index
    %291 = vector.load %arg2[%290, %c0_62, %c0_63] : memref<8x8x128xf32, #tpu.memory_space<vmem>>, vector<1x8x128xf32>
    %292 = vector.shape_cast %291 : vector<1x8x128xf32> to vector<8x128xf32>
    %cst_64 = arith.constant dense<0.000000e+00> : vector<8x128xf32>
    %293 = tpu.matmul %278, %4, %cst_64 {dimension_numbers = #tpu.dot_dimension_numbers<[1], [0], [0], [1], [0, 0, 1, 1], [], []>} : vector<8x32xf32>, vector<32x128xf32>, vector<8x128xf32> -> vector<8x128xf32>
    %294 = arith.addf %292, %293 : vector<8x128xf32>
    %295 = vector.extract_strided_slice %294 {offsets = [0, 0], sizes = [8, 32], strides = [1, 1]} : vector<8x128xf32> to vector<8x32xf32>
    %296 = arith.negf %295 : vector<8x32xf32>
    %297 = math.exp %296 : vector<8x32xf32>
    %cst_65 = arith.constant 1.000000e+00 : f32
    %298 = vector.broadcast %cst_65 : f32 to vector<8x32xf32>
    %299 = arith.addf %298, %297 : vector<8x32xf32>
    %300 = arith.divf %298, %299 : vector<8x32xf32>
    %301 = vector.extract_strided_slice %294 {offsets = [0, 32], sizes = [8, 32], strides = [1, 1]} : vector<8x128xf32> to vector<8x32xf32>
    %302 = arith.negf %301 : vector<8x32xf32>
    %303 = math.exp %302 : vector<8x32xf32>
    %cst_66 = arith.constant 1.000000e+00 : f32
    %304 = vector.broadcast %cst_66 : f32 to vector<8x32xf32>
    %305 = arith.addf %304, %303 : vector<8x32xf32>
    %306 = arith.divf %304, %305 : vector<8x32xf32>
    %307 = vector.extract_strided_slice %294 {offsets = [0, 64], sizes = [8, 32], strides = [1, 1]} : vector<8x128xf32> to vector<8x32xf32>
    %308 = math.tanh %307 : vector<8x32xf32>
    %309 = vector.extract_strided_slice %294 {offsets = [0, 96], sizes = [8, 32], strides = [1, 1]} : vector<8x128xf32> to vector<8x32xf32>
    %310 = arith.negf %309 : vector<8x32xf32>
    %311 = math.exp %310 : vector<8x32xf32>
    %cst_67 = arith.constant 1.000000e+00 : f32
    %312 = vector.broadcast %cst_67 : f32 to vector<8x32xf32>
    %313 = arith.addf %312, %311 : vector<8x32xf32>
    %314 = arith.divf %312, %313 : vector<8x32xf32>
    %315 = arith.mulf %306, %281 : vector<8x32xf32>
    %316 = arith.mulf %300, %308 : vector<8x32xf32>
    %317 = arith.addf %315, %316 : vector<8x32xf32>
    %318 = math.tanh %317 : vector<8x32xf32>
    %319 = arith.mulf %314, %318 : vector<8x32xf32>
    %320 = arith.addi %5, %c6_i32 : i32
    %321 = vector.broadcast %320 : i32 to vector<8x1xi32>
    %322 = arith.cmpi sgt, %3, %321 : vector<8x1xi32>
    %323 = vector.shape_cast %322 : vector<8x1xi1> to vector<8x1xi1>
    %324 = vector.broadcast %323 : vector<8x1xi1> to vector<8x32xi1>
    %325 = arith.select %324, %319, %278 : vector<8x32xi1>, vector<8x32xf32>
    %326 = vector.shape_cast %322 : vector<8x1xi1> to vector<8x1xi1>
    %327 = vector.broadcast %326 : vector<8x1xi1> to vector<8x32xi1>
    %328 = arith.select %327, %317, %281 : vector<8x32xi1>, vector<8x32xf32>
    %cst_68 = arith.constant 0.000000e+00 : f32
    %329 = vector.shape_cast %322 : vector<8x1xi1> to vector<8x1xi1>
    %330 = vector.broadcast %329 : vector<8x1xi1> to vector<8x32xi1>
    %331 = vector.broadcast %cst_68 : f32 to vector<8x32xf32>
    %332 = arith.select %330, %319, %331 : vector<8x32xi1>, vector<8x32xf32>
    %333 = arith.index_cast %c6_i32 : i32 to index
    %c0_69 = arith.constant 0 : index
    %c0_70 = arith.constant 0 : index
    %334 = vector.load %arg7[%333, %c0_69, %c0_70] : memref<8x8x32xf32, #tpu.memory_space<vmem>>, vector<1x8x32xf32>
    %335 = vector.shape_cast %334 : vector<1x8x32xf32> to vector<8x32xf32>
    %336 = vector.shape_cast %332 : vector<8x32xf32> to vector<1x8x32xf32>
    tpu.vector_store %arg7[%333, %c0_69, %c0_70], %336 {strides = array<i32>} : memref<8x8x32xf32, #tpu.memory_space<vmem>>, vector<1x8x32xf32>,
    %c7_i32 = arith.constant 7 : i32
    %337 = arith.index_cast %c7_i32 : i32 to index
    %c0_71 = arith.constant 0 : index
    %c0_72 = arith.constant 0 : index
    %338 = vector.load %arg2[%337, %c0_71, %c0_72] : memref<8x8x128xf32, #tpu.memory_space<vmem>>, vector<1x8x128xf32>
    %339 = vector.shape_cast %338 : vector<1x8x128xf32> to vector<8x128xf32>
    %cst_73 = arith.constant dense<0.000000e+00> : vector<8x128xf32>
    %340 = tpu.matmul %325, %4, %cst_73 {dimension_numbers = #tpu.dot_dimension_numbers<[1], [0], [0], [1], [0, 0, 1, 1], [], []>} : vector<8x32xf32>, vector<32x128xf32>, vector<8x128xf32> -> vector<8x128xf32>
    %341 = arith.addf %339, %340 : vector<8x128xf32>
    %342 = vector.extract_strided_slice %341 {offsets = [0, 0], sizes = [8, 32], strides = [1, 1]} : vector<8x128xf32> to vector<8x32xf32>
    %343 = arith.negf %342 : vector<8x32xf32>
    %344 = math.exp %343 : vector<8x32xf32>
    %cst_74 = arith.constant 1.000000e+00 : f32
    %345 = vector.broadcast %cst_74 : f32 to vector<8x32xf32>
    %346 = arith.addf %345, %344 : vector<8x32xf32>
    %347 = arith.divf %345, %346 : vector<8x32xf32>
    %348 = vector.extract_strided_slice %341 {offsets = [0, 32], sizes = [8, 32], strides = [1, 1]} : vector<8x128xf32> to vector<8x32xf32>
    %349 = arith.negf %348 : vector<8x32xf32>
    %350 = math.exp %349 : vector<8x32xf32>
    %cst_75 = arith.constant 1.000000e+00 : f32
    %351 = vector.broadcast %cst_75 : f32 to vector<8x32xf32>
    %352 = arith.addf %351, %350 : vector<8x32xf32>
    %353 = arith.divf %351, %352 : vector<8x32xf32>
    %354 = vector.extract_strided_slice %341 {offsets = [0, 64], sizes = [8, 32], strides = [1, 1]} : vector<8x128xf32> to vector<8x32xf32>
    %355 = math.tanh %354 : vector<8x32xf32>
    %356 = vector.extract_strided_slice %341 {offsets = [0, 96], sizes = [8, 32], strides = [1, 1]} : vector<8x128xf32> to vector<8x32xf32>
    %357 = arith.negf %356 : vector<8x32xf32>
    %358 = math.exp %357 : vector<8x32xf32>
    %cst_76 = arith.constant 1.000000e+00 : f32
    %359 = vector.broadcast %cst_76 : f32 to vector<8x32xf32>
    %360 = arith.addf %359, %358 : vector<8x32xf32>
    %361 = arith.divf %359, %360 : vector<8x32xf32>
    %362 = arith.mulf %353, %328 : vector<8x32xf32>
    %363 = arith.mulf %347, %355 : vector<8x32xf32>
    %364 = arith.addf %362, %363 : vector<8x32xf32>
    %365 = math.tanh %364 : vector<8x32xf32>
    %366 = arith.mulf %361, %365 : vector<8x32xf32>
    %367 = arith.addi %5, %c7_i32 : i32
    %368 = vector.broadcast %367 : i32 to vector<8x1xi32>
    %369 = arith.cmpi sgt, %3, %368 : vector<8x1xi32>
    %370 = vector.shape_cast %369 : vector<8x1xi1> to vector<8x1xi1>
    %371 = vector.broadcast %370 : vector<8x1xi1> to vector<8x32xi1>
    %372 = arith.select %371, %366, %325 : vector<8x32xi1>, vector<8x32xf32>
    %373 = vector.shape_cast %369 : vector<8x1xi1> to vector<8x1xi1>
    %374 = vector.broadcast %373 : vector<8x1xi1> to vector<8x32xi1>
    %375 = arith.select %374, %364, %328 : vector<8x32xi1>, vector<8x32xf32>
    %cst_77 = arith.constant 0.000000e+00 : f32
    %376 = vector.shape_cast %369 : vector<8x1xi1> to vector<8x1xi1>
    %377 = vector.broadcast %376 : vector<8x1xi1> to vector<8x32xi1>
    %378 = vector.broadcast %cst_77 : f32 to vector<8x32xf32>
    %379 = arith.select %377, %366, %378 : vector<8x32xi1>, vector<8x32xf32>
    %380 = arith.index_cast %c7_i32 : i32 to index
    %c0_78 = arith.constant 0 : index
    %c0_79 = arith.constant 0 : index
    %381 = vector.load %arg7[%380, %c0_78, %c0_79] : memref<8x8x32xf32, #tpu.memory_space<vmem>>, vector<1x8x32xf32>
    %382 = vector.shape_cast %381 : vector<1x8x32xf32> to vector<8x32xf32>
    %383 = vector.shape_cast %379 : vector<8x32xf32> to vector<1x8x32xf32>
    tpu.vector_store %arg7[%380, %c0_78, %c0_79], %383 {strides = array<i32>} : memref<8x8x32xf32, #tpu.memory_space<vmem>>, vector<1x8x32xf32>,
    %c8_i32_80 = arith.constant 8 : i32
    %c0_81 = arith.constant 0 : index
    %c0_82 = arith.constant 0 : index
    %384 = vector.load %arg9[%c0_81, %c0_82] : memref<8x32xf32, #tpu.memory_space<vmem>>, vector<8x32xf32>
    tpu.vector_store %arg9[%c0_81, %c0_82], %372 {strides = array<i32>} : memref<8x32xf32, #tpu.memory_space<vmem>>, vector<8x32xf32>,
    %c0_83 = arith.constant 0 : index
    %c0_84 = arith.constant 0 : index
    %385 = vector.load %arg10[%c0_83, %c0_84] : memref<8x32xf32, #tpu.memory_space<vmem>>, vector<8x32xf32>
    tpu.vector_store %arg10[%c0_83, %c0_84], %375 {strides = array<i32>} : memref<8x32xf32, #tpu.memory_space<vmem>>, vector<8x32xf32>,
    %c0_i32_85 = arith.constant 0 : i32
    %386 = arith.cmpi eq, %arg1, %c0_i32_85 : i32
    %387 = arith.extui %386 : i1 to i32
    %c0_i32_86 = arith.constant 0 : i32
    %388 = arith.cmpi ne, %387, %c0_i32_86 : i32
    scf.if %388 {
      %c0_87 = arith.constant 0 : index
      %c0_88 = arith.constant 0 : index
      %389 = vector.load %arg8[%c0_87, %c0_88] : memref<8x32xf32, #tpu.memory_space<vmem>>, vector<8x32xf32>
      tpu.vector_store %arg8[%c0_87, %c0_88], %372 {strides = array<i32>} : memref<8x32xf32, #tpu.memory_space<vmem>>, vector<8x32xf32>,
    } else {
    }
    return
  }
  func.func @transform_0(%arg0: i32, %arg1: i32) -> (i32, i32, i32) {
    %c0_i32 = arith.constant 0 : i32
    %c0_i32_0 = arith.constant 0 : i32
    return %arg1, %arg0, %c0_i32 : i32, i32, i32
  }
  func.func @transform_1(%arg0: i32, %arg1: i32) -> (i32, i32) {
    %c0_i32 = arith.constant 0 : i32
    %c0_i32_0 = arith.constant 0 : i32
    %c0_i32_1 = arith.constant 0 : i32
    return %c0_i32, %c0_i32_0 : i32, i32
  }
  func.func @transform_2(%arg0: i32, %arg1: i32) -> (i32, i32) {
    %c0_i32 = arith.constant 0 : i32
    %c0_i32_0 = arith.constant 0 : i32
    %c0_i32_1 = arith.constant 0 : i32
    return %c0_i32, %c0_i32_0 : i32, i32
  }
  func.func @transform_3(%arg0: i32, %arg1: i32) -> (i32, i32) {
    %c0_i32 = arith.constant 0 : i32
    %c0_i32_0 = arith.constant 0 : i32
    %c0_i32_1 = arith.constant 0 : i32
    return %c0_i32, %c0_i32_0 : i32, i32
  }
  func.func @transform_4(%arg0: i32, %arg1: i32) -> (i32, i32) {
    %c0_i32 = arith.constant 0 : i32
    %c0_i32_0 = arith.constant 0 : i32
    return %arg0, %c0_i32 : i32, i32
  }
  func.func @transform_5(%arg0: i32, %arg1: i32) -> (i32, i32, i32) {
    %c0_i32 = arith.constant 0 : i32
    %c0_i32_0 = arith.constant 0 : i32
    return %arg1, %arg0, %c0_i32 : i32, i32, i32
  }
  func.func @transform_6(%arg0: i32, %arg1: i32) -> (i32, i32) {
    %c0_i32 = arith.constant 0 : i32
    %c0_i32_0 = arith.constant 0 : i32
    return %arg0, %c0_i32 : i32, i32
  }
}

module attributes {stable_mosaic.version = 11 : i64} {
  func.func @lstm_recurrence_kernel(%arg0: i32, %arg1: i32, %arg2: memref<8x8x128xf32, #tpu.memory_space<vmem>>, %arg3: memref<32x128xf32, #tpu.memory_space<vmem>>, %arg4: memref<1x32xf32, #tpu.memory_space<vmem>>, %arg5: memref<1x32xf32, #tpu.memory_space<vmem>>, %arg6: memref<8x1xi32, #tpu.memory_space<vmem>>, %arg7: memref<8x8x32xf32, #tpu.memory_space<vmem>>, %arg8: memref<8x32xf32, #tpu.memory_space<vmem>>, %arg9: memref<8x32xf32, #tpu.memory_space<vmem>>, %arg10: memref<8x32xf32, #tpu.memory_space<vmem>>) attributes {dimension_semantics = [#tpu.dimension_semantics<parallel>, #tpu.dimension_semantics<arbitrary>], iteration_bounds = array<i64: 1, 1>, scalar_prefetch = 0 : i64, scratch_operands = 2 : i64, tpu.core_type = #tpu.core_type<tc>, window_params = [{transform_indices = @transform_0, window_bounds = array<i64: 8, 8, 128>}, {pipeline_mode = #tpu.pipeline_mode<synchronous>, transform_indices = @transform_1, window_bounds = array<i64: 32, 128>}, {pipeline_mode = #tpu.pipeline_mode<synchronous>, transform_indices = @transform_2, window_bounds = array<i64: 1, 32>}, {pipeline_mode = #tpu.pipeline_mode<synchronous>, transform_indices = @transform_3, window_bounds = array<i64: 1, 32>}, {transform_indices = @transform_4, window_bounds = array<i64: 8, 1>}, {transform_indices = @transform_5, window_bounds = array<i64: 8, 8, 32>}, {transform_indices = @transform_6, window_bounds = array<i64: 8, 32>}]} {
    %c0_i32 = arith.constant 0 : i32
    %0 = arith.cmpi eq, %arg1, %c0_i32 : i32
    %1 = arith.extui %0 : i1 to i32
    %c0_i32_0 = arith.constant 0 : i32
    %2 = arith.cmpi ne, %1, %c0_i32_0 : i32
    scf.if %2 {
      %c0_87 = arith.constant 0 : index
      %c0_88 = arith.constant 0 : index
      %389 = vector.load %arg4[%c0_87, %c0_88] : memref<1x32xf32, #tpu.memory_space<vmem>>, vector<1x32xf32>
      %390 = vector.shape_cast %389 : vector<1x32xf32> to vector<1x32xf32>
      %391 = vector.broadcast %390 : vector<1x32xf32> to vector<8x32xf32>
      %c0_89 = arith.constant 0 : index
      %c0_90 = arith.constant 0 : index
      %392 = vector.load %arg9[%c0_89, %c0_90] : memref<8x32xf32, #tpu.memory_space<vmem>>, vector<8x32xf32>
      tpu.vector_store %arg9[%c0_89, %c0_90], %391 {strides = array<i32>} : memref<8x32xf32, #tpu.memory_space<vmem>>, vector<8x32xf32>,
      %c0_91 = arith.constant 0 : index
      %c0_92 = arith.constant 0 : index
      %393 = vector.load %arg5[%c0_91, %c0_92] : memref<1x32xf32, #tpu.memory_space<vmem>>, vector<1x32xf32>
      %394 = vector.shape_cast %393 : vector<1x32xf32> to vector<1x32xf32>
      %395 = vector.broadcast %394 : vector<1x32xf32> to vector<8x32xf32>
      %c0_93 = arith.constant 0 : index
      %c0_94 = arith.constant 0 : index
      %396 = vector.load %arg10[%c0_93, %c0_94] : memref<8x32xf32, #tpu.memory_space<vmem>>, vector<8x32xf32>
      tpu.vector_store %arg10[%c0_93, %c0_94], %395 {strides = array<i32>} : memref<8x32xf32, #tpu.memory_space<vmem>>, vector<8x32xf32>,
    } else {
    }
    %c0 = arith.constant 0 : index
    %c0_1 = arith.constant 0 : index
    %3 = vector.load %arg6[%c0, %c0_1] : memref<8x1xi32, #tpu.memory_space<vmem>>, vector<8x1xi32>
    %c0_2 = arith.constant 0 : index
    %c0_3 = arith.constant 0 : index
    %4 = vector.load %arg3[%c0_2, %c0_3] : memref<32x128xf32, #tpu.memory_space<vmem>>, vector<32x128xf32>
    %c8_i32 = arith.constant 8 : i32
    %5 = arith.muli %arg1, %c8_i32 : i32
    %c0_4 = arith.constant 0 : index
    %c0_5 = arith.constant 0 : index
    %6 = vector.load %arg9[%c0_4, %c0_5] : memref<8x32xf32, #tpu.memory_space<vmem>>, vector<8x32xf32>
    %c0_6 = arith.constant 0 : index
    %c0_7 = arith.constant 0 : index
    %7 = vector.load %arg10[%c0_6, %c0_7] : memref<8x32xf32, #tpu.memory_space<vmem>>, vector<8x32xf32>
    %c0_i32_8 = arith.constant 0 : i32
    %8 = arith.index_cast %c0_i32_8 : i32 to index
    %c0_9 = arith.constant 0 : index
    %c0_10 = arith.constant 0 : index
    %9 = vector.load %arg2[%8, %c0_9, %c0_10] : memref<8x8x128xf32, #tpu.memory_space<vmem>>, vector<1x8x128xf32>
    %10 = vector.shape_cast %9 : vector<1x8x128xf32> to vector<8x128xf32>
    %cst = arith.constant dense<0.000000e+00> : vector<8x128xf32>
    %11 = tpu.matmul %6, %4, %cst {dimension_numbers = #tpu.dot_dimension_numbers<[1], [0], [0], [1], [0, 0, 1, 1], [], []>} : vector<8x32xf32>, vector<32x128xf32>, vector<8x128xf32> -> vector<8x128xf32>
    %12 = arith.addf %10, %11 : vector<8x128xf32>
    %13 = vector.extract_strided_slice %12 {offsets = [0, 0], sizes = [8, 32], strides = [1, 1]} : vector<8x128xf32> to vector<8x32xf32>
    %14 = arith.negf %13 : vector<8x32xf32>
    %15 = math.exp %14 : vector<8x32xf32>
    %cst_11 = arith.constant 1.000000e+00 : f32
    %16 = vector.broadcast %cst_11 : f32 to vector<8x32xf32>
    %17 = arith.addf %16, %15 : vector<8x32xf32>
    %18 = arith.divf %16, %17 : vector<8x32xf32>
    %19 = vector.extract_strided_slice %12 {offsets = [0, 32], sizes = [8, 32], strides = [1, 1]} : vector<8x128xf32> to vector<8x32xf32>
    %20 = arith.negf %19 : vector<8x32xf32>
    %21 = math.exp %20 : vector<8x32xf32>
    %cst_12 = arith.constant 1.000000e+00 : f32
    %22 = vector.broadcast %cst_12 : f32 to vector<8x32xf32>
    %23 = arith.addf %22, %21 : vector<8x32xf32>
    %24 = arith.divf %22, %23 : vector<8x32xf32>
    %25 = vector.extract_strided_slice %12 {offsets = [0, 64], sizes = [8, 32], strides = [1, 1]} : vector<8x128xf32> to vector<8x32xf32>
    %26 = math.tanh %25 : vector<8x32xf32>
    %27 = vector.extract_strided_slice %12 {offsets = [0, 96], sizes = [8, 32], strides = [1, 1]} : vector<8x128xf32> to vector<8x32xf32>
    %28 = arith.negf %27 : vector<8x32xf32>
    %29 = math.exp %28 : vector<8x32xf32>
    %cst_13 = arith.constant 1.000000e+00 : f32
    %30 = vector.broadcast %cst_13 : f32 to vector<8x32xf32>
    %31 = arith.addf %30, %29 : vector<8x32xf32>
    %32 = arith.divf %30, %31 : vector<8x32xf32>
    %33 = arith.mulf %24, %7 : vector<8x32xf32>
    %34 = arith.mulf %18, %26 : vector<8x32xf32>
    %35 = arith.addf %33, %34 : vector<8x32xf32>
    %36 = math.tanh %35 : vector<8x32xf32>
    %37 = arith.mulf %32, %36 : vector<8x32xf32>
    %38 = arith.addi %5, %c0_i32_8 : i32
    %39 = vector.broadcast %38 : i32 to vector<8x1xi32>
    %40 = arith.cmpi sgt, %3, %39 : vector<8x1xi32>
    %41 = vector.shape_cast %40 : vector<8x1xi1> to vector<8x1xi1>
    %42 = vector.broadcast %41 : vector<8x1xi1> to vector<8x32xi1>
    %43 = arith.select %42, %37, %6 : vector<8x32xi1>, vector<8x32xf32>
    %44 = vector.shape_cast %40 : vector<8x1xi1> to vector<8x1xi1>
    %45 = vector.broadcast %44 : vector<8x1xi1> to vector<8x32xi1>
    %46 = arith.select %45, %35, %7 : vector<8x32xi1>, vector<8x32xf32>
    %cst_14 = arith.constant 0.000000e+00 : f32
    %47 = vector.shape_cast %40 : vector<8x1xi1> to vector<8x1xi1>
    %48 = vector.broadcast %47 : vector<8x1xi1> to vector<8x32xi1>
    %49 = vector.broadcast %cst_14 : f32 to vector<8x32xf32>
    %50 = arith.select %48, %37, %49 : vector<8x32xi1>, vector<8x32xf32>
    %51 = arith.index_cast %c0_i32_8 : i32 to index
    %c0_15 = arith.constant 0 : index
    %c0_16 = arith.constant 0 : index
    %52 = vector.load %arg7[%51, %c0_15, %c0_16] : memref<8x8x32xf32, #tpu.memory_space<vmem>>, vector<1x8x32xf32>
    %53 = vector.shape_cast %52 : vector<1x8x32xf32> to vector<8x32xf32>
    %54 = vector.shape_cast %50 : vector<8x32xf32> to vector<1x8x32xf32>
    tpu.vector_store %arg7[%51, %c0_15, %c0_16], %54 {strides = array<i32>} : memref<8x8x32xf32, #tpu.memory_space<vmem>>, vector<1x8x32xf32>,
    %c1_i32 = arith.constant 1 : i32
    %55 = arith.index_cast %c1_i32 : i32 to index
    %c0_17 = arith.constant 0 : index
    %c0_18 = arith.constant 0 : index
    %56 = vector.load %arg2[%55, %c0_17, %c0_18] : memref<8x8x128xf32, #tpu.memory_space<vmem>>, vector<1x8x128xf32>
    %57 = vector.shape_cast %56 : vector<1x8x128xf32> to vector<8x128xf32>
    %cst_19 = arith.constant dense<0.000000e+00> : vector<8x128xf32>
    %58 = tpu.matmul %43, %4, %cst_19 {dimension_numbers = #tpu.dot_dimension_numbers<[1], [0], [0], [1], [0, 0, 1, 1], [], []>} : vector<8x32xf32>, vector<32x128xf32>, vector<8x128xf32> -> vector<8x128xf32>
    %59 = arith.addf %57, %58 : vector<8x128xf32>
    %60 = vector.extract_strided_slice %59 {offsets = [0, 0], sizes = [8, 32], strides = [1, 1]} : vector<8x128xf32> to vector<8x32xf32>
    %61 = arith.negf %60 : vector<8x32xf32>
    %62 = math.exp %61 : vector<8x32xf32>
    %cst_20 = arith.constant 1.000000e+00 : f32
    %63 = vector.broadcast %cst_20 : f32 to vector<8x32xf32>
    %64 = arith.addf %63, %62 : vector<8x32xf32>
    %65 = arith.divf %63, %64 : vector<8x32xf32>
    %66 = vector.extract_strided_slice %59 {offsets = [0, 32], sizes = [8, 32], strides = [1, 1]} : vector<8x128xf32> to vector<8x32xf32>
    %67 = arith.negf %66 : vector<8x32xf32>
    %68 = math.exp %67 : vector<8x32xf32>
    %cst_21 = arith.constant 1.000000e+00 : f32
    %69 = vector.broadcast %cst_21 : f32 to vector<8x32xf32>
    %70 = arith.addf %69, %68 : vector<8x32xf32>
    %71 = arith.divf %69, %70 : vector<8x32xf32>
    %72 = vector.extract_strided_slice %59 {offsets = [0, 64], sizes = [8, 32], strides = [1, 1]} : vector<8x128xf32> to vector<8x32xf32>
    %73 = math.tanh %72 : vector<8x32xf32>
    %74 = vector.extract_strided_slice %59 {offsets = [0, 96], sizes = [8, 32], strides = [1, 1]} : vector<8x128xf32> to vector<8x32xf32>
    %75 = arith.negf %74 : vector<8x32xf32>
    %76 = math.exp %75 : vector<8x32xf32>
    %cst_22 = arith.constant 1.000000e+00 : f32
    %77 = vector.broadcast %cst_22 : f32 to vector<8x32xf32>
    %78 = arith.addf %77, %76 : vector<8x32xf32>
    %79 = arith.divf %77, %78 : vector<8x32xf32>
    %80 = arith.mulf %71, %46 : vector<8x32xf32>
    %81 = arith.mulf %65, %73 : vector<8x32xf32>
    %82 = arith.addf %80, %81 : vector<8x32xf32>
    %83 = math.tanh %82 : vector<8x32xf32>
    %84 = arith.mulf %79, %83 : vector<8x32xf32>
    %85 = arith.addi %5, %c1_i32 : i32
    %86 = vector.broadcast %85 : i32 to vector<8x1xi32>
    %87 = arith.cmpi sgt, %3, %86 : vector<8x1xi32>
    %88 = vector.shape_cast %87 : vector<8x1xi1> to vector<8x1xi1>
    %89 = vector.broadcast %88 : vector<8x1xi1> to vector<8x32xi1>
    %90 = arith.select %89, %84, %43 : vector<8x32xi1>, vector<8x32xf32>
    %91 = vector.shape_cast %87 : vector<8x1xi1> to vector<8x1xi1>
    %92 = vector.broadcast %91 : vector<8x1xi1> to vector<8x32xi1>
    %93 = arith.select %92, %82, %46 : vector<8x32xi1>, vector<8x32xf32>
    %cst_23 = arith.constant 0.000000e+00 : f32
    %94 = vector.shape_cast %87 : vector<8x1xi1> to vector<8x1xi1>
    %95 = vector.broadcast %94 : vector<8x1xi1> to vector<8x32xi1>
    %96 = vector.broadcast %cst_23 : f32 to vector<8x32xf32>
    %97 = arith.select %95, %84, %96 : vector<8x32xi1>, vector<8x32xf32>
    %98 = arith.index_cast %c1_i32 : i32 to index
    %c0_24 = arith.constant 0 : index
    %c0_25 = arith.constant 0 : index
    %99 = vector.load %arg7[%98, %c0_24, %c0_25] : memref<8x8x32xf32, #tpu.memory_space<vmem>>, vector<1x8x32xf32>
    %100 = vector.shape_cast %99 : vector<1x8x32xf32> to vector<8x32xf32>
    %101 = vector.shape_cast %97 : vector<8x32xf32> to vector<1x8x32xf32>
    tpu.vector_store %arg7[%98, %c0_24, %c0_25], %101 {strides = array<i32>} : memref<8x8x32xf32, #tpu.memory_space<vmem>>, vector<1x8x32xf32>,
    %c2_i32 = arith.constant 2 : i32
    %102 = arith.index_cast %c2_i32 : i32 to index
    %c0_26 = arith.constant 0 : index
    %c0_27 = arith.constant 0 : index
    %103 = vector.load %arg2[%102, %c0_26, %c0_27] : memref<8x8x128xf32, #tpu.memory_space<vmem>>, vector<1x8x128xf32>
    %104 = vector.shape_cast %103 : vector<1x8x128xf32> to vector<8x128xf32>
    %cst_28 = arith.constant dense<0.000000e+00> : vector<8x128xf32>
    %105 = tpu.matmul %90, %4, %cst_28 {dimension_numbers = #tpu.dot_dimension_numbers<[1], [0], [0], [1], [0, 0, 1, 1], [], []>} : vector<8x32xf32>, vector<32x128xf32>, vector<8x128xf32> -> vector<8x128xf32>
    %106 = arith.addf %104, %105 : vector<8x128xf32>
    %107 = vector.extract_strided_slice %106 {offsets = [0, 0], sizes = [8, 32], strides = [1, 1]} : vector<8x128xf32> to vector<8x32xf32>
    %108 = arith.negf %107 : vector<8x32xf32>
    %109 = math.exp %108 : vector<8x32xf32>
    %cst_29 = arith.constant 1.000000e+00 : f32
    %110 = vector.broadcast %cst_29 : f32 to vector<8x32xf32>
    %111 = arith.addf %110, %109 : vector<8x32xf32>
    %112 = arith.divf %110, %111 : vector<8x32xf32>
    %113 = vector.extract_strided_slice %106 {offsets = [0, 32], sizes = [8, 32], strides = [1, 1]} : vector<8x128xf32> to vector<8x32xf32>
    %114 = arith.negf %113 : vector<8x32xf32>
    %115 = math.exp %114 : vector<8x32xf32>
    %cst_30 = arith.constant 1.000000e+00 : f32
    %116 = vector.broadcast %cst_30 : f32 to vector<8x32xf32>
    %117 = arith.addf %116, %115 : vector<8x32xf32>
    %118 = arith.divf %116, %117 : vector<8x32xf32>
    %119 = vector.extract_strided_slice %106 {offsets = [0, 64], sizes = [8, 32], strides = [1, 1]} : vector<8x128xf32> to vector<8x32xf32>
    %120 = math.tanh %119 : vector<8x32xf32>
    %121 = vector.extract_strided_slice %106 {offsets = [0, 96], sizes = [8, 32], strides = [1, 1]} : vector<8x128xf32> to vector<8x32xf32>
    %122 = arith.negf %121 : vector<8x32xf32>
    %123 = math.exp %122 : vector<8x32xf32>
    %cst_31 = arith.constant 1.000000e+00 : f32
    %124 = vector.broadcast %cst_31 : f32 to vector<8x32xf32>
    %125 = arith.addf %124, %123 : vector<8x32xf32>
    %126 = arith.divf %124, %125 : vector<8x32xf32>
    %127 = arith.mulf %118, %93 : vector<8x32xf32>
    %128 = arith.mulf %112, %120 : vector<8x32xf32>
    %129 = arith.addf %127, %128 : vector<8x32xf32>
    %130 = math.tanh %129 : vector<8x32xf32>
    %131 = arith.mulf %126, %130 : vector<8x32xf32>
    %132 = arith.addi %5, %c2_i32 : i32
    %133 = vector.broadcast %132 : i32 to vector<8x1xi32>
    %134 = arith.cmpi sgt, %3, %133 : vector<8x1xi32>
    %135 = vector.shape_cast %134 : vector<8x1xi1> to vector<8x1xi1>
    %136 = vector.broadcast %135 : vector<8x1xi1> to vector<8x32xi1>
    %137 = arith.select %136, %131, %90 : vector<8x32xi1>, vector<8x32xf32>
    %138 = vector.shape_cast %134 : vector<8x1xi1> to vector<8x1xi1>
    %139 = vector.broadcast %138 : vector<8x1xi1> to vector<8x32xi1>
    %140 = arith.select %139, %129, %93 : vector<8x32xi1>, vector<8x32xf32>
    %cst_32 = arith.constant 0.000000e+00 : f32
    %141 = vector.shape_cast %134 : vector<8x1xi1> to vector<8x1xi1>
    %142 = vector.broadcast %141 : vector<8x1xi1> to vector<8x32xi1>
    %143 = vector.broadcast %cst_32 : f32 to vector<8x32xf32>
    %144 = arith.select %142, %131, %143 : vector<8x32xi1>, vector<8x32xf32>
    %145 = arith.index_cast %c2_i32 : i32 to index
    %c0_33 = arith.constant 0 : index
    %c0_34 = arith.constant 0 : index
    %146 = vector.load %arg7[%145, %c0_33, %c0_34] : memref<8x8x32xf32, #tpu.memory_space<vmem>>, vector<1x8x32xf32>
    %147 = vector.shape_cast %146 : vector<1x8x32xf32> to vector<8x32xf32>
    %148 = vector.shape_cast %144 : vector<8x32xf32> to vector<1x8x32xf32>
    tpu.vector_store %arg7[%145, %c0_33, %c0_34], %148 {strides = array<i32>} : memref<8x8x32xf32, #tpu.memory_space<vmem>>, vector<1x8x32xf32>,
    %c3_i32 = arith.constant 3 : i32
    %149 = arith.index_cast %c3_i32 : i32 to index
    %c0_35 = arith.constant 0 : index
    %c0_36 = arith.constant 0 : index
    %150 = vector.load %arg2[%149, %c0_35, %c0_36] : memref<8x8x128xf32, #tpu.memory_space<vmem>>, vector<1x8x128xf32>
    %151 = vector.shape_cast %150 : vector<1x8x128xf32> to vector<8x128xf32>
    %cst_37 = arith.constant dense<0.000000e+00> : vector<8x128xf32>
    %152 = tpu.matmul %137, %4, %cst_37 {dimension_numbers = #tpu.dot_dimension_numbers<[1], [0], [0], [1], [0, 0, 1, 1], [], []>} : vector<8x32xf32>, vector<32x128xf32>, vector<8x128xf32> -> vector<8x128xf32>
    %153 = arith.addf %151, %152 : vector<8x128xf32>
    %154 = vector.extract_strided_slice %153 {offsets = [0, 0], sizes = [8, 32], strides = [1, 1]} : vector<8x128xf32> to vector<8x32xf32>
    %155 = arith.negf %154 : vector<8x32xf32>
    %156 = math.exp %155 : vector<8x32xf32>
    %cst_38 = arith.constant 1.000000e+00 : f32
    %157 = vector.broadcast %cst_38 : f32 to vector<8x32xf32>
    %158 = arith.addf %157, %156 : vector<8x32xf32>
    %159 = arith.divf %157, %158 : vector<8x32xf32>
    %160 = vector.extract_strided_slice %153 {offsets = [0, 32], sizes = [8, 32], strides = [1, 1]} : vector<8x128xf32> to vector<8x32xf32>
    %161 = arith.negf %160 : vector<8x32xf32>
    %162 = math.exp %161 : vector<8x32xf32>
    %cst_39 = arith.constant 1.000000e+00 : f32
    %163 = vector.broadcast %cst_39 : f32 to vector<8x32xf32>
    %164 = arith.addf %163, %162 : vector<8x32xf32>
    %165 = arith.divf %163, %164 : vector<8x32xf32>
    %166 = vector.extract_strided_slice %153 {offsets = [0, 64], sizes = [8, 32], strides = [1, 1]} : vector<8x128xf32> to vector<8x32xf32>
    %167 = math.tanh %166 : vector<8x32xf32>
    %168 = vector.extract_strided_slice %153 {offsets = [0, 96], sizes = [8, 32], strides = [1, 1]} : vector<8x128xf32> to vector<8x32xf32>
    %169 = arith.negf %168 : vector<8x32xf32>
    %170 = math.exp %169 : vector<8x32xf32>
    %cst_40 = arith.constant 1.000000e+00 : f32
    %171 = vector.broadcast %cst_40 : f32 to vector<8x32xf32>
    %172 = arith.addf %171, %170 : vector<8x32xf32>
    %173 = arith.divf %171, %172 : vector<8x32xf32>
    %174 = arith.mulf %165, %140 : vector<8x32xf32>
    %175 = arith.mulf %159, %167 : vector<8x32xf32>
    %176 = arith.addf %174, %175 : vector<8x32xf32>
    %177 = math.tanh %176 : vector<8x32xf32>
    %178 = arith.mulf %173, %177 : vector<8x32xf32>
    %179 = arith.addi %5, %c3_i32 : i32
    %180 = vector.broadcast %179 : i32 to vector<8x1xi32>
    %181 = arith.cmpi sgt, %3, %180 : vector<8x1xi32>
    %182 = vector.shape_cast %181 : vector<8x1xi1> to vector<8x1xi1>
    %183 = vector.broadcast %182 : vector<8x1xi1> to vector<8x32xi1>
    %184 = arith.select %183, %178, %137 : vector<8x32xi1>, vector<8x32xf32>
    %185 = vector.shape_cast %181 : vector<8x1xi1> to vector<8x1xi1>
    %186 = vector.broadcast %185 : vector<8x1xi1> to vector<8x32xi1>
    %187 = arith.select %186, %176, %140 : vector<8x32xi1>, vector<8x32xf32>
    %cst_41 = arith.constant 0.000000e+00 : f32
    %188 = vector.shape_cast %181 : vector<8x1xi1> to vector<8x1xi1>
    %189 = vector.broadcast %188 : vector<8x1xi1> to vector<8x32xi1>
    %190 = vector.broadcast %cst_41 : f32 to vector<8x32xf32>
    %191 = arith.select %189, %178, %190 : vector<8x32xi1>, vector<8x32xf32>
    %192 = arith.index_cast %c3_i32 : i32 to index
    %c0_42 = arith.constant 0 : index
    %c0_43 = arith.constant 0 : index
    %193 = vector.load %arg7[%192, %c0_42, %c0_43] : memref<8x8x32xf32, #tpu.memory_space<vmem>>, vector<1x8x32xf32>
    %194 = vector.shape_cast %193 : vector<1x8x32xf32> to vector<8x32xf32>
    %195 = vector.shape_cast %191 : vector<8x32xf32> to vector<1x8x32xf32>
    tpu.vector_store %arg7[%192, %c0_42, %c0_43], %195 {strides = array<i32>} : memref<8x8x32xf32, #tpu.memory_space<vmem>>, vector<1x8x32xf32>,
    %c4_i32 = arith.constant 4 : i32
    %196 = arith.index_cast %c4_i32 : i32 to index
    %c0_44 = arith.constant 0 : index
    %c0_45 = arith.constant 0 : index
    %197 = vector.load %arg2[%196, %c0_44, %c0_45] : memref<8x8x128xf32, #tpu.memory_space<vmem>>, vector<1x8x128xf32>
    %198 = vector.shape_cast %197 : vector<1x8x128xf32> to vector<8x128xf32>
    %cst_46 = arith.constant dense<0.000000e+00> : vector<8x128xf32>
    %199 = tpu.matmul %184, %4, %cst_46 {dimension_numbers = #tpu.dot_dimension_numbers<[1], [0], [0], [1], [0, 0, 1, 1], [], []>} : vector<8x32xf32>, vector<32x128xf32>, vector<8x128xf32> -> vector<8x128xf32>
    %200 = arith.addf %198, %199 : vector<8x128xf32>
    %201 = vector.extract_strided_slice %200 {offsets = [0, 0], sizes = [8, 32], strides = [1, 1]} : vector<8x128xf32> to vector<8x32xf32>
    %202 = arith.negf %201 : vector<8x32xf32>
    %203 = math.exp %202 : vector<8x32xf32>
    %cst_47 = arith.constant 1.000000e+00 : f32
    %204 = vector.broadcast %cst_47 : f32 to vector<8x32xf32>
    %205 = arith.addf %204, %203 : vector<8x32xf32>
    %206 = arith.divf %204, %205 : vector<8x32xf32>
    %207 = vector.extract_strided_slice %200 {offsets = [0, 32], sizes = [8, 32], strides = [1, 1]} : vector<8x128xf32> to vector<8x32xf32>
    %208 = arith.negf %207 : vector<8x32xf32>
    %209 = math.exp %208 : vector<8x32xf32>
    %cst_48 = arith.constant 1.000000e+00 : f32
    %210 = vector.broadcast %cst_48 : f32 to vector<8x32xf32>
    %211 = arith.addf %210, %209 : vector<8x32xf32>
    %212 = arith.divf %210, %211 : vector<8x32xf32>
    %213 = vector.extract_strided_slice %200 {offsets = [0, 64], sizes = [8, 32], strides = [1, 1]} : vector<8x128xf32> to vector<8x32xf32>
    %214 = math.tanh %213 : vector<8x32xf32>
    %215 = vector.extract_strided_slice %200 {offsets = [0, 96], sizes = [8, 32], strides = [1, 1]} : vector<8x128xf32> to vector<8x32xf32>
    %216 = arith.negf %215 : vector<8x32xf32>
    %217 = math.exp %216 : vector<8x32xf32>
    %cst_49 = arith.constant 1.000000e+00 : f32
    %218 = vector.broadcast %cst_49 : f32 to vector<8x32xf32>
    %219 = arith.addf %218, %217 : vector<8x32xf32>
    %220 = arith.divf %218, %219 : vector<8x32xf32>
    %221 = arith.mulf %212, %187 : vector<8x32xf32>
    %222 = arith.mulf %206, %214 : vector<8x32xf32>
    %223 = arith.addf %221, %222 : vector<8x32xf32>
    %224 = math.tanh %223 : vector<8x32xf32>
    %225 = arith.mulf %220, %224 : vector<8x32xf32>
    %226 = arith.addi %5, %c4_i32 : i32
    %227 = vector.broadcast %226 : i32 to vector<8x1xi32>
    %228 = arith.cmpi sgt, %3, %227 : vector<8x1xi32>
    %229 = vector.shape_cast %228 : vector<8x1xi1> to vector<8x1xi1>
    %230 = vector.broadcast %229 : vector<8x1xi1> to vector<8x32xi1>
    %231 = arith.select %230, %225, %184 : vector<8x32xi1>, vector<8x32xf32>
    %232 = vector.shape_cast %228 : vector<8x1xi1> to vector<8x1xi1>
    %233 = vector.broadcast %232 : vector<8x1xi1> to vector<8x32xi1>
    %234 = arith.select %233, %223, %187 : vector<8x32xi1>, vector<8x32xf32>
    %cst_50 = arith.constant 0.000000e+00 : f32
    %235 = vector.shape_cast %228 : vector<8x1xi1> to vector<8x1xi1>
    %236 = vector.broadcast %235 : vector<8x1xi1> to vector<8x32xi1>
    %237 = vector.broadcast %cst_50 : f32 to vector<8x32xf32>
    %238 = arith.select %236, %225, %237 : vector<8x32xi1>, vector<8x32xf32>
    %239 = arith.index_cast %c4_i32 : i32 to index
    %c0_51 = arith.constant 0 : index
    %c0_52 = arith.constant 0 : index
    %240 = vector.load %arg7[%239, %c0_51, %c0_52] : memref<8x8x32xf32, #tpu.memory_space<vmem>>, vector<1x8x32xf32>
    %241 = vector.shape_cast %240 : vector<1x8x32xf32> to vector<8x32xf32>
    %242 = vector.shape_cast %238 : vector<8x32xf32> to vector<1x8x32xf32>
    tpu.vector_store %arg7[%239, %c0_51, %c0_52], %242 {strides = array<i32>} : memref<8x8x32xf32, #tpu.memory_space<vmem>>, vector<1x8x32xf32>,
    %c5_i32 = arith.constant 5 : i32
    %243 = arith.index_cast %c5_i32 : i32 to index
    %c0_53 = arith.constant 0 : index
    %c0_54 = arith.constant 0 : index
    %244 = vector.load %arg2[%243, %c0_53, %c0_54] : memref<8x8x128xf32, #tpu.memory_space<vmem>>, vector<1x8x128xf32>
    %245 = vector.shape_cast %244 : vector<1x8x128xf32> to vector<8x128xf32>
    %cst_55 = arith.constant dense<0.000000e+00> : vector<8x128xf32>
    %246 = tpu.matmul %231, %4, %cst_55 {dimension_numbers = #tpu.dot_dimension_numbers<[1], [0], [0], [1], [0, 0, 1, 1], [], []>} : vector<8x32xf32>, vector<32x128xf32>, vector<8x128xf32> -> vector<8x128xf32>
    %247 = arith.addf %245, %246 : vector<8x128xf32>
    %248 = vector.extract_strided_slice %247 {offsets = [0, 0], sizes = [8, 32], strides = [1, 1]} : vector<8x128xf32> to vector<8x32xf32>
    %249 = arith.negf %248 : vector<8x32xf32>
    %250 = math.exp %249 : vector<8x32xf32>
    %cst_56 = arith.constant 1.000000e+00 : f32
    %251 = vector.broadcast %cst_56 : f32 to vector<8x32xf32>
    %252 = arith.addf %251, %250 : vector<8x32xf32>
    %253 = arith.divf %251, %252 : vector<8x32xf32>
    %254 = vector.extract_strided_slice %247 {offsets = [0, 32], sizes = [8, 32], strides = [1, 1]} : vector<8x128xf32> to vector<8x32xf32>
    %255 = arith.negf %254 : vector<8x32xf32>
    %256 = math.exp %255 : vector<8x32xf32>
    %cst_57 = arith.constant 1.000000e+00 : f32
    %257 = vector.broadcast %cst_57 : f32 to vector<8x32xf32>
    %258 = arith.addf %257, %256 : vector<8x32xf32>
    %259 = arith.divf %257, %258 : vector<8x32xf32>
    %260 = vector.extract_strided_slice %247 {offsets = [0, 64], sizes = [8, 32], strides = [1, 1]} : vector<8x128xf32> to vector<8x32xf32>
    %261 = math.tanh %260 : vector<8x32xf32>
    %262 = vector.extract_strided_slice %247 {offsets = [0, 96], sizes = [8, 32], strides = [1, 1]} : vector<8x128xf32> to vector<8x32xf32>
    %263 = arith.negf %262 : vector<8x32xf32>
    %264 = math.exp %263 : vector<8x32xf32>
    %cst_58 = arith.constant 1.000000e+00 : f32
    %265 = vector.broadcast %cst_58 : f32 to vector<8x32xf32>
    %266 = arith.addf %265, %264 : vector<8x32xf32>
    %267 = arith.divf %265, %266 : vector<8x32xf32>
    %268 = arith.mulf %259, %234 : vector<8x32xf32>
    %269 = arith.mulf %253, %261 : vector<8x32xf32>
    %270 = arith.addf %268, %269 : vector<8x32xf32>
    %271 = math.tanh %270 : vector<8x32xf32>
    %272 = arith.mulf %267, %271 : vector<8x32xf32>
    %273 = arith.addi %5, %c5_i32 : i32
    %274 = vector.broadcast %273 : i32 to vector<8x1xi32>
    %275 = arith.cmpi sgt, %3, %274 : vector<8x1xi32>
    %276 = vector.shape_cast %275 : vector<8x1xi1> to vector<8x1xi1>
    %277 = vector.broadcast %276 : vector<8x1xi1> to vector<8x32xi1>
    %278 = arith.select %277, %272, %231 : vector<8x32xi1>, vector<8x32xf32>
    %279 = vector.shape_cast %275 : vector<8x1xi1> to vector<8x1xi1>
    %280 = vector.broadcast %279 : vector<8x1xi1> to vector<8x32xi1>
    %281 = arith.select %280, %270, %234 : vector<8x32xi1>, vector<8x32xf32>
    %cst_59 = arith.constant 0.000000e+00 : f32
    %282 = vector.shape_cast %275 : vector<8x1xi1> to vector<8x1xi1>
    %283 = vector.broadcast %282 : vector<8x1xi1> to vector<8x32xi1>
    %284 = vector.broadcast %cst_59 : f32 to vector<8x32xf32>
    %285 = arith.select %283, %272, %284 : vector<8x32xi1>, vector<8x32xf32>
    %286 = arith.index_cast %c5_i32 : i32 to index
    %c0_60 = arith.constant 0 : index
    %c0_61 = arith.constant 0 : index
    %287 = vector.load %arg7[%286, %c0_60, %c0_61] : memref<8x8x32xf32, #tpu.memory_space<vmem>>, vector<1x8x32xf32>
    %288 = vector.shape_cast %287 : vector<1x8x32xf32> to vector<8x32xf32>
    %289 = vector.shape_cast %285 : vector<8x32xf32> to vector<1x8x32xf32>
    tpu.vector_store %arg7[%286, %c0_60, %c0_61], %289 {strides = array<i32>} : memref<8x8x32xf32, #tpu.memory_space<vmem>>, vector<1x8x32xf32>,
    %c6_i32 = arith.constant 6 : i32
    %290 = arith.index_cast %c6_i32 : i32 to index
    %c0_62 = arith.constant 0 : index
    %c0_63 = arith.constant 0 : index
    %291 = vector.load %arg2[%290, %c0_62, %c0_63] : memref<8x8x128xf32, #tpu.memory_space<vmem>>, vector<1x8x128xf32>
    %292 = vector.shape_cast %291 : vector<1x8x128xf32> to vector<8x128xf32>
    %cst_64 = arith.constant dense<0.000000e+00> : vector<8x128xf32>
    %293 = tpu.matmul %278, %4, %cst_64 {dimension_numbers = #tpu.dot_dimension_numbers<[1], [0], [0], [1], [0, 0, 1, 1], [], []>} : vector<8x32xf32>, vector<32x128xf32>, vector<8x128xf32> -> vector<8x128xf32>
    %294 = arith.addf %292, %293 : vector<8x128xf32>
    %295 = vector.extract_strided_slice %294 {offsets = [0, 0], sizes = [8, 32], strides = [1, 1]} : vector<8x128xf32> to vector<8x32xf32>
    %296 = arith.negf %295 : vector<8x32xf32>
    %297 = math.exp %296 : vector<8x32xf32>
    %cst_65 = arith.constant 1.000000e+00 : f32
    %298 = vector.broadcast %cst_65 : f32 to vector<8x32xf32>
    %299 = arith.addf %298, %297 : vector<8x32xf32>
    %300 = arith.divf %298, %299 : vector<8x32xf32>
    %301 = vector.extract_strided_slice %294 {offsets = [0, 32], sizes = [8, 32], strides = [1, 1]} : vector<8x128xf32> to vector<8x32xf32>
    %302 = arith.negf %301 : vector<8x32xf32>
    %303 = math.exp %302 : vector<8x32xf32>
    %cst_66 = arith.constant 1.000000e+00 : f32
    %304 = vector.broadcast %cst_66 : f32 to vector<8x32xf32>
    %305 = arith.addf %304, %303 : vector<8x32xf32>
    %306 = arith.divf %304, %305 : vector<8x32xf32>
    %307 = vector.extract_strided_slice %294 {offsets = [0, 64], sizes = [8, 32], strides = [1, 1]} : vector<8x128xf32> to vector<8x32xf32>
    %308 = math.tanh %307 : vector<8x32xf32>
    %309 = vector.extract_strided_slice %294 {offsets = [0, 96], sizes = [8, 32], strides = [1, 1]} : vector<8x128xf32> to vector<8x32xf32>
    %310 = arith.negf %309 : vector<8x32xf32>
    %311 = math.exp %310 : vector<8x32xf32>
    %cst_67 = arith.constant 1.000000e+00 : f32
    %312 = vector.broadcast %cst_67 : f32 to vector<8x32xf32>
    %313 = arith.addf %312, %311 : vector<8x32xf32>
    %314 = arith.divf %312, %313 : vector<8x32xf32>
    %315 = arith.mulf %306, %281 : vector<8x32xf32>
    %316 = arith.mulf %300, %308 : vector<8x32xf32>
    %317 = arith.addf %315, %316 : vector<8x32xf32>
    %318 = math.tanh %317 : vector<8x32xf32>
    %319 = arith.mulf %314, %318 : vector<8x32xf32>
    %320 = arith.addi %5, %c6_i32 : i32
    %321 = vector.broadcast %320 : i32 to vector<8x1xi32>
    %322 = arith.cmpi sgt, %3, %321 : vector<8x1xi32>
    %323 = vector.shape_cast %322 : vector<8x1xi1> to vector<8x1xi1>
    %324 = vector.broadcast %323 : vector<8x1xi1> to vector<8x32xi1>
    %325 = arith.select %324, %319, %278 : vector<8x32xi1>, vector<8x32xf32>
    %326 = vector.shape_cast %322 : vector<8x1xi1> to vector<8x1xi1>
    %327 = vector.broadcast %326 : vector<8x1xi1> to vector<8x32xi1>
    %328 = arith.select %327, %317, %281 : vector<8x32xi1>, vector<8x32xf32>
    %cst_68 = arith.constant 0.000000e+00 : f32
    %329 = vector.shape_cast %322 : vector<8x1xi1> to vector<8x1xi1>
    %330 = vector.broadcast %329 : vector<8x1xi1> to vector<8x32xi1>
    %331 = vector.broadcast %cst_68 : f32 to vector<8x32xf32>
    %332 = arith.select %330, %319, %331 : vector<8x32xi1>, vector<8x32xf32>
    %333 = arith.index_cast %c6_i32 : i32 to index
    %c0_69 = arith.constant 0 : index
    %c0_70 = arith.constant 0 : index
    %334 = vector.load %arg7[%333, %c0_69, %c0_70] : memref<8x8x32xf32, #tpu.memory_space<vmem>>, vector<1x8x32xf32>
    %335 = vector.shape_cast %334 : vector<1x8x32xf32> to vector<8x32xf32>
    %336 = vector.shape_cast %332 : vector<8x32xf32> to vector<1x8x32xf32>
    tpu.vector_store %arg7[%333, %c0_69, %c0_70], %336 {strides = array<i32>} : memref<8x8x32xf32, #tpu.memory_space<vmem>>, vector<1x8x32xf32>,
    %c7_i32 = arith.constant 7 : i32
    %337 = arith.index_cast %c7_i32 : i32 to index
    %c0_71 = arith.constant 0 : index
    %c0_72 = arith.constant 0 : index
    %338 = vector.load %arg2[%337, %c0_71, %c0_72] : memref<8x8x128xf32, #tpu.memory_space<vmem>>, vector<1x8x128xf32>
    %339 = vector.shape_cast %338 : vector<1x8x128xf32> to vector<8x128xf32>
    %cst_73 = arith.constant dense<0.000000e+00> : vector<8x128xf32>
    %340 = tpu.matmul %325, %4, %cst_73 {dimension_numbers = #tpu.dot_dimension_numbers<[1], [0], [0], [1], [0, 0, 1, 1], [], []>} : vector<8x32xf32>, vector<32x128xf32>, vector<8x128xf32> -> vector<8x128xf32>
    %341 = arith.addf %339, %340 : vector<8x128xf32>
    %342 = vector.extract_strided_slice %341 {offsets = [0, 0], sizes = [8, 32], strides = [1, 1]} : vector<8x128xf32> to vector<8x32xf32>
    %343 = arith.negf %342 : vector<8x32xf32>
    %344 = math.exp %343 : vector<8x32xf32>
    %cst_74 = arith.constant 1.000000e+00 : f32
    %345 = vector.broadcast %cst_74 : f32 to vector<8x32xf32>
    %346 = arith.addf %345, %344 : vector<8x32xf32>
    %347 = arith.divf %345, %346 : vector<8x32xf32>
    %348 = vector.extract_strided_slice %341 {offsets = [0, 32], sizes = [8, 32], strides = [1, 1]} : vector<8x128xf32> to vector<8x32xf32>
    %349 = arith.negf %348 : vector<8x32xf32>
    %350 = math.exp %349 : vector<8x32xf32>
    %cst_75 = arith.constant 1.000000e+00 : f32
    %351 = vector.broadcast %cst_75 : f32 to vector<8x32xf32>
    %352 = arith.addf %351, %350 : vector<8x32xf32>
    %353 = arith.divf %351, %352 : vector<8x32xf32>
    %354 = vector.extract_strided_slice %341 {offsets = [0, 64], sizes = [8, 32], strides = [1, 1]} : vector<8x128xf32> to vector<8x32xf32>
    %355 = math.tanh %354 : vector<8x32xf32>
    %356 = vector.extract_strided_slice %341 {offsets = [0, 96], sizes = [8, 32], strides = [1, 1]} : vector<8x128xf32> to vector<8x32xf32>
    %357 = arith.negf %356 : vector<8x32xf32>
    %358 = math.exp %357 : vector<8x32xf32>
    %cst_76 = arith.constant 1.000000e+00 : f32
    %359 = vector.broadcast %cst_76 : f32 to vector<8x32xf32>
    %360 = arith.addf %359, %358 : vector<8x32xf32>
    %361 = arith.divf %359, %360 : vector<8x32xf32>
    %362 = arith.mulf %353, %328 : vector<8x32xf32>
    %363 = arith.mulf %347, %355 : vector<8x32xf32>
    %364 = arith.addf %362, %363 : vector<8x32xf32>
    %365 = math.tanh %364 : vector<8x32xf32>
    %366 = arith.mulf %361, %365 : vector<8x32xf32>
    %367 = arith.addi %5, %c7_i32 : i32
    %368 = vector.broadcast %367 : i32 to vector<8x1xi32>
    %369 = arith.cmpi sgt, %3, %368 : vector<8x1xi32>
    %370 = vector.shape_cast %369 : vector<8x1xi1> to vector<8x1xi1>
    %371 = vector.broadcast %370 : vector<8x1xi1> to vector<8x32xi1>
    %372 = arith.select %371, %366, %325 : vector<8x32xi1>, vector<8x32xf32>
    %373 = vector.shape_cast %369 : vector<8x1xi1> to vector<8x1xi1>
    %374 = vector.broadcast %373 : vector<8x1xi1> to vector<8x32xi1>
    %375 = arith.select %374, %364, %328 : vector<8x32xi1>, vector<8x32xf32>
    %cst_77 = arith.constant 0.000000e+00 : f32
    %376 = vector.shape_cast %369 : vector<8x1xi1> to vector<8x1xi1>
    %377 = vector.broadcast %376 : vector<8x1xi1> to vector<8x32xi1>
    %378 = vector.broadcast %cst_77 : f32 to vector<8x32xf32>
    %379 = arith.select %377, %366, %378 : vector<8x32xi1>, vector<8x32xf32>
    %380 = arith.index_cast %c7_i32 : i32 to index
    %c0_78 = arith.constant 0 : index
    %c0_79 = arith.constant 0 : index
    %381 = vector.load %arg7[%380, %c0_78, %c0_79] : memref<8x8x32xf32, #tpu.memory_space<vmem>>, vector<1x8x32xf32>
    %382 = vector.shape_cast %381 : vector<1x8x32xf32> to vector<8x32xf32>
    %383 = vector.shape_cast %379 : vector<8x32xf32> to vector<1x8x32xf32>
    tpu.vector_store %arg7[%380, %c0_78, %c0_79], %383 {strides = array<i32>} : memref<8x8x32xf32, #tpu.memory_space<vmem>>, vector<1x8x32xf32>,
    %c8_i32_80 = arith.constant 8 : i32
    %c0_81 = arith.constant 0 : index
    %c0_82 = arith.constant 0 : index
    %384 = vector.load %arg9[%c0_81, %c0_82] : memref<8x32xf32, #tpu.memory_space<vmem>>, vector<8x32xf32>
    tpu.vector_store %arg9[%c0_81, %c0_82], %372 {strides = array<i32>} : memref<8x32xf32, #tpu.memory_space<vmem>>, vector<8x32xf32>,
    %c0_83 = arith.constant 0 : index
    %c0_84 = arith.constant 0 : index
    %385 = vector.load %arg10[%c0_83, %c0_84] : memref<8x32xf32, #tpu.memory_space<vmem>>, vector<8x32xf32>
    tpu.vector_store %arg10[%c0_83, %c0_84], %375 {strides = array<i32>} : memref<8x32xf32, #tpu.memory_space<vmem>>, vector<8x32xf32>,
    %c0_i32_85 = arith.constant 0 : i32
    %386 = arith.cmpi eq, %arg1, %c0_i32_85 : i32
    %387 = arith.extui %386 : i1 to i32
    %c0_i32_86 = arith.constant 0 : i32
    %388 = arith.cmpi ne, %387, %c0_i32_86 : i32
    scf.if %388 {
      %c0_87 = arith.constant 0 : index
      %c0_88 = arith.constant 0 : index
      %389 = vector.load %arg8[%c0_87, %c0_88] : memref<8x32xf32, #tpu.memory_space<vmem>>, vector<8x32xf32>
      tpu.vector_store %arg8[%c0_87, %c0_88], %372 {strides = array<i32>} : memref<8x32xf32, #tpu.memory_space<vmem>>, vector<8x32xf32>,
    } else {
    }
    return
  }
  func.func @transform_0(%arg0: i32, %arg1: i32) -> (i32, i32, i32) {
    %c0_i32 = arith.constant 0 : i32
    %c0_i32_0 = arith.constant 0 : i32
    return %arg1, %arg0, %c0_i32 : i32, i32, i32
  }
  func.func @transform_1(%arg0: i32, %arg1: i32) -> (i32, i32) {
    %c0_i32 = arith.constant 0 : i32
    %c0_i32_0 = arith.constant 0 : i32
    %c0_i32_1 = arith.constant 0 : i32
    return %c0_i32, %c0_i32_0 : i32, i32
  }
  func.func @transform_2(%arg0: i32, %arg1: i32) -> (i32, i32) {
    %c0_i32 = arith.constant 0 : i32
    %c0_i32_0 = arith.constant 0 : i32
    %c0_i32_1 = arith.constant 0 : i32
    return %c0_i32, %c0_i32_0 : i32, i32
  }
  func.func @transform_3(%arg0: i32, %arg1: i32) -> (i32, i32) {
    %c0_i32 = arith.constant 0 : i32
    %c0_i32_0 = arith.constant 0 : i32
    %c0_i32_1 = arith.constant 0 : i32
    return %c0_i32, %c0_i32_0 : i32, i32
  }
  func.func @transform_4(%arg0: i32, %arg1: i32) -> (i32, i32) {
    %c0_i32 = arith.constant 0 : i32
    %c0_i32_0 = arith.constant 0 : i32
    return %arg0, %c0_i32 : i32, i32
  }
  func.func @transform_5(%arg0: i32, %arg1: i32) -> (i32, i32, i32) {
    %c0_i32 = arith.constant 0 : i32
    %c0_i32_0 = arith.constant 0 : i32
    return %arg1, %arg0, %c0_i32 : i32, i32, i32
  }
  func.func @transform_6(%arg0: i32, %arg1: i32) -> (i32, i32) {
    %c0_i32 = arith.constant 0 : i32
    %c0_i32_0 = arith.constant 0 : i32
    return %arg0, %c0_i32 : i32, i32
  }
}

</mosaic_0001>

<llo_original>
// kernel: tpu_custom_call.1
$region0: #{tpu_custom_call.1}
  #allocation0 [shape = 'u32[]', space=smem, size = 0x4, offset = 0x4, fixed_abs, tag = 'smem constant byte address 0x4 - core index']
  #allocation1 [shape = 'u32[144,128]{1,0:T(1,128)}', space=vmem, size = 0x12000, scoped, tag = 'internal scratch']
  #allocation2 [shape = 'f32[8,32]{1,0:T(8,128)}', space=vmem, size = 0x1000, scoped, tag = 'scratch operand']
  #allocation3 [shape = 'f32[8,32]{1,0:T(8,128)}', space=vmem, size = 0x1000, scoped, tag = 'scratch operand']
  %s0 = inlined_call_operand.hbm [shape: f32[8,8,128], index: 0, kind: input, shape index: {}]
  %s1 = inlined_call_operand.hbm [shape: f32[32,128], index: 1, kind: input, shape index: {}]
  %s2 = inlined_call_operand.vmem [shape: f32[1,32], index: 2, kind: input, shape index: {}]
  %s3 = inlined_call_operand.vmem [shape: f32[1,32], index: 3, kind: input, shape index: {}]
  %s4 = inlined_call_operand.vmem [shape: s32[8,1], index: 4, kind: input, shape index: {}]
  %s5 = inlined_call_operand.hbm [shape: f32[8,8,32], index: 5, kind: output, shape index: {0}]
  %s6 = inlined_call_operand.hbm [shape: f32[8,32], index: 6, kind: output, shape index: {1}]
  %7 = xla_tuple %s5, %s6
  %s8 = sld [smem:[#allocation0]]
  $region54: #{tpu_custom_call.1} parent=0
    _
  %s10 = ssub.s32 1, %s8
  %s11 = scalar_select 0, %s10, %s8
  $region1: #{tpu_custom_call.1} parent=0
    #allocation4 [shape = 'u8[32768]{0}', space=vmem, size = 0x8000, scoped, tag = 'input window, operand 0, single buffered']
    #allocation5 [shape = 's32[1]{0}', space=sflag, size = 0x4, scoped, tag = 'scoped memory for tpu_custom_call.1']
    #allocation6 [shape = 's32[1]{0}', space=sflag, size = 0x4, scoped, tag = 'scoped memory for tpu_custom_call.1']
    #allocation7 [shape = 'u8[16384]{0}', space=vmem, size = 0x4000, scoped, tag = 'input window, operand 1, single buffered']
    #allocation8 [shape = 's32[1]{0}', space=sflag, size = 0x4, scoped, tag = 'scoped memory for tpu_custom_call.1']
    #allocation9 [shape = 'u8[32768]{0}', space=vmem, size = 0x8000, scoped, tag = 'output window, operand 0, single buffered']
    #allocation10 [shape = 'u8[4096]{0}', space=vmem, size = 0x1000, scoped, tag = 'output window, operand 1, single buffered']
    #allocation11 [shape = 's32[1]{0}', space=sflag, size = 0x4, scoped, tag = 'scoped memory for tpu_custom_call.1']
    %12 = vsyncpa [#allocation5], 0
    %13 = vsyncpa [#allocation8], 0
    %14 = vsyncpa [#allocation6], 0
    %15 = vsyncpa [#allocation11], 0
    // Predicated region
    $region2: #{tpu_custom_call.1} parent=1 // pred_check
      _
    $region3: #{tpu_custom_call.1} parent=1 // pred_check_branch
      %17 = sbr.rel (0) target = $region5
    $region4: #{tpu_custom_call.1} parent=1 // pred_region
      %s19 = ssub.s32 1024, 1024
      %20 = vsyncadd [#allocation5], %s19
      %s21 = sshll.u32 [#allocation4], 4
      %s22 = int_to_ptr.vmem [resolvable:$true] %s21
      %27 = dma.hbm_to_vmem [thread:$0]  %s0, 1024, %s22, [#allocation5], 128, 128, 8
    $region5: #{tpu_custom_call.1} parent=1 // pred_fallthru
      _
    // Predicated region
    $region6: #{tpu_custom_call.1} parent=1 // pred_check
      _
    $region7: #{tpu_custom_call.1} parent=1 // pred_check_branch
      %29 = sbr.rel (0) target = $region9
    $region8: #{tpu_custom_call.1} parent=1 // pred_region
      %s31 = ssub.s32 512, 512
      %32 = vsyncadd [#allocation8], %s31
      %s33 = sshll.u32 [#allocation7], 4
      %s34 = int_to_ptr.vmem [resolvable:$true] %s33
      %39 = dma.hbm_to_vmem [thread:$0]  %s1, 512, %s34, [#allocation8], 128, 128, 8
    $region9: #{tpu_custom_call.1} parent=1 // pred_fallthru
      _
    // Predicated region
    $region10: #{tpu_custom_call.1} parent=1 // pred_check
      _
    $region11: #{tpu_custom_call.1} parent=1 // pred_check_branch
      %41 = sbr.rel (0) target = $region13
    $region12: #{tpu_custom_call.1} parent=1 // pred_region
      _
    $region13: #{tpu_custom_call.1} parent=1 // pred_fallthru
      _
    // Predicated region
    $region14: #{tpu_custom_call.1} parent=1 // pred_check
      _
    $region15: #{tpu_custom_call.1} parent=1 // pred_check_branch
      %43 = sbr.rel (0) target = $region17
    $region16: #{tpu_custom_call.1} parent=1 // pred_region
      _
    $region17: #{tpu_custom_call.1} parent=1 // pred_fallthru
      _
    // Predicated region
    $region18: #{tpu_custom_call.1} parent=1 // pred_check
      _
    $region19: #{tpu_custom_call.1} parent=1 // pred_check_branch
      %45 = sbr.rel (0) target = $region21
    $region20: #{tpu_custom_call.1} parent=1 // pred_region
      _
    $region21: #{tpu_custom_call.1} parent=1 // pred_fallthru
      _
    // Predicated region
    $region22: #{tpu_custom_call.1} parent=1 // pred_check
      _
    $region23: #{tpu_custom_call.1} parent=1 // pred_check_branch
      %47 = sbr.rel (0) target = $region25
    $region24: #{tpu_custom_call.1} parent=1 // pred_region
      %48 = dma.done [#allocation5], 1024
    $region25: #{tpu_custom_call.1} parent=1 // pred_fallthru
      _
    // Predicated region
    $region26: #{tpu_custom_call.1} parent=1 // pred_check
      _
    $region27: #{tpu_custom_call.1} parent=1 // pred_check_branch
      %50 = sbr.rel (0) target = $region29
    $region28: #{tpu_custom_call.1} parent=1 // pred_region
      %51 = dma.done [#allocation8], 512
    $region29: #{tpu_custom_call.1} parent=1 // pred_fallthru
      _
    %p52 = scmp.eq.s32.totalorder 0, 0
    // Predicated region
    $region30: #{tpu_custom_call.1} parent=1 // pred_check
      %p53 = pneg %p52
    $region31: #{tpu_custom_call.1} parent=1 // pred_check_branch
      %55 = sbr.rel (%p53) target = $region33
    $region32: #{tpu_custom_call.1} parent=1 // pred_region
      %v56 = vld [vmem:[%s2] sm:$0x1]
      %v58 = vlaneseq
      %v59 = vshrl.u32 %v58, 7
      %v60 = vsub.s32 0, %v59
      %v61 = vrot.slane %v56, %v60
      %vm63 = vcmask 261120
      %64 = vst.msk [vmem:[#allocation2] sm:$0xff] %vm63, %v61
      %v65 = vld [vmem:[%s3] sm:$0x1]
      %v67 = vlaneseq
      %v68 = vshrl.u32 %v67, 7
      %v69 = vsub.s32 0, %v68
      %v70 = vrot.slane %v65, %v69
      %72 = vst.msk [vmem:[#allocation3] sm:$0xff] %vm63, %v70
    $region33: #{tpu_custom_call.1} parent=1 // pred_fallthru
      _
    %v73 = vld [vmem:[%s4] sm:$0xff]
    %v74 = vld [vmem:[#allocation7] sm:$0xff]
    %v75 = vld [vmem:[#allocation7 + $0x8] sm:$0xff]
    %v76 = vld [vmem:[#allocation7 + $0x10] sm:$0xff]
    %v77 = vld [vmem:[#allocation7 + $0x18] sm:$0xff]
    %s78 = smul.u32 0, 8
    %v79 = vld [vmem:[#allocation2] sm:$0xff]
    %v80 = vld [vmem:[#allocation3] sm:$0xff]
    %v81 = vld [vmem:[#allocation4] sm:$0xff]
    %vm82 = vcmask 261120
    %v84 = vsel %vm82, %v79, 0
    %86 = vmatprep.subr.mxu0 0.0
    %87 = vmatpush1.msra.mxu0 %v74
    %88 = vmatprep.subr.mxu0 0.0
    %89 = vmatpush1.msra.mxu0 %v75
    %90 = vmatprep.subr.mxu0 0.0
    %91 = vmatpush1.msra.mxu0 %v76
    %92 = vmatprep.subr.mxu0 0.0
    %93 = vmatpush1.msra.mxu0 %v77
    %94 = vmatprep.subr.mxu0 0.0
    %95 = vmatpush1.msra.mxu0 0.0
    %96 = vmatprep.subr.mxu0 0.0
    %97 = vmatpush1.msra.mxu0 0.0
    %98 = vmatprep.subr.mxu0 0.0
    %99 = vmatpush1.msra.mxu0 0.0
    %100 = vmatprep.subr.mxu0 0.0
    %101 = vmatpush1.msra.mxu0 0.0
    %102 = vmatprep.subr.mxu0 0.0
    %103 = vmatpush1.msra.mxu0 0.0
    %104 = vmatprep.subr.mxu0 0.0
    %105 = vmatpush1.msra.mxu0 0.0
    %106 = vmatprep.subr.mxu0 0.0
    %107 = vmatpush1.msra.mxu0 0.0
    %108 = vmatprep.subr.mxu0 0.0
    %109 = vmatpush1.msra.mxu0 0.0
    %110 = vmatprep.subr.mxu0 0.0
    %111 = vmatpush1.msra.mxu0 0.0
    %112 = vmatprep.subr.mxu0 0.0
    %113 = vmatpush1.msra.mxu0 0.0
    %114 = vmatprep.subr.mxu0 0.0
    %115 = vmatpush1.msra.mxu0 0.0
    %116 = vmatprep.subr.mxu0 0.0
    %117 = vmatpush1.msra.mxu0 0.0
    %118 = vmatprep.subr.mxu0 0.0
    %119 = vmatpush1.msra.mxu0 0.0
    %120 = vmatprep.subr.mxu0 0.0
    %121 = vmatpush1.msra.mxu0 0.0
    %122 = vmatprep.subr.mxu0 0.0
    %123 = vmatpush1.msra.mxu0 0.0
    %124 = vmatprep.subr.mxu0 0.0
    %125 = vmatpush1.msra.mxu0 0.0
    %126 = vmatprep.subr.mxu0 0.0
    %127 = vmatpush1.msra.mxu0 0.0
    %128 = vmatprep.subr.mxu0 0.0
    %129 = vmatpush1.msra.mxu0 0.0
    %130 = vmatprep.subr.mxu0 0.0
    %131 = vmatpush1.msra.mxu0 0.0
    %132 = vmatprep.subr.mxu0 0.0
    %133 = vmatpush1.msra.mxu0 0.0
    %134 = vmatprep.subr.mxu0 0.0
    %135 = vmatpush1.msra.mxu0 0.0
    %136 = vmatprep.subr.mxu0 0.0
    %137 = vmatpush1.msra.mxu0 0.0
    %138 = vmatprep.subr.mxu0 0.0
    %139 = vmatpush1.msra.mxu0 0.0
    %140 = vmatprep.subr.mxu0 0.0
    %141 = vmatpush1.msra.mxu0 0.0
    %142 = vmatprep.subr.mxu0 0.0
    %143 = vmatpush1.msra.mxu0 0.0
    %144 = vmatprep.subr.mxu0 0.0
    %145 = vmatpush1.msra.mxu0 0.0
    %146 = vmatprep.subr.mxu0 0.0
    %147 = vmatpush1.msra.mxu0 0.0
    %148 = vmatprep.subr.mxu0 0.0
    %149 = vmatpush1.msra.mxu0 0.0
    %150 = vmatprep.mubr.f32.mxu0 0.0
    %151 = vmatmul.mubr.f32.gmra.mrb[0].mxu0 %v84
    %v152 = vpop.f32.mrb[0].mxu0
    %v153 = vadd.f32 0.0, %v152
    %v154 = vpop.f32.mrb[0].mxu0
    %155 = vdwg.mxu0
    %v156 = vadd.f32 %v81, %v153
    %v157 = vxor.u32 %v156, 2147483648
    %v158 = vmul.f32 %v157, 1.442695
    %v159 = vpow.pop %v158
    %v160 = vadd.f32 %v159, 1.0
    %v161 = vrcp.pop %v160
    %v162 = vmul.f32 1.0, %v161
    %v163 = vtanh.pop %v156
    %165 = vrot.lane.b32.xlu0 %v80, 32
    %v166 = vpop.permute.xlu0 %165
    %v168 = vmul.f32 %v162, %v166
    %170 = vrot.lane.b32.xlu0 %v163, 64
    %v171 = vpop.permute.xlu0 %170
    %v173 = vmul.f32 %v162, %v171
    %175 = vrot.lane.b32.xlu0 %v173, 32
    %v176 = vpop.permute.xlu0 %175
    %v178 = vadd.f32 %v168, %v176
    %v179 = vtanh.pop %v178
    %181 = vrot.lane.b32.xlu0 %v179, 64
    %v182 = vpop.permute.xlu0 %181
    %v184 = vmul.f32 %v162, %v182
    %v185 = vstv %s78
    %vm186 = vcmp.gt.s32.totalorder %v73, %v185
    %v187 = vsel %vm186, 1, 0
    %188 = vset.pattern.permute.xlu0 0
    %189 = vperm.xlu0 %188, %v187
    %v190 = vpop.permute.xlu0 %189
    %vm191 = vcmp.eq.s32.totalorder %v190, 1
    %192 = vrot.lane.b32.xlu0 %v79, 96
    %v193 = vpop.permute.xlu0 %192
    %v195 = vsel %vm191, %v184, %v193
    %v196 = vsel %vm191, %v178, %v166
    %v197 = vsel %vm191, %v184, 0.0
    %199 = vrot.lane.b32.xlu0 %v197, 32
    %v200 = vpop.permute.xlu0 %199
    %202 = vst.msk [vmem:[#allocation9] sm:$0xff] %vm82, %v200
    %s203 = scalar_lea.vmem [#allocation4], 8
    %v204 = vld [vmem:[%s203] sm:$0xff]
    %206 = vrot.lane.b32.xlu0 %v195, 32
    %v207 = vpop.permute.xlu0 %206
    %v208 = vsel %vm82, %v207, 0
    %210 = vmatprep.subr.mxu0 0.0
    %211 = vmatpush1.msra.mxu0 %v74
    %212 = vmatprep.subr.mxu0 0.0
    %213 = vmatpush1.msra.mxu0 %v75
    %214 = vmatprep.subr.mxu0 0.0
    %215 = vmatpush1.msra.mxu0 %v76
    %216 = vmatprep.subr.mxu0 0.0
    %217 = vmatpush1.msra.mxu0 %v77
    %218 = vmatprep.subr.mxu0 0.0
    %219 = vmatpush1.msra.mxu0 0.0
    %220 = vmatprep.subr.mxu0 0.0
    %221 = vmatpush1.msra.mxu0 0.0
    %222 = vmatprep.subr.mxu0 0.0
    %223 = vmatpush1.msra.mxu0 0.0
    %224 = vmatprep.subr.mxu0 0.0
    %225 = vmatpush1.msra.mxu0 0.0
    %226 = vmatprep.subr.mxu0 0.0
    %227 = vmatpush1.msra.mxu0 0.0
    %228 = vmatprep.subr.mxu0 0.0
    %229 = vmatpush1.msra.mxu0 0.0
    %230 = vmatprep.subr.mxu0 0.0
    %231 = vmatpush1.msra.mxu0 0.0
    %232 = vmatprep.subr.mxu0 0.0
    %233 = vmatpush1.msra.mxu0 0.0
    %234 = vmatprep.subr.mxu0 0.0
    %235 = vmatpush1.msra.mxu0 0.0
    %236 = vmatprep.subr.mxu0 0.0
    %237 = vmatpush1.msra.mxu0 0.0
    %238 = vmatprep.subr.mxu0 0.0
    %239 = vmatpush1.msra.mxu0 0.0
    %240 = vmatprep.subr.mxu0 0.0
    %241 = vmatpush1.msra.mxu0 0.0
    %242 = vmatprep.subr.mxu0 0.0
    %243 = vmatpush1.msra.mxu0 0.0
    %244 = vmatprep.subr.mxu0 0.0
    %245 = vmatpush1.msra.mxu0 0.0
    %246 = vmatprep.subr.mxu0 0.0
    %247 = vmatpush1.msra.mxu0 0.0
    %248 = vmatprep.subr.mxu0 0.0
    %249 = vmatpush1.msra.mxu0 0.0
    %250 = vmatprep.subr.mxu0 0.0
    %251 = vmatpush1.msra.mxu0 0.0
    %252 = vmatprep.subr.mxu0 0.0
    %253 = vmatpush1.msra.mxu0 0.0
    %254 = vmatprep.subr.mxu0 0.0
    %255 = vmatpush1.msra.mxu0 0.0
    %256 = vmatprep.subr.mxu0 0.0
    %257 = vmatpush1.msra.mxu0 0.0
    %258 = vmatprep.subr.mxu0 0.0
    %259 = vmatpush1.msra.mxu0 0.0
    %260 = vmatprep.subr.mxu0 0.0
    %261 = vmatpush1.msra.mxu0 0.0
    %262 = vmatprep.subr.mxu0 0.0
    %263 = vmatpush1.msra.mxu0 0.0
    %264 = vmatprep.subr.mxu0 0.0
    %265 = vmatpush1.msra.mxu0 0.0
    %266 = vmatprep.subr.mxu0 0.0
    %267 = vmatpush1.msra.mxu0 0.0
    %268 = vmatprep.subr.mxu0 0.0
    %269 = vmatpush1.msra.mxu0 0.0
    %270 = vmatprep.subr.mxu0 0.0
    %271 = vmatpush1.msra.mxu0 0.0
    %272 = vmatprep.subr.mxu0 0.0
    %273 = vmatpush1.msra.mxu0 0.0
    %274 = vmatprep.mubr.f32.mxu0 0.0
    %275 = vmatmul.mubr.f32.gmra.mrb[0].mxu0 %v208
    %v276 = vpop.f32.mrb[0].mxu0
    %v277 = vadd.f32 0.0, %v276
    %v278 = vpop.f32.mrb[0].mxu0
    %279 = vdwg.mxu0
    %v280 = vadd.f32 %v204, %v277
    %v281 = vxor.u32 %v280, 2147483648
    %v282 = vmul.f32 %v281, 1.442695
    %v283 = vpow.pop %v282
    %v284 = vadd.f32 %v283, 1.0
    %v285 = vrcp.pop %v284
    %v286 = vmul.f32 1.0, %v285
    %v287 = vtanh.pop %v280
    %v288 = vmul.f32 %v286, %v196
    %290 = vrot.lane.b32.xlu0 %v287, 64
    %v291 = vpop.permute.xlu0 %290
    %v293 = vmul.f32 %v286, %v291
    %295 = vrot.lane.b32.xlu0 %v293, 32
    %v296 = vpop.permute.xlu0 %295
    %v298 = vadd.f32 %v288, %v296
    %v299 = vtanh.pop %v298
    %301 = vrot.lane.b32.xlu0 %v299, 64
    %v302 = vpop.permute.xlu0 %301
    %v304 = vmul.f32 %v286, %v302
    %s305 = sadd.s32 %s78, 1
    %v306 = vstv %s305
    %vm307 = vcmp.gt.s32.totalorder %v73, %v306
    %v308 = vsel %vm307, 1, 0
    %309 = vset.pattern.permute.xlu0 0
    %310 = vperm.xlu0 %309, %v308
    %v311 = vpop.permute.xlu0 %310
    %vm312 = vcmp.eq.s32.totalorder %v311, 1
    %v313 = vsel %vm312, %v304, %v195
    %v314 = vsel %vm312, %v298, %v196
    %v315 = vsel %vm312, %v304, 0.0
    %317 = vrot.lane.b32.xlu0 %v315, 32
    %v318 = vpop.permute.xlu0 %317
    %s320 = scalar_lea.vmem [#allocation9], 8
    %321 = vst.msk [vmem:[%s320] sm:$0xff] %vm82, %v318
    %s322 = scalar_lea.vmem [#allocation4], 16
    %v323 = vld [vmem:[%s322] sm:$0xff]
    %325 = vrot.lane.b32.xlu0 %v313, 32
    %v326 = vpop.permute.xlu0 %325
    %v327 = vsel %vm82, %v326, 0
    %329 = vmatprep.subr.mxu0 0.0
    %330 = vmatpush1.msra.mxu0 %v74
    %331 = vmatprep.subr.mxu0 0.0
    %332 = vmatpush1.msra.mxu0 %v75
    %333 = vmatprep.subr.mxu0 0.0
    %334 = vmatpush1.msra.mxu0 %v76
    %335 = vmatprep.subr.mxu0 0.0
    %336 = vmatpush1.msra.mxu0 %v77
    %337 = vmatprep.subr.mxu0 0.0
    %338 = vmatpush1.msra.mxu0 0.0
    %339 = vmatprep.subr.mxu0 0.0
    %340 = vmatpush1.msra.mxu0 0.0
    %341 = vmatprep.subr.mxu0 0.0
    %342 = vmatpush1.msra.mxu0 0.0
    %343 = vmatprep.subr.mxu0 0.0
    %344 = vmatpush1.msra.mxu0 0.0
    %345 = vmatprep.subr.mxu0 0.0
    %346 = vmatpush1.msra.mxu0 0.0
    %347 = vmatprep.subr.mxu0 0.0
    %348 = vmatpush1.msra.mxu0 0.0
    %349 = vmatprep.subr.mxu0 0.0
    %350 = vmatpush1.msra.mxu0 0.0
    %351 = vmatprep.subr.mxu0 0.0
    %352 = vmatpush1.msra.mxu0 0.0
    %353 = vmatprep.subr.mxu0 0.0
    %354 = vmatpush1.msra.mxu0 0.0
    %355 = vmatprep.subr.mxu0 0.0
    %356 = vmatpush1.msra.mxu0 0.0
    %357 = vmatprep.subr.mxu0 0.0
    %358 = vmatpush1.msra.mxu0 0.0
    %359 = vmatprep.subr.mxu0 0.0
    %360 = vmatpush1.msra.mxu0 0.0
    %361 = vmatprep.subr.mxu0 0.0
    %362 = vmatpush1.msra.mxu0 0.0
    %363 = vmatprep.subr.mxu0 0.0
    %364 = vmatpush1.msra.mxu0 0.0
    %365 = vmatprep.subr.mxu0 0.0
    %366 = vmatpush1.msra.mxu0 0.0
    %367 = vmatprep.subr.mxu0 0.0
    %368 = vmatpush1.msra.mxu0 0.0
    %369 = vmatprep.subr.mxu0 0.0
    %370 = vmatpush1.msra.mxu0 0.0
    %371 = vmatprep.subr.mxu0 0.0
    %372 = vmatpush1.msra.mxu0 0.0
    %373 = vmatprep.subr.mxu0 0.0
    %374 = vmatpush1.msra.mxu0 0.0
    %375 = vmatprep.subr.mxu0 0.0
    %376 = vmatpush1.msra.mxu0 0.0
    %377 = vmatprep.subr.mxu0 0.0
    %378 = vmatpush1.msra.mxu0 0.0
    %379 = vmatprep.subr.mxu0 0.0
    %380 = vmatpush1.msra.mxu0 0.0
    %381 = vmatprep.subr.mxu0 0.0
    %382 = vmatpush1.msra.mxu0 0.0
    %383 = vmatprep.subr.mxu0 0.0
    %384 = vmatpush1.msra.mxu0 0.0
    %385 = vmatprep.subr.mxu0 0.0
    %386 = vmatpush1.msra.mxu0 0.0
    %387 = vmatprep.subr.mxu0 0.0
    %388 = vmatpush1.msra.mxu0 0.0
    %389 = vmatprep.subr.mxu0 0.0
    %390 = vmatpush1.msra.mxu0 0.0
    %391 = vmatprep.subr.mxu0 0.0
    %392 = vmatpush1.msra.mxu0 0.0
    %393 = vmatprep.mubr.f32.mxu0 0.0
    %394 = vmatmul.mubr.f32.gmra.mrb[0].mxu0 %v327
    %v395 = vpop.f32.mrb[0].mxu0
    %v396 = vadd.f32 0.0, %v395
    %v397 = vpop.f32.mrb[0].mxu0
    %398 = vdwg.mxu0
    %v399 = vadd.f32 %v323, %v396
    %v400 = vxor.u32 %v399, 2147483648
    %v401 = vmul.f32 %v400, 1.442695
    %v402 = vpow.pop %v401
    %v403 = vadd.f32 %v402, 1.0
    %v404 = vrcp.pop %v403
    %v405 = vmul.f32 1.0, %v404
    %v406 = vtanh.pop %v399
    %v407 = vmul.f32 %v405, %v314
    %409 = vrot.lane.b32.xlu0 %v406, 64
    %v410 = vpop.permute.xlu0 %409
    %v412 = vmul.f32 %v405, %v410
    %414 = vrot.lane.b32.xlu0 %v412, 32
    %v415 = vpop.permute.xlu0 %414
    %v417 = vadd.f32 %v407, %v415
    %v418 = vtanh.pop %v417
    %420 = vrot.lane.b32.xlu0 %v418, 64
    %v421 = vpop.permute.xlu0 %420
    %v423 = vmul.f32 %v405, %v421
    %s424 = sadd.s32 %s78, 2
    %v425 = vstv %s424
    %vm426 = vcmp.gt.s32.totalorder %v73, %v425
    %v427 = vsel %vm426, 1, 0
    %428 = vset.pattern.permute.xlu0 0
    %429 = vperm.xlu0 %428, %v427
    %v430 = vpop.permute.xlu0 %429
    %vm431 = vcmp.eq.s32.totalorder %v430, 1
    %v432 = vsel %vm431, %v423, %v313
    %v433 = vsel %vm431, %v417, %v314
    %v434 = vsel %vm431, %v423, 0.0
    %436 = vrot.lane.b32.xlu0 %v434, 32
    %v437 = vpop.permute.xlu0 %436
    %s439 = scalar_lea.vmem [#allocation9], 16
    %440 = vst.msk [vmem:[%s439] sm:$0xff] %vm82, %v437
    %s441 = scalar_lea.vmem [#allocation4], 24
    %v442 = vld [vmem:[%s441] sm:$0xff]
    %444 = vrot.lane.b32.xlu0 %v432, 32
    %v445 = vpop.permute.xlu0 %444
    %v446 = vsel %vm82, %v445, 0
    %448 = vmatprep.subr.mxu0 0.0
    %449 = vmatpush1.msra.mxu0 %v74
    %450 = vmatprep.subr.mxu0 0.0
    %451 = vmatpush1.msra.mxu0 %v75
    %452 = vmatprep.subr.mxu0 0.0
    %453 = vmatpush1.msra.mxu0 %v76
    %454 = vmatprep.subr.mxu0 0.0
    %455 = vmatpush1.msra.mxu0 %v77
    %456 = vmatprep.subr.mxu0 0.0
    %457 = vmatpush1.msra.mxu0 0.0
    %458 = vmatprep.subr.mxu0 0.0
    %459 = vmatpush1.msra.mxu0 0.0
    %460 = vmatprep.subr.mxu0 0.0
    %461 = vmatpush1.msra.mxu0 0.0
    %462 = vmatprep.subr.mxu0 0.0
    %463 = vmatpush1.msra.mxu0 0.0
    %464 = vmatprep.subr.mxu0 0.0
    %465 = vmatpush1.msra.mxu0 0.0
    %466 = vmatprep.subr.mxu0 0.0
    %467 = vmatpush1.msra.mxu0 0.0
    %468 = vmatprep.subr.mxu0 0.0
    %469 = vmatpush1.msra.mxu0 0.0
    %470 = vmatprep.subr.mxu0 0.0
    %471 = vmatpush1.msra.mxu0 0.0
    %472 = vmatprep.subr.mxu0 0.0
    %473 = vmatpush1.msra.mxu0 0.0
    %474 = vmatprep.subr.mxu0 0.0
    %475 = vmatpush1.msra.mxu0 0.0
    %476 = vmatprep.subr.mxu0 0.0
    %477 = vmatpush1.msra.mxu0 0.0
    %478 = vmatprep.subr.mxu0 0.0
    %479 = vmatpush1.msra.mxu0 0.0
    %480 = vmatprep.subr.mxu0 0.0
    %481 = vmatpush1.msra.mxu0 0.0
    %482 = vmatprep.subr.mxu0 0.0
    %483 = vmatpush1.msra.mxu0 0.0
    %484 = vmatprep.subr.mxu0 0.0
    %485 = vmatpush1.msra.mxu0 0.0
    %486 = vmatprep.subr.mxu0 0.0
    %487 = vmatpush1.msra.mxu0 0.0
    %488 = vmatprep.subr.mxu0 0.0
    %489 = vmatpush1.msra.mxu0 0.0
    %490 = vmatprep.subr.mxu0 0.0
    %491 = vmatpush1.msra.mxu0 0.0
    %492 = vmatprep.subr.mxu0 0.0
    %493 = vmatpush1.msra.mxu0 0.0
    %494 = vmatprep.subr.mxu0 0.0
    %495 = vmatpush1.msra.mxu0 0.0
    %496 = vmatprep.subr.mxu0 0.0
    %497 = vmatpush1.msra.mxu0 0.0
    %498 = vmatprep.subr.mxu0 0.0
    %499 = vmatpush1.msra.mxu0 0.0
    %500 = vmatprep.subr.mxu0 0.0
    %501 = vmatpush1.msra.mxu0 0.0
    %502 = vmatprep.subr.mxu0 0.0
    %503 = vmatpush1.msra.mxu0 0.0
    %504 = vmatprep.subr.mxu0 0.0
    %505 = vmatpush1.msra.mxu0 0.0
    %506 = vmatprep.subr.mxu0 0.0
    %507 = vmatpush1.msra.mxu0 0.0
    %508 = vmatprep.subr.mxu0 0.0
    %509 = vmatpush1.msra.mxu0 0.0
    %510 = vmatprep.subr.mxu0 0.0
    %511 = vmatpush1.msra.mxu0 0.0
    %512 = vmatprep.mubr.f32.mxu0 0.0
    %513 = vmatmul.mubr.f32.gmra.mrb[0].mxu0 %v446
    %v514 = vpop.f32.mrb[0].mxu0
    %v515 = vadd.f32 0.0, %v514
    %v516 = vpop.f32.mrb[0].mxu0
    %517 = vdwg.mxu0
    %v518 = vadd.f32 %v442, %v515
    %v519 = vxor.u32 %v518, 2147483648
    %v520 = vmul.f32 %v519, 1.442695
    %v521 = vpow.pop %v520
    %v522 = vadd.f32 %v521, 1.0
    %v523 = vrcp.pop %v522
    %v524 = vmul.f32 1.0, %v523
    %v525 = vtanh.pop %v518
    %v526 = vmul.f32 %v524, %v433
    %528 = vrot.lane.b32.xlu0 %v525, 64
    %v529 = vpop.permute.xlu0 %528
    %v531 = vmul.f32 %v524, %v529
    %533 = vrot.lane.b32.xlu0 %v531, 32
    %v534 = vpop.permute.xlu0 %533
    %v536 = vadd.f32 %v526, %v534
    %v537 = vtanh.pop %v536
    %539 = vrot.lane.b32.xlu0 %v537, 64
    %v540 = vpop.permute.xlu0 %539
    %v542 = vmul.f32 %v524, %v540
    %s543 = sadd.s32 %s78, 3
    %v544 = vstv %s543
    %vm545 = vcmp.gt.s32.totalorder %v73, %v544
    %v546 = vsel %vm545, 1, 0
    %547 = vset.pattern.permute.xlu0 0
    %548 = vperm.xlu0 %547, %v546
    %v549 = vpop.permute.xlu0 %548
    %vm550 = vcmp.eq.s32.totalorder %v549, 1
    %v551 = vsel %vm550, %v542, %v432
    %v552 = vsel %vm550, %v536, %v433
    %v553 = vsel %vm550, %v542, 0.0
    %555 = vrot.lane.b32.xlu0 %v553, 32
    %v556 = vpop.permute.xlu0 %555
    %s558 = scalar_lea.vmem [#allocation9], 24
    %559 = vst.msk [vmem:[%s558] sm:$0xff] %vm82, %v556
    %s560 = scalar_lea.vmem [#allocation4], 32
    %v561 = vld [vmem:[%s560] sm:$0xff]
    %563 = vrot.lane.b32.xlu0 %v551, 32
    %v564 = vpop.permute.xlu0 %563
    %v565 = vsel %vm82, %v564, 0
    %567 = vmatprep.subr.mxu0 0.0
    %568 = vmatpush1.msra.mxu0 %v74
    %569 = vmatprep.subr.mxu0 0.0
    %570 = vmatpush1.msra.mxu0 %v75
    %571 = vmatprep.subr.mxu0 0.0
    %572 = vmatpush1.msra.mxu0 %v76
    %573 = vmatprep.subr.mxu0 0.0
    %574 = vmatpush1.msra.mxu0 %v77
    %575 = vmatprep.subr.mxu0 0.0
    %576 = vmatpush1.msra.mxu0 0.0
    %577 = vmatprep.subr.mxu0 0.0
    %578 = vmatpush1.msra.mxu0 0.0
    %579 = vmatprep.subr.mxu0 0.0
    %580 = vmatpush1.msra.mxu0 0.0
    %581 = vmatprep.subr.mxu0 0.0
    %582 = vmatpush1.msra.mxu0 0.0
    %583 = vmatprep.subr.mxu0 0.0
    %584 = vmatpush1.msra.mxu0 0.0
    %585 = vmatprep.subr.mxu0 0.0
    %586 = vmatpush1.msra.mxu0 0.0
    %587 = vmatprep.subr.mxu0 0.0
    %588 = vmatpush1.msra.mxu0 0.0
    %589 = vmatprep.subr.mxu0 0.0
    %590 = vmatpush1.msra.mxu0 0.0
    %591 = vmatprep.subr.mxu0 0.0
    %592 = vmatpush1.msra.mxu0 0.0
    %593 = vmatprep.subr.mxu0 0.0
    %594 = vmatpush1.msra.mxu0 0.0
    %595 = vmatprep.subr.mxu0 0.0
    %596 = vmatpush1.msra.mxu0 0.0
    %597 = vmatprep.subr.mxu0 0.0
    %598 = vmatpush1.msra.mxu0 0.0
    %599 = vmatprep.subr.mxu0 0.0
    %600 = vmatpush1.msra.mxu0 0.0
    %601 = vmatprep.subr.mxu0 0.0
    %602 = vmatpush1.msra.mxu0 0.0
    %603 = vmatprep.subr.mxu0 0.0
    %604 = vmatpush1.msra.mxu0 0.0
    %605 = vmatprep.subr.mxu0 0.0
    %606 = vmatpush1.msra.mxu0 0.0
    %607 = vmatprep.subr.mxu0 0.0
    %608 = vmatpush1.msra.mxu0 0.0
    %609 = vmatprep.subr.mxu0 0.0
    %610 = vmatpush1.msra.mxu0 0.0
    %611 = vmatprep.subr.mxu0 0.0
    %612 = vmatpush1.msra.mxu0 0.0
    %613 = vmatprep.subr.mxu0 0.0
    %614 = vmatpush1.msra.mxu0 0.0
    %615 = vmatprep.subr.mxu0 0.0
    %616 = vmatpush1.msra.mxu0 0.0
    %617 = vmatprep.subr.mxu0 0.0
    %618 = vmatpush1.msra.mxu0 0.0
    %619 = vmatprep.subr.mxu0 0.0
    %620 = vmatpush1.msra.mxu0 0.0
    %621 = vmatprep.subr.mxu0 0.0
    %622 = vmatpush1.msra.mxu0 0.0
    %623 = vmatprep.subr.mxu0 0.0
    %624 = vmatpush1.msra.mxu0 0.0
    %625 = vmatprep.subr.mxu0 0.0
    %626 = vmatpush1.msra.mxu0 0.0
    %627 = vmatprep.subr.mxu0 0.0
    %628 = vmatpush1.msra.mxu0 0.0
    %629 = vmatprep.subr.mxu0 0.0
    %630 = vmatpush1.msra.mxu0 0.0
    %631 = vmatprep.mubr.f32.mxu0 0.0
    %632 = vmatmul.mubr.f32.gmra.mrb[0].mxu0 %v565
    %v633 = vpop.f32.mrb[0].mxu0
    %v634 = vadd.f32 0.0, %v633
    %v635 = vpop.f32.mrb[0].mxu0
    %636 = vdwg.mxu0
    %v637 = vadd.f32 %v561, %v634
    %v638 = vxor.u32 %v637, 2147483648
    %v639 = vmul.f32 %v638, 1.442695
    %v640 = vpow.pop %v639
    %v641 = vadd.f32 %v640, 1.0
    %v642 = vrcp.pop %v641
    %v643 = vmul.f32 1.0, %v642
    %v644 = vtanh.pop %v637
    %v645 = vmul.f32 %v643, %v552
    %647 = vrot.lane.b32.xlu0 %v644, 64
    %v648 = vpop.permute.xlu0 %647
    %v650 = vmul.f32 %v643, %v648
    %652 = vrot.lane.b32.xlu0 %v650, 32
    %v653 = vpop.permute.xlu0 %652
    %v655 = vadd.f32 %v645, %v653
    %v656 = vtanh.pop %v655
    %658 = vrot.lane.b32.xlu0 %v656, 64
    %v659 = vpop.permute.xlu0 %658
    %v661 = vmul.f32 %v643, %v659
    %s662 = sadd.s32 %s78, 4
    %v663 = vstv %s662
    %vm664 = vcmp.gt.s32.totalorder %v73, %v663
    %v665 = vsel %vm664, 1, 0
    %666 = vset.pattern.permute.xlu0 0
    %667 = vperm.xlu0 %666, %v665
    %v668 = vpop.permute.xlu0 %667
    %vm669 = vcmp.eq.s32.totalorder %v668, 1
    %v670 = vsel %vm669, %v661, %v551
    %v671 = vsel %vm669, %v655, %v552
    %v672 = vsel %vm669, %v661, 0.0
    %674 = vrot.lane.b32.xlu0 %v672, 32
    %v675 = vpop.permute.xlu0 %674
    %s677 = scalar_lea.vmem [#allocation9], 32
    %678 = vst.msk [vmem:[%s677] sm:$0xff] %vm82, %v675
    %s679 = scalar_lea.vmem [#allocation4], 40
    %v680 = vld [vmem:[%s679] sm:$0xff]
    %682 = vrot.lane.b32.xlu0 %v670, 32
    %v683 = vpop.permute.xlu0 %682
    %v684 = vsel %vm82, %v683, 0
    %686 = vmatprep.subr.mxu0 0.0
    %687 = vmatpush1.msra.mxu0 %v74
    %688 = vmatprep.subr.mxu0 0.0
    %689 = vmatpush1.msra.mxu0 %v75
    %690 = vmatprep.subr.mxu0 0.0
    %691 = vmatpush1.msra.mxu0 %v76
    %692 = vmatprep.subr.mxu0 0.0
    %693 = vmatpush1.msra.mxu0 %v77
    %694 = vmatprep.subr.mxu0 0.0
    %695 = vmatpush1.msra.mxu0 0.0
    %696 = vmatprep.subr.mxu0 0.0
    %697 = vmatpush1.msra.mxu0 0.0
    %698 = vmatprep.subr.mxu0 0.0
    %699 = vmatpush1.msra.mxu0 0.0
    %700 = vmatprep.subr.mxu0 0.0
    %701 = vmatpush1.msra.mxu0 0.0
    %702 = vmatprep.subr.mxu0 0.0
    %703 = vmatpush1.msra.mxu0 0.0
    %704 = vmatprep.subr.mxu0 0.0
    %705 = vmatpush1.msra.mxu0 0.0
    %706 = vmatprep.subr.mxu0 0.0
    %707 = vmatpush1.msra.mxu0 0.0
    %708 = vmatprep.subr.mxu0 0.0
    %709 = vmatpush1.msra.mxu0 0.0
    %710 = vmatprep.subr.mxu0 0.0
    %711 = vmatpush1.msra.mxu0 0.0
    %712 = vmatprep.subr.mxu0 0.0
    %713 = vmatpush1.msra.mxu0 0.0
    %714 = vmatprep.subr.mxu0 0.0
    %715 = vmatpush1.msra.mxu0 0.0
    %716 = vmatprep.subr.mxu0 0.0
    %717 = vmatpush1.msra.mxu0 0.0
    %718 = vmatprep.subr.mxu0 0.0
    %719 = vmatpush1.msra.mxu0 0.0
    %720 = vmatprep.subr.mxu0 0.0
    %721 = vmatpush1.msra.mxu0 0.0
    %722 = vmatprep.subr.mxu0 0.0
    %723 = vmatpush1.msra.mxu0 0.0
    %724 = vmatprep.subr.mxu0 0.0
    %725 = vmatpush1.msra.mxu0 0.0
    %726 = vmatprep.subr.mxu0 0.0
    %727 = vmatpush1.msra.mxu0 0.0
    %728 = vmatprep.subr.mxu0 0.0
    %729 = vmatpush1.msra.mxu0 0.0
    %730 = vmatprep.subr.mxu0 0.0
    %731 = vmatpush1.msra.mxu0 0.0
    %732 = vmatprep.subr.mxu0 0.0
    %733 = vmatpush1.msra.mxu0 0.0
    %734 = vmatprep.subr.mxu0 0.0
    %735 = vmatpush1.msra.mxu0 0.0
    %736 = vmatprep.subr.mxu0 0.0
    %737 = vmatpush1.msra.mxu0 0.0
    %738 = vmatprep.subr.mxu0 0.0
    %739 = vmatpush1.msra.mxu0 0.0
    %740 = vmatprep.subr.mxu0 0.0
    %741 = vmatpush1.msra.mxu0 0.0
    %742 = vmatprep.subr.mxu0 0.0
    %743 = vmatpush1.msra.mxu0 0.0
    %744 = vmatprep.subr.mxu0 0.0
    %745 = vmatpush1.msra.mxu0 0.0
    %746 = vmatprep.subr.mxu0 0.0
    %747 = vmatpush1.msra.mxu0 0.0
    %748 = vmatprep.subr.mxu0 0.0
    %749 = vmatpush1.msra.mxu0 0.0
    %750 = vmatprep.mubr.f32.mxu0 0.0
    %751 = vmatmul.mubr.f32.gmra.mrb[0].mxu0 %v684
    %v752 = vpop.f32.mrb[0].mxu0
    %v753 = vadd.f32 0.0, %v752
    %v754 = vpop.f32.mrb[0].mxu0
    %755 = vdwg.mxu0
    %v756 = vadd.f32 %v680, %v753
    %v757 = vxor.u32 %v756, 2147483648
    %v758 = vmul.f32 %v757, 1.442695
    %v759 = vpow.pop %v758
    %v760 = vadd.f32 %v759, 1.0
    %v761 = vrcp.pop %v760
    %v762 = vmul.f32 1.0, %v761
    %v763 = vtanh.pop %v756
    %v764 = vmul.f32 %v762, %v671
    %766 = vrot.lane.b32.xlu0 %v763, 64
    %v767 = vpop.permute.xlu0 %766
    %v769 = vmul.f32 %v762, %v767
    %771 = vrot.lane.b32.xlu0 %v769, 32
    %v772 = vpop.permute.xlu0 %771
    %v774 = vadd.f32 %v764, %v772
    %v775 = vtanh.pop %v774
    %777 = vrot.lane.b32.xlu0 %v775, 64
    %v778 = vpop.permute.xlu0 %777
    %v780 = vmul.f32 %v762, %v778
    %s781 = sadd.s32 %s78, 5
    %v782 = vstv %s781
    %vm783 = vcmp.gt.s32.totalorder %v73, %v782
    %v784 = vsel %vm783, 1, 0
    %785 = vset.pattern.permute.xlu0 0
    %786 = vperm.xlu0 %785, %v784
    %v787 = vpop.permute.xlu0 %786
    %vm788 = vcmp.eq.s32.totalorder %v787, 1
    %v789 = vsel %vm788, %v780, %v670
    %v790 = vsel %vm788, %v774, %v671
    %v791 = vsel %vm788, %v780, 0.0
    %793 = vrot.lane.b32.xlu0 %v791, 32
    %v794 = vpop.permute.xlu0 %793
    %s796 = scalar_lea.vmem [#allocation9], 40
    %797 = vst.msk [vmem:[%s796] sm:$0xff] %vm82, %v794
    %s798 = scalar_lea.vmem [#allocation4], 48
    %v799 = vld [vmem:[%s798] sm:$0xff]
    %801 = vrot.lane.b32.xlu0 %v789, 32
    %v802 = vpop.permute.xlu0 %801
    %v803 = vsel %vm82, %v802, 0
    %805 = vmatprep.subr.mxu0 0.0
    %806 = vmatpush1.msra.mxu0 %v74
    %807 = vmatprep.subr.mxu0 0.0
    %808 = vmatpush1.msra.mxu0 %v75
    %809 = vmatprep.subr.mxu0 0.0
    %810 = vmatpush1.msra.mxu0 %v76
    %811 = vmatprep.subr.mxu0 0.0
    %812 = vmatpush1.msra.mxu0 %v77
    %813 = vmatprep.subr.mxu0 0.0
    %814 = vmatpush1.msra.mxu0 0.0
    %815 = vmatprep.subr.mxu0 0.0
    %816 = vmatpush1.msra.mxu0 0.0
    %817 = vmatprep.subr.mxu0 0.0
    %818 = vmatpush1.msra.mxu0 0.0
    %819 = vmatprep.subr.mxu0 0.0
    %820 = vmatpush1.msra.mxu0 0.0
    %821 = vmatprep.subr.mxu0 0.0
    %822 = vmatpush1.msra.mxu0 0.0
    %823 = vmatprep.subr.mxu0 0.0
    %824 = vmatpush1.msra.mxu0 0.0
    %825 = vmatprep.subr.mxu0 0.0
    %826 = vmatpush1.msra.mxu0 0.0
    %827 = vmatprep.subr.mxu0 0.0
    %828 = vmatpush1.msra.mxu0 0.0
    %829 = vmatprep.subr.mxu0 0.0
    %830 = vmatpush1.msra.mxu0 0.0
    %831 = vmatprep.subr.mxu0 0.0
    %832 = vmatpush1.msra.mxu0 0.0
    %833 = vmatprep.subr.mxu0 0.0
    %834 = vmatpush1.msra.mxu0 0.0
    %835 = vmatprep.subr.mxu0 0.0
    %836 = vmatpush1.msra.mxu0 0.0
    %837 = vmatprep.subr.mxu0 0.0
    %838 = vmatpush1.msra.mxu0 0.0
    %839 = vmatprep.subr.mxu0 0.0
    %840 = vmatpush1.msra.mxu0 0.0
    %841 = vmatprep.subr.mxu0 0.0
    %842 = vmatpush1.msra.mxu0 0.0
    %843 = vmatprep.subr.mxu0 0.0
    %844 = vmatpush1.msra.mxu0 0.0
    %845 = vmatprep.subr.mxu0 0.0
    %846 = vmatpush1.msra.mxu0 0.0
    %847 = vmatprep.subr.mxu0 0.0
    %848 = vmatpush1.msra.mxu0 0.0
    %849 = vmatprep.subr.mxu0 0.0
    %850 = vmatpush1.msra.mxu0 0.0
    %851 = vmatprep.subr.mxu0 0.0
    %852 = vmatpush1.msra.mxu0 0.0
    %853 = vmatprep.subr.mxu0 0.0
    %854 = vmatpush1.msra.mxu0 0.0
    %855 = vmatprep.subr.mxu0 0.0
    %856 = vmatpush1.msra.mxu0 0.0
    %857 = vmatprep.subr.mxu0 0.0
    %858 = vmatpush1.msra.mxu0 0.0
    %859 = vmatprep.subr.mxu0 0.0
    %860 = vmatpush1.msra.mxu0 0.0
    %861 = vmatprep.subr.mxu0 0.0
    %862 = vmatpush1.msra.mxu0 0.0
    %863 = vmatprep.subr.mxu0 0.0
    %864 = vmatpush1.msra.mxu0 0.0
    %865 = vmatprep.subr.mxu0 0.0
    %866 = vmatpush1.msra.mxu0 0.0
    %867 = vmatprep.subr.mxu0 0.0
    %868 = vmatpush1.msra.mxu0 0.0
    %869 = vmatprep.mubr.f32.mxu0 0.0
    %870 = vmatmul.mubr.f32.gmra.mrb[0].mxu0 %v803
    %v871 = vpop.f32.mrb[0].mxu0
    %v872 = vadd.f32 0.0, %v871
    %v873 = vpop.f32.mrb[0].mxu0
    %874 = vdwg.mxu0
    %v875 = vadd.f32 %v799, %v872
    %v876 = vxor.u32 %v875, 2147483648
    %v877 = vmul.f32 %v876, 1.442695
    %v878 = vpow.pop %v877
    %v879 = vadd.f32 %v878, 1.0
    %v880 = vrcp.pop %v879
    %v881 = vmul.f32 1.0, %v880
    %v882 = vtanh.pop %v875
    %v883 = vmul.f32 %v881, %v790
    %885 = vrot.lane.b32.xlu0 %v882, 64
    %v886 = vpop.permute.xlu0 %885
    %v888 = vmul.f32 %v881, %v886
    %890 = vrot.lane.b32.xlu0 %v888, 32
    %v891 = vpop.permute.xlu0 %890
    %v893 = vadd.f32 %v883, %v891
    %v894 = vtanh.pop %v893
    %896 = vrot.lane.b32.xlu0 %v894, 64
    %v897 = vpop.permute.xlu0 %896
    %v899 = vmul.f32 %v881, %v897
    %s900 = sadd.s32 %s78, 6
    %v901 = vstv %s900
    %vm902 = vcmp.gt.s32.totalorder %v73, %v901
    %v903 = vsel %vm902, 1, 0
    %904 = vset.pattern.permute.xlu0 0
    %905 = vperm.xlu0 %904, %v903
    %v906 = vpop.permute.xlu0 %905
    %vm907 = vcmp.eq.s32.totalorder %v906, 1
    %v908 = vsel %vm907, %v899, %v789
    %v909 = vsel %vm907, %v893, %v790
    %v910 = vsel %vm907, %v899, 0.0
    %912 = vrot.lane.b32.xlu0 %v910, 32
    %v913 = vpop.permute.xlu0 %912
    %s915 = scalar_lea.vmem [#allocation9], 48
    %916 = vst.msk [vmem:[%s915] sm:$0xff] %vm82, %v913
    %s917 = scalar_lea.vmem [#allocation4], 56
    %v918 = vld [vmem:[%s917] sm:$0xff]
    %920 = vrot.lane.b32.xlu0 %v908, 32
    %v921 = vpop.permute.xlu0 %920
    %v922 = vsel %vm82, %v921, 0
    %924 = vmatprep.subr.mxu0 0.0
    %925 = vmatpush1.msra.mxu0 %v74
    %926 = vmatprep.subr.mxu0 0.0
    %927 = vmatpush1.msra.mxu0 %v75
    %928 = vmatprep.subr.mxu0 0.0
    %929 = vmatpush1.msra.mxu0 %v76
    %930 = vmatprep.subr.mxu0 0.0
    %931 = vmatpush1.msra.mxu0 %v77
    %932 = vmatprep.subr.mxu0 0.0
    %933 = vmatpush1.msra.mxu0 0.0
    %934 = vmatprep.subr.mxu0 0.0
    %935 = vmatpush1.msra.mxu0 0.0
    %936 = vmatprep.subr.mxu0 0.0
    %937 = vmatpush1.msra.mxu0 0.0
    %938 = vmatprep.subr.mxu0 0.0
    %939 = vmatpush1.msra.mxu0 0.0
    %940 = vmatprep.subr.mxu0 0.0
    %941 = vmatpush1.msra.mxu0 0.0
    %942 = vmatprep.subr.mxu0 0.0
    %943 = vmatpush1.msra.mxu0 0.0
    %944 = vmatprep.subr.mxu0 0.0
    %945 = vmatpush1.msra.mxu0 0.0
    %946 = vmatprep.subr.mxu0 0.0
    %947 = vmatpush1.msra.mxu0 0.0
    %948 = vmatprep.subr.mxu0 0.0
    %949 = vmatpush1.msra.mxu0 0.0
    %950 = vmatprep.subr.mxu0 0.0
    %951 = vmatpush1.msra.mxu0 0.0
    %952 = vmatprep.subr.mxu0 0.0
    %953 = vmatpush1.msra.mxu0 0.0
    %954 = vmatprep.subr.mxu0 0.0
    %955 = vmatpush1.msra.mxu0 0.0
    %956 = vmatprep.subr.mxu0 0.0
    %957 = vmatpush1.msra.mxu0 0.0
    %958 = vmatprep.subr.mxu0 0.0
    %959 = vmatpush1.msra.mxu0 0.0
    %960 = vmatprep.subr.mxu0 0.0
    %961 = vmatpush1.msra.mxu0 0.0
    %962 = vmatprep.subr.mxu0 0.0
    %963 = vmatpush1.msra.mxu0 0.0
    %964 = vmatprep.subr.mxu0 0.0
    %965 = vmatpush1.msra.mxu0 0.0
    %966 = vmatprep.subr.mxu0 0.0
    %967 = vmatpush1.msra.mxu0 0.0
    %968 = vmatprep.subr.mxu0 0.0
    %969 = vmatpush1.msra.mxu0 0.0
    %970 = vmatprep.subr.mxu0 0.0
    %971 = vmatpush1.msra.mxu0 0.0
    %972 = vmatprep.subr.mxu0 0.0
    %973 = vmatpush1.msra.mxu0 0.0
    %974 = vmatprep.subr.mxu0 0.0
    %975 = vmatpush1.msra.mxu0 0.0
    %976 = vmatprep.subr.mxu0 0.0
    %977 = vmatpush1.msra.mxu0 0.0
    %978 = vmatprep.subr.mxu0 0.0
    %979 = vmatpush1.msra.mxu0 0.0
    %980 = vmatprep.subr.mxu0 0.0
    %981 = vmatpush1.msra.mxu0 0.0
    %982 = vmatprep.subr.mxu0 0.0
    %983 = vmatpush1.msra.mxu0 0.0
    %984 = vmatprep.subr.mxu0 0.0
    %985 = vmatpush1.msra.mxu0 0.0
    %986 = vmatprep.subr.mxu0 0.0
    %987 = vmatpush1.msra.mxu0 0.0
    %988 = vmatprep.mubr.f32.mxu0 0.0
    %989 = vmatmul.mubr.f32.gmra.mrb[0].mxu0 %v922
    %v990 = vpop.f32.mrb[0].mxu0
    %v991 = vadd.f32 0.0, %v990
    %v992 = vpop.f32.mrb[0].mxu0
    %993 = vdwg.mxu0
    %v994 = vadd.f32 %v918, %v991
    %v995 = vxor.u32 %v994, 2147483648
    %v996 = vmul.f32 %v995, 1.442695
    %v997 = vpow.pop %v996
    %v998 = vadd.f32 %v997, 1.0
    %v999 = vrcp.pop %v998
    %v1000 = vmul.f32 1.0, %v999
    %v1001 = vtanh.pop %v994
    %v1002 = vmul.f32 %v1000, %v909
    %1004 = vrot.lane.b32.xlu0 %v1001, 64
    %v1005 = vpop.permute.xlu0 %1004
    %v1007 = vmul.f32 %v1000, %v1005
    %1009 = vrot.lane.b32.xlu0 %v1007, 32
    %v1010 = vpop.permute.xlu0 %1009
    %v1012 = vadd.f32 %v1002, %v1010
    %v1013 = vtanh.pop %v1012
    %1015 = vrot.lane.b32.xlu0 %v1013, 64
    %v1016 = vpop.permute.xlu0 %1015
    %v1018 = vmul.f32 %v1000, %v1016
    %s1019 = sadd.s32 %s78, 7
    %v1020 = vstv %s1019
    %vm1021 = vcmp.gt.s32.totalorder %v73, %v1020
    %v1022 = vsel %vm1021, 1, 0
    %1023 = vset.pattern.permute.xlu0 0
    %1024 = vperm.xlu0 %1023, %v1022
    %v1025 = vpop.permute.xlu0 %1024
    %vm1026 = vcmp.eq.s32.totalorder %v1025, 1
    %v1027 = vsel %vm1026, %v1018, %v908
    %v1028 = vsel %vm1026, %v1012, %v909
    %v1029 = vsel %vm1026, %v1018, 0.0
    %1031 = vrot.lane.b32.xlu0 %v1029, 32
    %v1032 = vpop.permute.xlu0 %1031
    %s1034 = scalar_lea.vmem [#allocation9], 56
    %1035 = vst.msk [vmem:[%s1034] sm:$0xff] %vm82, %v1032
    %1037 = vrot.lane.b32.xlu0 %v1027, 32
    %v1038 = vpop.permute.xlu0 %1037
    %1040 = vst.msk [vmem:[#allocation2] sm:$0xff] %vm82, %v1038
    %1042 = vrot.lane.b32.xlu0 %v1028, 96
    %v1043 = vpop.permute.xlu0 %1042
    %1045 = vst.msk [vmem:[#allocation3] sm:$0xff] %vm82, %v1043
    // Predicated region
    $region34: #{tpu_custom_call.1} parent=1 // pred_check
      %p1046 = pneg %p52
    $region35: #{tpu_custom_call.1} parent=1 // pred_check_branch
      %1048 = sbr.rel (%p1046) target = $region37
    $region36: #{tpu_custom_call.1} parent=1 // pred_region
      %1049 = vst.msk [vmem:[#allocation10] sm:$0xff] %vm82, %v1038
    $region37: #{tpu_custom_call.1} parent=1 // pred_fallthru
      _
    // Predicated region
    $region38: #{tpu_custom_call.1} parent=1 // pred_check
      _
    $region39: #{tpu_custom_call.1} parent=1 // pred_check_branch
      %1051 = sbr.rel (0) target = $region41
    $region40: #{tpu_custom_call.1} parent=1 // pred_region
      %s1053 = ssub.s32 1024, 1024
      %1054 = vsyncadd [#allocation6], %s1053
      %s1055 = sshll.u32 [#allocation9], 4
      %s1056 = int_to_ptr.vmem [resolvable:$true] %s1055
      %1061 = dma.vmem_to_hbm [thread:$0]  %s1056, 1024, %s5, [#allocation6], 128, 128, 8
    $region41: #{tpu_custom_call.1} parent=1 // pred_fallthru
      _
    // Predicated region
    $region42: #{tpu_custom_call.1} parent=1 // pred_check
      _
    $region43: #{tpu_custom_call.1} parent=1 // pred_check_branch
      %1063 = sbr.rel (0) target = $region45
    $region44: #{tpu_custom_call.1} parent=1 // pred_region
      %s1065 = ssub.s32 128, 128
      %1066 = vsyncadd [#allocation11], %s1065
      %s1068 = sshll.u32 [#allocation10], 4
      %s1069 = int_to_ptr.vmem [resolvable:$true] %s1068
      %1071 = dma.vmem_to_hbm [thread:$0]  %s1069, 128, %s6, [#allocation11]
    $region45: #{tpu_custom_call.1} parent=1 // pred_fallthru
      _
    // Predicated region
    $region46: #{tpu_custom_call.1} parent=1 // pred_check
      _
    $region47: #{tpu_custom_call.1} parent=1 // pred_check_branch
      %1073 = sbr.rel (0) target = $region49
    $region48: #{tpu_custom_call.1} parent=1 // pred_region
      %1074 = dma.done [#allocation6], 1024
    $region49: #{tpu_custom_call.1} parent=1 // pred_fallthru
      _
    // Predicated region
    $region50: #{tpu_custom_call.1} parent=1 // pred_check
      _
    $region51: #{tpu_custom_call.1} parent=1 // pred_check_branch
      %1076 = sbr.rel (0) target = $region53
    $region52: #{tpu_custom_call.1} parent=1 // pred_region
      %1077 = dma.done [#allocation11], 128
    $region53: #{tpu_custom_call.1} parent=1 // pred_fallthru
      _
    %1078 = vsyncpa [#allocation5], 1
    %1079 = vsyncpa [#allocation8], 1
    %1080 = vsyncpa [#allocation6], 1
    %1081 = vsyncpa [#allocation11], 1

// kernel: tpu_custom_call.1
$region0: #{tpu_custom_call.1}
  #allocation0 [shape = 'u32[]', space=smem, size = 0x4, offset = 0x4, fixed_abs, tag = 'smem constant byte address 0x4 - core index']
  #allocation1 [shape = 'u32[144,128]{1,0:T(1,128)}', space=vmem, size = 0x12000, scoped, tag = 'internal scratch']
  #allocation2 [shape = 'f32[8,32]{1,0:T(8,128)}', space=vmem, size = 0x1000, scoped, tag = 'scratch operand']
  #allocation3 [shape = 'f32[8,32]{1,0:T(8,128)}', space=vmem, size = 0x1000, scoped, tag = 'scratch operand']
  %s0 = inlined_call_operand.hbm [shape: f32[8,8,128], index: 0, kind: input, shape index: {}]
  %s1 = inlined_call_operand.hbm [shape: f32[32,128], index: 1, kind: input, shape index: {}]
  %s2 = inlined_call_operand.vmem [shape: f32[1,32], index: 2, kind: input, shape index: {}]
  %s3 = inlined_call_operand.vmem [shape: f32[1,32], index: 3, kind: input, shape index: {}]
  %s4 = inlined_call_operand.vmem [shape: s32[8,1], index: 4, kind: input, shape index: {}]
  %s5 = inlined_call_operand.hbm [shape: f32[8,8,32], index: 5, kind: output, shape index: {0}]
  %s6 = inlined_call_operand.hbm [shape: f32[8,32], index: 6, kind: output, shape index: {1}]
  %7 = xla_tuple %s5, %s6
  %s8 = sld [smem:[#allocation0]]
  $region54: #{tpu_custom_call.1} parent=0
    _
  %s10 = ssub.s32 1, %s8
  %s11 = scalar_select 0, %s10, %s8
  $region1: #{tpu_custom_call.1} parent=0
    #allocation4 [shape = 'u8[32768]{0}', space=vmem, size = 0x8000, scoped, tag = 'input window, operand 0, single buffered']
    #allocation5 [shape = 's32[1]{0}', space=sflag, size = 0x4, scoped, tag = 'scoped memory for tpu_custom_call.1']
    #allocation6 [shape = 's32[1]{0}', space=sflag, size = 0x4, scoped, tag = 'scoped memory for tpu_custom_call.1']
    #allocation7 [shape = 'u8[16384]{0}', space=vmem, size = 0x4000, scoped, tag = 'input window, operand 1, single buffered']
    #allocation8 [shape = 's32[1]{0}', space=sflag, size = 0x4, scoped, tag = 'scoped memory for tpu_custom_call.1']
    #allocation9 [shape = 'u8[32768]{0}', space=vmem, size = 0x8000, scoped, tag = 'output window, operand 0, single buffered']
    #allocation10 [shape = 'u8[4096]{0}', space=vmem, size = 0x1000, scoped, tag = 'output window, operand 1, single buffered']
    #allocation11 [shape = 's32[1]{0}', space=sflag, size = 0x4, scoped, tag = 'scoped memory for tpu_custom_call.1']
    %12 = vsyncpa [#allocation5], 0
    %13 = vsyncpa [#allocation8], 0
    %14 = vsyncpa [#allocation6], 0
    %15 = vsyncpa [#allocation11], 0
    // Predicated region
    $region2: #{tpu_custom_call.1} parent=1 // pred_check
      _
    $region3: #{tpu_custom_call.1} parent=1 // pred_check_branch
      %17 = sbr.rel (0) target = $region5
    $region4: #{tpu_custom_call.1} parent=1 // pred_region
      %s19 = ssub.s32 1024, 1024
      %20 = vsyncadd [#allocation5], %s19
      %s21 = sshll.u32 [#allocation4], 4
      %s22 = int_to_ptr.vmem [resolvable:$true] %s21
      %27 = dma.hbm_to_vmem [thread:$0]  %s0, 1024, %s22, [#allocation5], 128, 128, 8
    $region5: #{tpu_custom_call.1} parent=1 // pred_fallthru
      _
    // Predicated region
    $region6: #{tpu_custom_call.1} parent=1 // pred_check
      _
    $region7: #{tpu_custom_call.1} parent=1 // pred_check_branch
      %29 = sbr.rel (0) target = $region9
    $region8: #{tpu_custom_call.1} parent=1 // pred_region
      %s31 = ssub.s32 512, 512
      %32 = vsyncadd [#allocation8], %s31
      %s33 = sshll.u32 [#allocation7], 4
      %s34 = int_to_ptr.vmem [resolvable:$true] %s33
      %39 = dma.hbm_to_vmem [thread:$0]  %s1, 512, %s34, [#allocation8], 128, 128, 8
    $region9: #{tpu_custom_call.1} parent=1 // pred_fallthru
      _
    // Predicated region
    $region10: #{tpu_custom_call.1} parent=1 // pred_check
      _
    $region11: #{tpu_custom_call.1} parent=1 // pred_check_branch
      %41 = sbr.rel (0) target = $region13
    $region12: #{tpu_custom_call.1} parent=1 // pred_region
      _
    $region13: #{tpu_custom_call.1} parent=1 // pred_fallthru
      _
    // Predicated region
    $region14: #{tpu_custom_call.1} parent=1 // pred_check
      _
    $region15: #{tpu_custom_call.1} parent=1 // pred_check_branch
      %43 = sbr.rel (0) target = $region17
    $region16: #{tpu_custom_call.1} parent=1 // pred_region
      _
    $region17: #{tpu_custom_call.1} parent=1 // pred_fallthru
      _
    // Predicated region
    $region18: #{tpu_custom_call.1} parent=1 // pred_check
      _
    $region19: #{tpu_custom_call.1} parent=1 // pred_check_branch
      %45 = sbr.rel (0) target = $region21
    $region20: #{tpu_custom_call.1} parent=1 // pred_region
      _
    $region21: #{tpu_custom_call.1} parent=1 // pred_fallthru
      _
    // Predicated region
    $region22: #{tpu_custom_call.1} parent=1 // pred_check
      _
    $region23: #{tpu_custom_call.1} parent=1 // pred_check_branch
      %47 = sbr.rel (0) target = $region25
    $region24: #{tpu_custom_call.1} parent=1 // pred_region
      %48 = dma.done [#allocation5], 1024
    $region25: #{tpu_custom_call.1} parent=1 // pred_fallthru
      _
    // Predicated region
    $region26: #{tpu_custom_call.1} parent=1 // pred_check
      _
    $region27: #{tpu_custom_call.1} parent=1 // pred_check_branch
      %50 = sbr.rel (0) target = $region29
    $region28: #{tpu_custom_call.1} parent=1 // pred_region
      %51 = dma.done [#allocation8], 512
    $region29: #{tpu_custom_call.1} parent=1 // pred_fallthru
      _
    %p52 = scmp.eq.s32.totalorder 0, 0
    // Predicated region
    $region30: #{tpu_custom_call.1} parent=1 // pred_check
      %p53 = pneg %p52
    $region31: #{tpu_custom_call.1} parent=1 // pred_check_branch
      %55 = sbr.rel (%p53) target = $region33
    $region32: #{tpu_custom_call.1} parent=1 // pred_region
      %v56 = vld [vmem:[%s2] sm:$0x1]
      %v58 = vlaneseq
      %v59 = vshrl.u32 %v58, 7
      %v60 = vsub.s32 0, %v59
      %v61 = vrot.slane %v56, %v60
      %vm63 = vcmask 261120
      %64 = vst.msk [vmem:[#allocation2] sm:$0xff] %vm63, %v61
      %v65 = vld [vmem:[%s3] sm:$0x1]
      %v67 = vlaneseq
      %v68 = vshrl.u32 %v67, 7
      %v69 = vsub.s32 0, %v68
      %v70 = vrot.slane %v65, %v69
      %72 = vst.msk [vmem:[#allocation3] sm:$0xff] %vm63, %v70
    $region33: #{tpu_custom_call.1} parent=1 // pred_fallthru
      _
    %v73 = vld [vmem:[%s4] sm:$0xff]
    %v74 = vld [vmem:[#allocation7] sm:$0xff]
    %v75 = vld [vmem:[#allocation7 + $0x8] sm:$0xff]
    %v76 = vld [vmem:[#allocation7 + $0x10] sm:$0xff]
    %v77 = vld [vmem:[#allocation7 + $0x18] sm:$0xff]
    %s78 = smul.u32 0, 8
    %v79 = vld [vmem:[#allocation2] sm:$0xff]
    %v80 = vld [vmem:[#allocation3] sm:$0xff]
    %v81 = vld [vmem:[#allocation4] sm:$0xff]
    %vm82 = vcmask 261120
    %v84 = vsel %vm82, %v79, 0
    %86 = vmatprep.subr.mxu0 0.0
    %87 = vmatpush1.msra.mxu0 %v74
    %88 = vmatprep.subr.mxu0 0.0
    %89 = vmatpush1.msra.mxu0 %v75
    %90 = vmatprep.subr.mxu0 0.0
    %91 = vmatpush1.msra.mxu0 %v76
    %92 = vmatprep.subr.mxu0 0.0
    %93 = vmatpush1.msra.mxu0 %v77
    %94 = vmatprep.subr.mxu0 0.0
    %95 = vmatpush1.msra.mxu0 0.0
    %96 = vmatprep.subr.mxu0 0.0
    %97 = vmatpush1.msra.mxu0 0.0
    %98 = vmatprep.subr.mxu0 0.0
    %99 = vmatpush1.msra.mxu0 0.0
    %100 = vmatprep.subr.mxu0 0.0
    %101 = vmatpush1.msra.mxu0 0.0
    %102 = vmatprep.subr.mxu0 0.0
    %103 = vmatpush1.msra.mxu0 0.0
    %104 = vmatprep.subr.mxu0 0.0
    %105 = vmatpush1.msra.mxu0 0.0
    %106 = vmatprep.subr.mxu0 0.0
    %107 = vmatpush1.msra.mxu0 0.0
    %108 = vmatprep.subr.mxu0 0.0
    %109 = vmatpush1.msra.mxu0 0.0
    %110 = vmatprep.subr.mxu0 0.0
    %111 = vmatpush1.msra.mxu0 0.0
    %112 = vmatprep.subr.mxu0 0.0
    %113 = vmatpush1.msra.mxu0 0.0
    %114 = vmatprep.subr.mxu0 0.0
    %115 = vmatpush1.msra.mxu0 0.0
    %116 = vmatprep.subr.mxu0 0.0
    %117 = vmatpush1.msra.mxu0 0.0
    %118 = vmatprep.subr.mxu0 0.0
    %119 = vmatpush1.msra.mxu0 0.0
    %120 = vmatprep.subr.mxu0 0.0
    %121 = vmatpush1.msra.mxu0 0.0
    %122 = vmatprep.subr.mxu0 0.0
    %123 = vmatpush1.msra.mxu0 0.0
    %124 = vmatprep.subr.mxu0 0.0
    %125 = vmatpush1.msra.mxu0 0.0
    %126 = vmatprep.subr.mxu0 0.0
    %127 = vmatpush1.msra.mxu0 0.0
    %128 = vmatprep.subr.mxu0 0.0
    %129 = vmatpush1.msra.mxu0 0.0
    %130 = vmatprep.subr.mxu0 0.0
    %131 = vmatpush1.msra.mxu0 0.0
    %132 = vmatprep.subr.mxu0 0.0
    %133 = vmatpush1.msra.mxu0 0.0
    %134 = vmatprep.subr.mxu0 0.0
    %135 = vmatpush1.msra.mxu0 0.0
    %136 = vmatprep.subr.mxu0 0.0
    %137 = vmatpush1.msra.mxu0 0.0
    %138 = vmatprep.subr.mxu0 0.0
    %139 = vmatpush1.msra.mxu0 0.0
    %140 = vmatprep.subr.mxu0 0.0
    %141 = vmatpush1.msra.mxu0 0.0
    %142 = vmatprep.subr.mxu0 0.0
    %143 = vmatpush1.msra.mxu0 0.0
    %144 = vmatprep.subr.mxu0 0.0
    %145 = vmatpush1.msra.mxu0 0.0
    %146 = vmatprep.subr.mxu0 0.0
    %147 = vmatpush1.msra.mxu0 0.0
    %148 = vmatprep.subr.mxu0 0.0
    %149 = vmatpush1.msra.mxu0 0.0
    %150 = vmatprep.mubr.f32.mxu0 0.0
    %151 = vmatmul.mubr.f32.gmra.mrb[0].mxu0 %v84
    %v152 = vpop.f32.mrb[0].mxu0
    %v153 = vadd.f32 0.0, %v152
    %v154 = vpop.f32.mrb[0].mxu0
    %155 = vdwg.mxu0
    %v156 = vadd.f32 %v81, %v153
    %v157 = vxor.u32 %v156, 2147483648
    %v158 = vmul.f32 %v157, 1.442695
    %v159 = vpow.pop %v158
    %v160 = vadd.f32 %v159, 1.0
    %v161 = vrcp.pop %v160
    %v162 = vmul.f32 1.0, %v161
    %v163 = vtanh.pop %v156
    %165 = vrot.lane.b32.xlu0 %v80, 32
    %v166 = vpop.permute.xlu0 %165
    %v168 = vmul.f32 %v162, %v166
    %170 = vrot.lane.b32.xlu0 %v163, 64
    %v171 = vpop.permute.xlu0 %170
    %v173 = vmul.f32 %v162, %v171
    %175 = vrot.lane.b32.xlu0 %v173, 32
    %v176 = vpop.permute.xlu0 %175
    %v178 = vadd.f32 %v168, %v176
    %v179 = vtanh.pop %v178
    %181 = vrot.lane.b32.xlu0 %v179, 64
    %v182 = vpop.permute.xlu0 %181
    %v184 = vmul.f32 %v162, %v182
    %v185 = vstv %s78
    %vm186 = vcmp.gt.s32.totalorder %v73, %v185
    %v187 = vsel %vm186, 1, 0
    %188 = vset.pattern.permute.xlu0 0
    %189 = vperm.xlu0 %188, %v187
    %v190 = vpop.permute.xlu0 %189
    %vm191 = vcmp.eq.s32.totalorder %v190, 1
    %192 = vrot.lane.b32.xlu0 %v79, 96
    %v193 = vpop.permute.xlu0 %192
    %v195 = vsel %vm191, %v184, %v193
    %v196 = vsel %vm191, %v178, %v166
    %v197 = vsel %vm191, %v184, 0.0
    %199 = vrot.lane.b32.xlu0 %v197, 32
    %v200 = vpop.permute.xlu0 %199
    %202 = vst.msk [vmem:[#allocation9] sm:$0xff] %vm82, %v200
    %s203 = scalar_lea.vmem [#allocation4], 8
    %v204 = vld [vmem:[%s203] sm:$0xff]
    %206 = vrot.lane.b32.xlu0 %v195, 32
    %v207 = vpop.permute.xlu0 %206
    %v208 = vsel %vm82, %v207, 0
    %210 = vmatprep.subr.mxu0 0.0
    %211 = vmatpush1.msra.mxu0 %v74
    %212 = vmatprep.subr.mxu0 0.0
    %213 = vmatpush1.msra.mxu0 %v75
    %214 = vmatprep.subr.mxu0 0.0
    %215 = vmatpush1.msra.mxu0 %v76
    %216 = vmatprep.subr.mxu0 0.0
    %217 = vmatpush1.msra.mxu0 %v77
    %218 = vmatprep.subr.mxu0 0.0
    %219 = vmatpush1.msra.mxu0 0.0
    %220 = vmatprep.subr.mxu0 0.0
    %221 = vmatpush1.msra.mxu0 0.0
    %222 = vmatprep.subr.mxu0 0.0
    %223 = vmatpush1.msra.mxu0 0.0
    %224 = vmatprep.subr.mxu0 0.0
    %225 = vmatpush1.msra.mxu0 0.0
    %226 = vmatprep.subr.mxu0 0.0
    %227 = vmatpush1.msra.mxu0 0.0
    %228 = vmatprep.subr.mxu0 0.0
    %229 = vmatpush1.msra.mxu0 0.0
    %230 = vmatprep.subr.mxu0 0.0
    %231 = vmatpush1.msra.mxu0 0.0
    %232 = vmatprep.subr.mxu0 0.0
    %233 = vmatpush1.msra.mxu0 0.0
    %234 = vmatprep.subr.mxu0 0.0
    %235 = vmatpush1.msra.mxu0 0.0
    %236 = vmatprep.subr.mxu0 0.0
    %237 = vmatpush1.msra.mxu0 0.0
    %238 = vmatprep.subr.mxu0 0.0
    %239 = vmatpush1.msra.mxu0 0.0
    %240 = vmatprep.subr.mxu0 0.0
    %241 = vmatpush1.msra.mxu0 0.0
    %242 = vmatprep.subr.mxu0 0.0
    %243 = vmatpush1.msra.mxu0 0.0
    %244 = vmatprep.subr.mxu0 0.0
    %245 = vmatpush1.msra.mxu0 0.0
    %246 = vmatprep.subr.mxu0 0.0
    %247 = vmatpush1.msra.mxu0 0.0
    %248 = vmatprep.subr.mxu0 0.0
    %249 = vmatpush1.msra.mxu0 0.0
    %250 = vmatprep.subr.mxu0 0.0
    %251 = vmatpush1.msra.mxu0 0.0
    %252 = vmatprep.subr.mxu0 0.0
    %253 = vmatpush1.msra.mxu0 0.0
    %254 = vmatprep.subr.mxu0 0.0
    %255 = vmatpush1.msra.mxu0 0.0
    %256 = vmatprep.subr.mxu0 0.0
    %257 = vmatpush1.msra.mxu0 0.0
    %258 = vmatprep.subr.mxu0 0.0
    %259 = vmatpush1.msra.mxu0 0.0
    %260 = vmatprep.subr.mxu0 0.0
    %261 = vmatpush1.msra.mxu0 0.0
    %262 = vmatprep.subr.mxu0 0.0
    %263 = vmatpush1.msra.mxu0 0.0
    %264 = vmatprep.subr.mxu0 0.0
    %265 = vmatpush1.msra.mxu0 0.0
    %266 = vmatprep.subr.mxu0 0.0
    %267 = vmatpush1.msra.mxu0 0.0
    %268 = vmatprep.subr.mxu0 0.0
    %269 = vmatpush1.msra.mxu0 0.0
    %270 = vmatprep.subr.mxu0 0.0
    %271 = vmatpush1.msra.mxu0 0.0
    %272 = vmatprep.subr.mxu0 0.0
    %273 = vmatpush1.msra.mxu0 0.0
    %274 = vmatprep.mubr.f32.mxu0 0.0
    %275 = vmatmul.mubr.f32.gmra.mrb[0].mxu0 %v208
    %v276 = vpop.f32.mrb[0].mxu0
    %v277 = vadd.f32 0.0, %v276
    %v278 = vpop.f32.mrb[0].mxu0
    %279 = vdwg.mxu0
    %v280 = vadd.f32 %v204, %v277
    %v281 = vxor.u32 %v280, 2147483648
    %v282 = vmul.f32 %v281, 1.442695
    %v283 = vpow.pop %v282
    %v284 = vadd.f32 %v283, 1.0
    %v285 = vrcp.pop %v284
    %v286 = vmul.f32 1.0, %v285
    %v287 = vtanh.pop %v280
    %v288 = vmul.f32 %v286, %v196
    %290 = vrot.lane.b32.xlu0 %v287, 64
    %v291 = vpop.permute.xlu0 %290
    %v293 = vmul.f32 %v286, %v291
    %295 = vrot.lane.b32.xlu0 %v293, 32
    %v296 = vpop.permute.xlu0 %295
    %v298 = vadd.f32 %v288, %v296
    %v299 = vtanh.pop %v298
    %301 = vrot.lane.b32.xlu0 %v299, 64
    %v302 = vpop.permute.xlu0 %301
    %v304 = vmul.f32 %v286, %v302
    %s305 = sadd.s32 %s78, 1
    %v306 = vstv %s305
    %vm307 = vcmp.gt.s32.totalorder %v73, %v306
    %v308 = vsel %vm307, 1, 0
    %309 = vset.pattern.permute.xlu0 0
    %310 = vperm.xlu0 %309, %v308
    %v311 = vpop.permute.xlu0 %310
    %vm312 = vcmp.eq.s32.totalorder %v311, 1
    %v313 = vsel %vm312, %v304, %v195
    %v314 = vsel %vm312, %v298, %v196
    %v315 = vsel %vm312, %v304, 0.0
    %317 = vrot.lane.b32.xlu0 %v315, 32
    %v318 = vpop.permute.xlu0 %317
    %s320 = scalar_lea.vmem [#allocation9], 8
    %321 = vst.msk [vmem:[%s320] sm:$0xff] %vm82, %v318
    %s322 = scalar_lea.vmem [#allocation4], 16
    %v323 = vld [vmem:[%s322] sm:$0xff]
    %325 = vrot.lane.b32.xlu0 %v313, 32
    %v326 = vpop.permute.xlu0 %325
    %v327 = vsel %vm82, %v326, 0
    %329 = vmatprep.subr.mxu0 0.0
    %330 = vmatpush1.msra.mxu0 %v74
    %331 = vmatprep.subr.mxu0 0.0
    %332 = vmatpush1.msra.mxu0 %v75
    %333 = vmatprep.subr.mxu0 0.0
    %334 = vmatpush1.msra.mxu0 %v76
    %335 = vmatprep.subr.mxu0 0.0
    %336 = vmatpush1.msra.mxu0 %v77
    %337 = vmatprep.subr.mxu0 0.0
    %338 = vmatpush1.msra.mxu0 0.0
    %339 = vmatprep.subr.mxu0 0.0
    %340 = vmatpush1.msra.mxu0 0.0
    %341 = vmatprep.subr.mxu0 0.0
    %342 = vmatpush1.msra.mxu0 0.0
    %343 = vmatprep.subr.mxu0 0.0
    %344 = vmatpush1.msra.mxu0 0.0
    %345 = vmatprep.subr.mxu0 0.0
    %346 = vmatpush1.msra.mxu0 0.0
    %347 = vmatprep.subr.mxu0 0.0
    %348 = vmatpush1.msra.mxu0 0.0
    %349 = vmatprep.subr.mxu0 0.0
    %350 = vmatpush1.msra.mxu0 0.0
    %351 = vmatprep.subr.mxu0 0.0
    %352 = vmatpush1.msra.mxu0 0.0
    %353 = vmatprep.subr.mxu0 0.0
    %354 = vmatpush1.msra.mxu0 0.0
    %355 = vmatprep.subr.mxu0 0.0
    %356 = vmatpush1.msra.mxu0 0.0
    %357 = vmatprep.subr.mxu0 0.0
    %358 = vmatpush1.msra.mxu0 0.0
    %359 = vmatprep.subr.mxu0 0.0
    %360 = vmatpush1.msra.mxu0 0.0
    %361 = vmatprep.subr.mxu0 0.0
    %362 = vmatpush1.msra.mxu0 0.0
    %363 = vmatprep.subr.mxu0 0.0
    %364 = vmatpush1.msra.mxu0 0.0
    %365 = vmatprep.subr.mxu0 0.0
    %366 = vmatpush1.msra.mxu0 0.0
    %367 = vmatprep.subr.mxu0 0.0
    %368 = vmatpush1.msra.mxu0 0.0
    %369 = vmatprep.subr.mxu0 0.0
    %370 = vmatpush1.msra.mxu0 0.0
    %371 = vmatprep.subr.mxu0 0.0
    %372 = vmatpush1.msra.mxu0 0.0
    %373 = vmatprep.subr.mxu0 0.0
    %374 = vmatpush1.msra.mxu0 0.0
    %375 = vmatprep.subr.mxu0 0.0
    %376 = vmatpush1.msra.mxu0 0.0
    %377 = vmatprep.subr.mxu0 0.0
    %378 = vmatpush1.msra.mxu0 0.0
    %379 = vmatprep.subr.mxu0 0.0
    %380 = vmatpush1.msra.mxu0 0.0
    %381 = vmatprep.subr.mxu0 0.0
    %382 = vmatpush1.msra.mxu0 0.0
    %383 = vmatprep.subr.mxu0 0.0
    %384 = vmatpush1.msra.mxu0 0.0
    %385 = vmatprep.subr.mxu0 0.0
    %386 = vmatpush1.msra.mxu0 0.0
    %387 = vmatprep.subr.mxu0 0.0
    %388 = vmatpush1.msra.mxu0 0.0
    %389 = vmatprep.subr.mxu0 0.0
    %390 = vmatpush1.msra.mxu0 0.0
    %391 = vmatprep.subr.mxu0 0.0
    %392 = vmatpush1.msra.mxu0 0.0
    %393 = vmatprep.mubr.f32.mxu0 0.0
    %394 = vmatmul.mubr.f32.gmra.mrb[0].mxu0 %v327
    %v395 = vpop.f32.mrb[0].mxu0
    %v396 = vadd.f32 0.0, %v395
    %v397 = vpop.f32.mrb[0].mxu0
    %398 = vdwg.mxu0
    %v399 = vadd.f32 %v323, %v396
    %v400 = vxor.u32 %v399, 2147483648
    %v401 = vmul.f32 %v400, 1.442695
    %v402 = vpow.pop %v401
    %v403 = vadd.f32 %v402, 1.0
    %v404 = vrcp.pop %v403
    %v405 = vmul.f32 1.0, %v404
    %v406 = vtanh.pop %v399
    %v407 = vmul.f32 %v405, %v314
    %409 = vrot.lane.b32.xlu0 %v406, 64
    %v410 = vpop.permute.xlu0 %409
    %v412 = vmul.f32 %v405, %v410
    %414 = vrot.lane.b32.xlu0 %v412, 32
    %v415 = vpop.permute.xlu0 %414
    %v417 = vadd.f32 %v407, %v415
    %v418 = vtanh.pop %v417
    %420 = vrot.lane.b32.xlu0 %v418, 64
    %v421 = vpop.permute.xlu0 %420
    %v423 = vmul.f32 %v405, %v421
    %s424 = sadd.s32 %s78, 2
    %v425 = vstv %s424
    %vm426 = vcmp.gt.s32.totalorder %v73, %v425
    %v427 = vsel %vm426, 1, 0
    %428 = vset.pattern.permute.xlu0 0
    %429 = vperm.xlu0 %428, %v427
    %v430 = vpop.permute.xlu0 %429
    %vm431 = vcmp.eq.s32.totalorder %v430, 1
    %v432 = vsel %vm431, %v423, %v313
    %v433 = vsel %vm431, %v417, %v314
    %v434 = vsel %vm431, %v423, 0.0
    %436 = vrot.lane.b32.xlu0 %v434, 32
    %v437 = vpop.permute.xlu0 %436
    %s439 = scalar_lea.vmem [#allocation9], 16
    %440 = vst.msk [vmem:[%s439] sm:$0xff] %vm82, %v437
    %s441 = scalar_lea.vmem [#allocation4], 24
    %v442 = vld [vmem:[%s441] sm:$0xff]
    %444 = vrot.lane.b32.xlu0 %v432, 32
    %v445 = vpop.permute.xlu0 %444
    %v446 = vsel %vm82, %v445, 0
    %448 = vmatprep.subr.mxu0 0.0
    %449 = vmatpush1.msra.mxu0 %v74
    %450 = vmatprep.subr.mxu0 0.0
    %451 = vmatpush1.msra.mxu0 %v75
    %452 = vmatprep.subr.mxu0 0.0
    %453 = vmatpush1.msra.mxu0 %v76
    %454 = vmatprep.subr.mxu0 0.0
    %455 = vmatpush1.msra.mxu0 %v77
    %456 = vmatprep.subr.mxu0 0.0
    %457 = vmatpush1.msra.mxu0 0.0
    %458 = vmatprep.subr.mxu0 0.0
    %459 = vmatpush1.msra.mxu0 0.0
    %460 = vmatprep.subr.mxu0 0.0
    %461 = vmatpush1.msra.mxu0 0.0
    %462 = vmatprep.subr.mxu0 0.0
    %463 = vmatpush1.msra.mxu0 0.0
    %464 = vmatprep.subr.mxu0 0.0
    %465 = vmatpush1.msra.mxu0 0.0
    %466 = vmatprep.subr.mxu0 0.0
    %467 = vmatpush1.msra.mxu0 0.0
    %468 = vmatprep.subr.mxu0 0.0
    %469 = vmatpush1.msra.mxu0 0.0
    %470 = vmatprep.subr.mxu0 0.0
    %471 = vmatpush1.msra.mxu0 0.0
    %472 = vmatprep.subr.mxu0 0.0
    %473 = vmatpush1.msra.mxu0 0.0
    %474 = vmatprep.subr.mxu0 0.0
    %475 = vmatpush1.msra.mxu0 0.0
    %476 = vmatprep.subr.mxu0 0.0
    %477 = vmatpush1.msra.mxu0 0.0
    %478 = vmatprep.subr.mxu0 0.0
    %479 = vmatpush1.msra.mxu0 0.0
    %480 = vmatprep.subr.mxu0 0.0
    %481 = vmatpush1.msra.mxu0 0.0
    %482 = vmatprep.subr.mxu0 0.0
    %483 = vmatpush1.msra.mxu0 0.0
    %484 = vmatprep.subr.mxu0 0.0
    %485 = vmatpush1.msra.mxu0 0.0
    %486 = vmatprep.subr.mxu0 0.0
    %487 = vmatpush1.msra.mxu0 0.0
    %488 = vmatprep.subr.mxu0 0.0
    %489 = vmatpush1.msra.mxu0 0.0
    %490 = vmatprep.subr.mxu0 0.0
    %491 = vmatpush1.msra.mxu0 0.0
    %492 = vmatprep.subr.mxu0 0.0
    %493 = vmatpush1.msra.mxu0 0.0
    %494 = vmatprep.subr.mxu0 0.0
    %495 = vmatpush1.msra.mxu0 0.0
    %496 = vmatprep.subr.mxu0 0.0
    %497 = vmatpush1.msra.mxu0 0.0
    %498 = vmatprep.subr.mxu0 0.0
    %499 = vmatpush1.msra.mxu0 0.0
    %500 = vmatprep.subr.mxu0 0.0
    %501 = vmatpush1.msra.mxu0 0.0
    %502 = vmatprep.subr.mxu0 0.0
    %503 = vmatpush1.msra.mxu0 0.0
    %504 = vmatprep.subr.mxu0 0.0
    %505 = vmatpush1.msra.mxu0 0.0
    %506 = vmatprep.subr.mxu0 0.0
    %507 = vmatpush1.msra.mxu0 0.0
    %508 = vmatprep.subr.mxu0 0.0
    %509 = vmatpush1.msra.mxu0 0.0
    %510 = vmatprep.subr.mxu0 0.0
    %511 = vmatpush1.msra.mxu0 0.0
    %512 = vmatprep.mubr.f32.mxu0 0.0
    %513 = vmatmul.mubr.f32.gmra.mrb[0].mxu0 %v446
    %v514 = vpop.f32.mrb[0].mxu0
    %v515 = vadd.f32 0.0, %v514
    %v516 = vpop.f32.mrb[0].mxu0
    %517 = vdwg.mxu0
    %v518 = vadd.f32 %v442, %v515
    %v519 = vxor.u32 %v518, 2147483648
    %v520 = vmul.f32 %v519, 1.442695
    %v521 = vpow.pop %v520
    %v522 = vadd.f32 %v521, 1.0
    %v523 = vrcp.pop %v522
    %v524 = vmul.f32 1.0, %v523
    %v525 = vtanh.pop %v518
    %v526 = vmul.f32 %v524, %v433
    %528 = vrot.lane.b32.xlu0 %v525, 64
    %v529 = vpop.permute.xlu0 %528
    %v531 = vmul.f32 %v524, %v529
    %533 = vrot.lane.b32.xlu0 %v531, 32
    %v534 = vpop.permute.xlu0 %533
    %v536 = vadd.f32 %v526, %v534
    %v537 = vtanh.pop %v536
    %539 = vrot.lane.b32.xlu0 %v537, 64
    %v540 = vpop.permute.xlu0 %539
    %v542 = vmul.f32 %v524, %v540
    %s543 = sadd.s32 %s78, 3
    %v544 = vstv %s543
    %vm545 = vcmp.gt.s32.totalorder %v73, %v544
    %v546 = vsel %vm545, 1, 0
    %547 = vset.pattern.permute.xlu0 0
    %548 = vperm.xlu0 %547, %v546
    %v549 = vpop.permute.xlu0 %548
    %vm550 = vcmp.eq.s32.totalorder %v549, 1
    %v551 = vsel %vm550, %v542, %v432
    %v552 = vsel %vm550, %v536, %v433
    %v553 = vsel %vm550, %v542, 0.0
    %555 = vrot.lane.b32.xlu0 %v553, 32
    %v556 = vpop.permute.xlu0 %555
    %s558 = scalar_lea.vmem [#allocation9], 24
    %559 = vst.msk [vmem:[%s558] sm:$0xff] %vm82, %v556
    %s560 = scalar_lea.vmem [#allocation4], 32
    %v561 = vld [vmem:[%s560] sm:$0xff]
    %563 = vrot.lane.b32.xlu0 %v551, 32
    %v564 = vpop.permute.xlu0 %563
    %v565 = vsel %vm82, %v564, 0
    %567 = vmatprep.subr.mxu0 0.0
    %568 = vmatpush1.msra.mxu0 %v74
    %569 = vmatprep.subr.mxu0 0.0
    %570 = vmatpush1.msra.mxu0 %v75
    %571 = vmatprep.subr.mxu0 0.0
    %572 = vmatpush1.msra.mxu0 %v76
    %573 = vmatprep.subr.mxu0 0.0
    %574 = vmatpush1.msra.mxu0 %v77
    %575 = vmatprep.subr.mxu0 0.0
    %576 = vmatpush1.msra.mxu0 0.0
    %577 = vmatprep.subr.mxu0 0.0
    %578 = vmatpush1.msra.mxu0 0.0
    %579 = vmatprep.subr.mxu0 0.0
    %580 = vmatpush1.msra.mxu0 0.0
    %581 = vmatprep.subr.mxu0 0.0
    %582 = vmatpush1.msra.mxu0 0.0
    %583 = vmatprep.subr.mxu0 0.0
    %584 = vmatpush1.msra.mxu0 0.0
    %585 = vmatprep.subr.mxu0 0.0
    %586 = vmatpush1.msra.mxu0 0.0
    %587 = vmatprep.subr.mxu0 0.0
    %588 = vmatpush1.msra.mxu0 0.0
    %589 = vmatprep.subr.mxu0 0.0
    %590 = vmatpush1.msra.mxu0 0.0
    %591 = vmatprep.subr.mxu0 0.0
    %592 = vmatpush1.msra.mxu0 0.0
    %593 = vmatprep.subr.mxu0 0.0
    %594 = vmatpush1.msra.mxu0 0.0
    %595 = vmatprep.subr.mxu0 0.0
    %596 = vmatpush1.msra.mxu0 0.0
    %597 = vmatprep.subr.mxu0 0.0
    %598 = vmatpush1.msra.mxu0 0.0
    %599 = vmatprep.subr.mxu0 0.0
    %600 = vmatpush1.msra.mxu0 0.0
    %601 = vmatprep.subr.mxu0 0.0
    %602 = vmatpush1.msra.mxu0 0.0
    %603 = vmatprep.subr.mxu0 0.0
    %604 = vmatpush1.msra.mxu0 0.0
    %605 = vmatprep.subr.mxu0 0.0
    %606 = vmatpush1.msra.mxu0 0.0
    %607 = vmatprep.subr.mxu0 0.0
    %608 = vmatpush1.msra.mxu0 0.0
    %609 = vmatprep.subr.mxu0 0.0
    %610 = vmatpush1.msra.mxu0 0.0
    %611 = vmatprep.subr.mxu0 0.0
    %612 = vmatpush1.msra.mxu0 0.0
    %613 = vmatprep.subr.mxu0 0.0
    %614 = vmatpush1.msra.mxu0 0.0
    %615 = vmatprep.subr.mxu0 0.0
    %616 = vmatpush1.msra.mxu0 0.0
    %617 = vmatprep.subr.mxu0 0.0
    %618 = vmatpush1.msra.mxu0 0.0
    %619 = vmatprep.subr.mxu0 0.0
    %620 = vmatpush1.msra.mxu0 0.0
    %621 = vmatprep.subr.mxu0 0.0
    %622 = vmatpush1.msra.mxu0 0.0
    %623 = vmatprep.subr.mxu0 0.0
    %624 = vmatpush1.msra.mxu0 0.0
    %625 = vmatprep.subr.mxu0 0.0
    %626 = vmatpush1.msra.mxu0 0.0
    %627 = vmatprep.subr.mxu0 0.0
    %628 = vmatpush1.msra.mxu0 0.0
    %629 = vmatprep.subr.mxu0 0.0
    %630 = vmatpush1.msra.mxu0 0.0
    %631 = vmatprep.mubr.f32.mxu0 0.0
    %632 = vmatmul.mubr.f32.gmra.mrb[0].mxu0 %v565
    %v633 = vpop.f32.mrb[0].mxu0
    %v634 = vadd.f32 0.0, %v633
    %v635 = vpop.f32.mrb[0].mxu0
    %636 = vdwg.mxu0
    %v637 = vadd.f32 %v561, %v634
    %v638 = vxor.u32 %v637, 2147483648
    %v639 = vmul.f32 %v638, 1.442695
    %v640 = vpow.pop %v639
    %v641 = vadd.f32 %v640, 1.0
    %v642 = vrcp.pop %v641
    %v643 = vmul.f32 1.0, %v642
    %v644 = vtanh.pop %v637
    %v645 = vmul.f32 %v643, %v552
    %647 = vrot.lane.b32.xlu0 %v644, 64
    %v648 = vpop.permute.xlu0 %647
    %v650 = vmul.f32 %v643, %v648
    %652 = vrot.lane.b32.xlu0 %v650, 32
    %v653 = vpop.permute.xlu0 %652
    %v655 = vadd.f32 %v645, %v653
    %v656 = vtanh.pop %v655
    %658 = vrot.lane.b32.xlu0 %v656, 64
    %v659 = vpop.permute.xlu0 %658
    %v661 = vmul.f32 %v643, %v659
    %s662 = sadd.s32 %s78, 4
    %v663 = vstv %s662
    %vm664 = vcmp.gt.s32.totalorder %v73, %v663
    %v665 = vsel %vm664, 1, 0
    %666 = vset.pattern.permute.xlu0 0
    %667 = vperm.xlu0 %666, %v665
    %v668 = vpop.permute.xlu0 %667
    %vm669 = vcmp.eq.s32.totalorder %v668, 1
    %v670 = vsel %vm669, %v661, %v551
    %v671 = vsel %vm669, %v655, %v552
    %v672 = vsel %vm669, %v661, 0.0
    %674 = vrot.lane.b32.xlu0 %v672, 32
    %v675 = vpop.permute.xlu0 %674
    %s677 = scalar_lea.vmem [#allocation9], 32
    %678 = vst.msk [vmem:[%s677] sm:$0xff] %vm82, %v675
    %s679 = scalar_lea.vmem [#allocation4], 40
    %v680 = vld [vmem:[%s679] sm:$0xff]
    %682 = vrot.lane.b32.xlu0 %v670, 32
    %v683 = vpop.permute.xlu0 %682
    %v684 = vsel %vm82, %v683, 0
    %686 = vmatprep.subr.mxu0 0.0
    %687 = vmatpush1.msra.mxu0 %v74
    %688 = vmatprep.subr.mxu0 0.0
    %689 = vmatpush1.msra.mxu0 %v75
    %690 = vmatprep.subr.mxu0 0.0
    %691 = vmatpush1.msra.mxu0 %v76
    %692 = vmatprep.subr.mxu0 0.0
    %693 = vmatpush1.msra.mxu0 %v77
    %694 = vmatprep.subr.mxu0 0.0
    %695 = vmatpush1.msra.mxu0 0.0
    %696 = vmatprep.subr.mxu0 0.0
    %697 = vmatpush1.msra.mxu0 0.0
    %698 = vmatprep.subr.mxu0 0.0
    %699 = vmatpush1.msra.mxu0 0.0
    %700 = vmatprep.subr.mxu0 0.0
    %701 = vmatpush1.msra.mxu0 0.0
    %702 = vmatprep.subr.mxu0 0.0
    %703 = vmatpush1.msra.mxu0 0.0
    %704 = vmatprep.subr.mxu0 0.0
    %705 = vmatpush1.msra.mxu0 0.0
    %706 = vmatprep.subr.mxu0 0.0
    %707 = vmatpush1.msra.mxu0 0.0
    %708 = vmatprep.subr.mxu0 0.0
    %709 = vmatpush1.msra.mxu0 0.0
    %710 = vmatprep.subr.mxu0 0.0
    %711 = vmatpush1.msra.mxu0 0.0
    %712 = vmatprep.subr.mxu0 0.0
    %713 = vmatpush1.msra.mxu0 0.0
    %714 = vmatprep.subr.mxu0 0.0
    %715 = vmatpush1.msra.mxu0 0.0
    %716 = vmatprep.subr.mxu0 0.0
    %717 = vmatpush1.msra.mxu0 0.0
    %718 = vmatprep.subr.mxu0 0.0
    %719 = vmatpush1.msra.mxu0 0.0
    %720 = vmatprep.subr.mxu0 0.0
    %721 = vmatpush1.msra.mxu0 0.0
    %722 = vmatprep.subr.mxu0 0.0
    %723 = vmatpush1.msra.mxu0 0.0
    %724 = vmatprep.subr.mxu0 0.0
    %725 = vmatpush1.msra.mxu0 0.0
    %726 = vmatprep.subr.mxu0 0.0
    %727 = vmatpush1.msra.mxu0 0.0
    %728 = vmatprep.subr.mxu0 0.0
    %729 = vmatpush1.msra.mxu0 0.0
    %730 = vmatprep.subr.mxu0 0.0
    %731 = vmatpush1.msra.mxu0 0.0
    %732 = vmatprep.subr.mxu0 0.0
    %733 = vmatpush1.msra.mxu0 0.0
    %734 = vmatprep.subr.mxu0 0.0
    %735 = vmatpush1.msra.mxu0 0.0
    %736 = vmatprep.subr.mxu0 0.0
    %737 = vmatpush1.msra.mxu0 0.0
    %738 = vmatprep.subr.mxu0 0.0
    %739 = vmatpush1.msra.mxu0 0.0
    %740 = vmatprep.subr.mxu0 0.0
    %741 = vmatpush1.msra.mxu0 0.0
    %742 = vmatprep.subr.mxu0 0.0
    %743 = vmatpush1.msra.mxu0 0.0
    %744 = vmatprep.subr.mxu0 0.0
    %745 = vmatpush1.msra.mxu0 0.0
    %746 = vmatprep.subr.mxu0 0.0
    %747 = vmatpush1.msra.mxu0 0.0
    %748 = vmatprep.subr.mxu0 0.0
    %749 = vmatpush1.msra.mxu0 0.0
    %750 = vmatprep.mubr.f32.mxu0 0.0
    %751 = vmatmul.mubr.f32.gmra.mrb[0].mxu0 %v684
    %v752 = vpop.f32.mrb[0].mxu0
    %v753 = vadd.f32 0.0, %v752
    %v754 = vpop.f32.mrb[0].mxu0
    %755 = vdwg.mxu0
    %v756 = vadd.f32 %v680, %v753
    %v757 = vxor.u32 %v756, 2147483648
    %v758 = vmul.f32 %v757, 1.442695
    %v759 = vpow.pop %v758
    %v760 = vadd.f32 %v759, 1.0
    %v761 = vrcp.pop %v760
    %v762 = vmul.f32 1.0, %v761
    %v763 = vtanh.pop %v756
    %v764 = vmul.f32 %v762, %v671
    %766 = vrot.lane.b32.xlu0 %v763, 64
    %v767 = vpop.permute.xlu0 %766
    %v769 = vmul.f32 %v762, %v767
    %771 = vrot.lane.b32.xlu0 %v769, 32
    %v772 = vpop.permute.xlu0 %771
    %v774 = vadd.f32 %v764, %v772
    %v775 = vtanh.pop %v774
    %777 = vrot.lane.b32.xlu0 %v775, 64
    %v778 = vpop.permute.xlu0 %777
    %v780 = vmul.f32 %v762, %v778
    %s781 = sadd.s32 %s78, 5
    %v782 = vstv %s781
    %vm783 = vcmp.gt.s32.totalorder %v73, %v782
    %v784 = vsel %vm783, 1, 0
    %785 = vset.pattern.permute.xlu0 0
    %786 = vperm.xlu0 %785, %v784
    %v787 = vpop.permute.xlu0 %786
    %vm788 = vcmp.eq.s32.totalorder %v787, 1
    %v789 = vsel %vm788, %v780, %v670
    %v790 = vsel %vm788, %v774, %v671
    %v791 = vsel %vm788, %v780, 0.0
    %793 = vrot.lane.b32.xlu0 %v791, 32
    %v794 = vpop.permute.xlu0 %793
    %s796 = scalar_lea.vmem [#allocation9], 40
    %797 = vst.msk [vmem:[%s796] sm:$0xff] %vm82, %v794
    %s798 = scalar_lea.vmem [#allocation4], 48
    %v799 = vld [vmem:[%s798] sm:$0xff]
    %801 = vrot.lane.b32.xlu0 %v789, 32
    %v802 = vpop.permute.xlu0 %801
    %v803 = vsel %vm82, %v802, 0
    %805 = vmatprep.subr.mxu0 0.0
    %806 = vmatpush1.msra.mxu0 %v74
    %807 = vmatprep.subr.mxu0 0.0
    %808 = vmatpush1.msra.mxu0 %v75
    %809 = vmatprep.subr.mxu0 0.0
    %810 = vmatpush1.msra.mxu0 %v76
    %811 = vmatprep.subr.mxu0 0.0
    %812 = vmatpush1.msra.mxu0 %v77
    %813 = vmatprep.subr.mxu0 0.0
    %814 = vmatpush1.msra.mxu0 0.0
    %815 = vmatprep.subr.mxu0 0.0
    %816 = vmatpush1.msra.mxu0 0.0
    %817 = vmatprep.subr.mxu0 0.0
    %818 = vmatpush1.msra.mxu0 0.0
    %819 = vmatprep.subr.mxu0 0.0
    %820 = vmatpush1.msra.mxu0 0.0
    %821 = vmatprep.subr.mxu0 0.0
    %822 = vmatpush1.msra.mxu0 0.0
    %823 = vmatprep.subr.mxu0 0.0
    %824 = vmatpush1.msra.mxu0 0.0
    %825 = vmatprep.subr.mxu0 0.0
    %826 = vmatpush1.msra.mxu0 0.0
    %827 = vmatprep.subr.mxu0 0.0
    %828 = vmatpush1.msra.mxu0 0.0
    %829 = vmatprep.subr.mxu0 0.0
    %830 = vmatpush1.msra.mxu0 0.0
    %831 = vmatprep.subr.mxu0 0.0
    %832 = vmatpush1.msra.mxu0 0.0
    %833 = vmatprep.subr.mxu0 0.0
    %834 = vmatpush1.msra.mxu0 0.0
    %835 = vmatprep.subr.mxu0 0.0
    %836 = vmatpush1.msra.mxu0 0.0
    %837 = vmatprep.subr.mxu0 0.0
    %838 = vmatpush1.msra.mxu0 0.0
    %839 = vmatprep.subr.mxu0 0.0
    %840 = vmatpush1.msra.mxu0 0.0
    %841 = vmatprep.subr.mxu0 0.0
    %842 = vmatpush1.msra.mxu0 0.0
    %843 = vmatprep.subr.mxu0 0.0
    %844 = vmatpush1.msra.mxu0 0.0
    %845 = vmatprep.subr.mxu0 0.0
    %846 = vmatpush1.msra.mxu0 0.0
    %847 = vmatprep.subr.mxu0 0.0
    %848 = vmatpush1.msra.mxu0 0.0
    %849 = vmatprep.subr.mxu0 0.0
    %850 = vmatpush1.msra.mxu0 0.0
    %851 = vmatprep.subr.mxu0 0.0
    %852 = vmatpush1.msra.mxu0 0.0
    %853 = vmatprep.subr.mxu0 0.0
    %854 = vmatpush1.msra.mxu0 0.0
    %855 = vmatprep.subr.mxu0 0.0
    %856 = vmatpush1.msra.mxu0 0.0
    %857 = vmatprep.subr.mxu0 0.0
    %858 = vmatpush1.msra.mxu0 0.0
    %859 = vmatprep.subr.mxu0 0.0
    %860 = vmatpush1.msra.mxu0 0.0
    %861 = vmatprep.subr.mxu0 0.0
    %862 = vmatpush1.msra.mxu0 0.0
    %863 = vmatprep.subr.mxu0 0.0
    %864 = vmatpush1.msra.mxu0 0.0
    %865 = vmatprep.subr.mxu0 0.0
    %866 = vmatpush1.msra.mxu0 0.0
    %867 = vmatprep.subr.mxu0 0.0
    %868 = vmatpush1.msra.mxu0 0.0
    %869 = vmatprep.mubr.f32.mxu0 0.0
    %870 = vmatmul.mubr.f32.gmra.mrb[0].mxu0 %v803
    %v871 = vpop.f32.mrb[0].mxu0
    %v872 = vadd.f32 0.0, %v871
    %v873 = vpop.f32.mrb[0].mxu0
    %874 = vdwg.mxu0
    %v875 = vadd.f32 %v799, %v872
    %v876 = vxor.u32 %v875, 2147483648
    %v877 = vmul.f32 %v876, 1.442695
    %v878 = vpow.pop %v877
    %v879 = vadd.f32 %v878, 1.0
    %v880 = vrcp.pop %v879
    %v881 = vmul.f32 1.0, %v880
    %v882 = vtanh.pop %v875
    %v883 = vmul.f32 %v881, %v790
    %885 = vrot.lane.b32.xlu0 %v882, 64
    %v886 = vpop.permute.xlu0 %885
    %v888 = vmul.f32 %v881, %v886
    %890 = vrot.lane.b32.xlu0 %v888, 32
    %v891 = vpop.permute.xlu0 %890
    %v893 = vadd.f32 %v883, %v891
    %v894 = vtanh.pop %v893
    %896 = vrot.lane.b32.xlu0 %v894, 64
    %v897 = vpop.permute.xlu0 %896
    %v899 = vmul.f32 %v881, %v897
    %s900 = sadd.s32 %s78, 6
    %v901 = vstv %s900
    %vm902 = vcmp.gt.s32.totalorder %v73, %v901
    %v903 = vsel %vm902, 1, 0
    %904 = vset.pattern.permute.xlu0 0
    %905 = vperm.xlu0 %904, %v903
    %v906 = vpop.permute.xlu0 %905
    %vm907 = vcmp.eq.s32.totalorder %v906, 1
    %v908 = vsel %vm907, %v899, %v789
    %v909 = vsel %vm907, %v893, %v790
    %v910 = vsel %vm907, %v899, 0.0
    %912 = vrot.lane.b32.xlu0 %v910, 32
    %v913 = vpop.permute.xlu0 %912
    %s915 = scalar_lea.vmem [#allocation9], 48
    %916 = vst.msk [vmem:[%s915] sm:$0xff] %vm82, %v913
    %s917 = scalar_lea.vmem [#allocation4], 56
    %v918 = vld [vmem:[%s917] sm:$0xff]
    %920 = vrot.lane.b32.xlu0 %v908, 32
    %v921 = vpop.permute.xlu0 %920
    %v922 = vsel %vm82, %v921, 0
    %924 = vmatprep.subr.mxu0 0.0
    %925 = vmatpush1.msra.mxu0 %v74
    %926 = vmatprep.subr.mxu0 0.0
    %927 = vmatpush1.msra.mxu0 %v75
    %928 = vmatprep.subr.mxu0 0.0
    %929 = vmatpush1.msra.mxu0 %v76
    %930 = vmatprep.subr.mxu0 0.0
    %931 = vmatpush1.msra.mxu0 %v77
    %932 = vmatprep.subr.mxu0 0.0
    %933 = vmatpush1.msra.mxu0 0.0
    %934 = vmatprep.subr.mxu0 0.0
    %935 = vmatpush1.msra.mxu0 0.0
    %936 = vmatprep.subr.mxu0 0.0
    %937 = vmatpush1.msra.mxu0 0.0
    %938 = vmatprep.subr.mxu0 0.0
    %939 = vmatpush1.msra.mxu0 0.0
    %940 = vmatprep.subr.mxu0 0.0
    %941 = vmatpush1.msra.mxu0 0.0
    %942 = vmatprep.subr.mxu0 0.0
    %943 = vmatpush1.msra.mxu0 0.0
    %944 = vmatprep.subr.mxu0 0.0
    %945 = vmatpush1.msra.mxu0 0.0
    %946 = vmatprep.subr.mxu0 0.0
    %947 = vmatpush1.msra.mxu0 0.0
    %948 = vmatprep.subr.mxu0 0.0
    %949 = vmatpush1.msra.mxu0 0.0
    %950 = vmatprep.subr.mxu0 0.0
    %951 = vmatpush1.msra.mxu0 0.0
    %952 = vmatprep.subr.mxu0 0.0
    %953 = vmatpush1.msra.mxu0 0.0
    %954 = vmatprep.subr.mxu0 0.0
    %955 = vmatpush1.msra.mxu0 0.0
    %956 = vmatprep.subr.mxu0 0.0
    %957 = vmatpush1.msra.mxu0 0.0
    %958 = vmatprep.subr.mxu0 0.0
    %959 = vmatpush1.msra.mxu0 0.0
    %960 = vmatprep.subr.mxu0 0.0
    %961 = vmatpush1.msra.mxu0 0.0
    %962 = vmatprep.subr.mxu0 0.0
    %963 = vmatpush1.msra.mxu0 0.0
    %964 = vmatprep.subr.mxu0 0.0
    %965 = vmatpush1.msra.mxu0 0.0
    %966 = vmatprep.subr.mxu0 0.0
    %967 = vmatpush1.msra.mxu0 0.0
    %968 = vmatprep.subr.mxu0 0.0
    %969 = vmatpush1.msra.mxu0 0.0
    %970 = vmatprep.subr.mxu0 0.0
    %971 = vmatpush1.msra.mxu0 0.0
    %972 = vmatprep.subr.mxu0 0.0
    %973 = vmatpush1.msra.mxu0 0.0
    %974 = vmatprep.subr.mxu0 0.0
    %975 = vmatpush1.msra.mxu0 0.0
    %976 = vmatprep.subr.mxu0 0.0
    %977 = vmatpush1.msra.mxu0 0.0
    %978 = vmatprep.subr.mxu0 0.0
    %979 = vmatpush1.msra.mxu0 0.0
    %980 = vmatprep.subr.mxu0 0.0
    %981 = vmatpush1.msra.mxu0 0.0
    %982 = vmatprep.subr.mxu0 0.0
    %983 = vmatpush1.msra.mxu0 0.0
    %984 = vmatprep.subr.mxu0 0.0
    %985 = vmatpush1.msra.mxu0 0.0
    %986 = vmatprep.subr.mxu0 0.0
    %987 = vmatpush1.msra.mxu0 0.0
    %988 = vmatprep.mubr.f32.mxu0 0.0
    %989 = vmatmul.mubr.f32.gmra.mrb[0].mxu0 %v922
    %v990 = vpop.f32.mrb[0].mxu0
    %v991 = vadd.f32 0.0, %v990
    %v992 = vpop.f32.mrb[0].mxu0
    %993 = vdwg.mxu0
    %v994 = vadd.f32 %v918, %v991
    %v995 = vxor.u32 %v994, 2147483648
    %v996 = vmul.f32 %v995, 1.442695
    %v997 = vpow.pop %v996
    %v998 = vadd.f32 %v997, 1.0
    %v999 = vrcp.pop %v998
    %v1000 = vmul.f32 1.0, %v999
    %v1001 = vtanh.pop %v994
    %v1002 = vmul.f32 %v1000, %v909
    %1004 = vrot.lane.b32.xlu0 %v1001, 64
    %v1005 = vpop.permute.xlu0 %1004
    %v1007 = vmul.f32 %v1000, %v1005
    %1009 = vrot.lane.b32.xlu0 %v1007, 32
    %v1010 = vpop.permute.xlu0 %1009
    %v1012 = vadd.f32 %v1002, %v1010
    %v1013 = vtanh.pop %v1012
    %1015 = vrot.lane.b32.xlu0 %v1013, 64
    %v1016 = vpop.permute.xlu0 %1015
    %v1018 = vmul.f32 %v1000, %v1016
    %s1019 = sadd.s32 %s78, 7
    %v1020 = vstv %s1019
    %vm1021 = vcmp.gt.s32.totalorder %v73, %v1020
    %v1022 = vsel %vm1021, 1, 0
    %1023 = vset.pattern.permute.xlu0 0
    %1024 = vperm.xlu0 %1023, %v1022
    %v1025 = vpop.permute.xlu0 %1024
    %vm1026 = vcmp.eq.s32.totalorder %v1025, 1
    %v1027 = vsel %vm1026, %v1018, %v908
    %v1028 = vsel %vm1026, %v1012, %v909
    %v1029 = vsel %vm1026, %v1018, 0.0
    %1031 = vrot.lane.b32.xlu0 %v1029, 32
    %v1032 = vpop.permute.xlu0 %1031
    %s1034 = scalar_lea.vmem [#allocation9], 56
    %1035 = vst.msk [vmem:[%s1034] sm:$0xff] %vm82, %v1032
    %1037 = vrot.lane.b32.xlu0 %v1027, 32
    %v1038 = vpop.permute.xlu0 %1037
    %1040 = vst.msk [vmem:[#allocation2] sm:$0xff] %vm82, %v1038
    %1042 = vrot.lane.b32.xlu0 %v1028, 96
    %v1043 = vpop.permute.xlu0 %1042
    %1045 = vst.msk [vmem:[#allocation3] sm:$0xff] %vm82, %v1043
    // Predicated region
    $region34: #{tpu_custom_call.1} parent=1 // pred_check
      %p1046 = pneg %p52
    $region35: #{tpu_custom_call.1} parent=1 // pred_check_branch
      %1048 = sbr.rel (%p1046) target = $region37
    $region36: #{tpu_custom_call.1} parent=1 // pred_region
      %1049 = vst.msk [vmem:[#allocation10] sm:$0xff] %vm82, %v1038
    $region37: #{tpu_custom_call.1} parent=1 // pred_fallthru
      _
    // Predicated region
    $region38: #{tpu_custom_call.1} parent=1 // pred_check
      _
    $region39: #{tpu_custom_call.1} parent=1 // pred_check_branch
      %1051 = sbr.rel (0) target = $region41
    $region40: #{tpu_custom_call.1} parent=1 // pred_region
      %s1053 = ssub.s32 1024, 1024
      %1054 = vsyncadd [#allocation6], %s1053
      %s1055 = sshll.u32 [#allocation9], 4
      %s1056 = int_to_ptr.vmem [resolvable:$true] %s1055
      %1061 = dma.vmem_to_hbm [thread:$0]  %s1056, 1024, %s5, [#allocation6], 128, 128, 8
    $region41: #{tpu_custom_call.1} parent=1 // pred_fallthru
      _
    // Predicated region
    $region42: #{tpu_custom_call.1} parent=1 // pred_check
      _
    $region43: #{tpu_custom_call.1} parent=1 // pred_check_branch
      %1063 = sbr.rel (0) target = $region45
    $region44: #{tpu_custom_call.1} parent=1 // pred_region
      %s1065 = ssub.s32 128, 128
      %1066 = vsyncadd [#allocation11], %s1065
      %s1068 = sshll.u32 [#allocation10], 4
      %s1069 = int_to_ptr.vmem [resolvable:$true] %s1068
      %1071 = dma.vmem_to_hbm [thread:$0]  %s1069, 128, %s6, [#allocation11]
    $region45: #{tpu_custom_call.1} parent=1 // pred_fallthru
      _
    // Predicated region
    $region46: #{tpu_custom_call.1} parent=1 // pred_check
      _
    $region47: #{tpu_custom_call.1} parent=1 // pred_check_branch
      %1073 = sbr.rel (0) target = $region49
    $region48: #{tpu_custom_call.1} parent=1 // pred_region
      %1074 = dma.done [#allocation6], 1024
    $region49: #{tpu_custom_call.1} parent=1 // pred_fallthru
      _
    // Predicated region
    $region50: #{tpu_custom_call.1} parent=1 // pred_check
      _
    $region51: #{tpu_custom_call.1} parent=1 // pred_check_branch
      %1076 = sbr.rel (0) target = $region53
    $region52: #{tpu_custom_call.1} parent=1 // pred_region
      %1077 = dma.done [#allocation11], 128
    $region53: #{tpu_custom_call.1} parent=1 // pred_fallthru
      _
    %1078 = vsyncpa [#allocation5], 1
    %1079 = vsyncpa [#allocation8], 1
    %1080 = vsyncpa [#allocation6], 1
    %1081 = vsyncpa [#allocation11], 1

</llo_original>
